<compile_context>
chip_gen: v7x
topology: tpu7x:2x2x1
jax: 0.10.0
libtpu: 0.0.40
codegen_flags: <defaults>
</compile_context>

<pallas_src>
import jax
import jax.numpy as jnp
from jax.experimental import pallas as pl
from jax.experimental.pallas import tpu as pltpu

_VMEM_LIMIT = 48 * 1024 * 1024  # <= v7x's 64 MiB physical VMEM; ample on v5e/v6e.


def _round_up(x, m):
    return (x + m - 1) // m * m


# ----------------------------------------------------------------------------
# Pallas GEMM kernels (bf16 operands, f32 MXU accumulation)
# ----------------------------------------------------------------------------
def _gemm_kernel(a_ref, b_ref, o_ref):
    # Single-K-block GEMM: no scratch accumulator, no init/flush phases.
    o_ref[...] = jnp.dot(a_ref[...], b_ref[...],
                         preferred_element_type=jnp.float32).astype(o_ref.dtype)


def _gemm_acc_kernel(a_ref, b_ref, o_ref, acc_ref):
    # K-tiled fallback (only used when K > 1024; not hit by this model).
    @pl.when(pl.program_id(2) == 0)
    def _():
        acc_ref[...] = jnp.zeros_like(acc_ref)

    acc_ref[...] += jnp.dot(a_ref[...], b_ref[...],
                            preferred_element_type=jnp.float32)

    @pl.when(pl.program_id(2) == pl.num_programs(2) - 1)
    def _():
        o_ref[...] = acc_ref[...].astype(o_ref.dtype)


def matmul_pallas(a, b, *, out_dtype=jnp.bfloat16, tm=1024, tn=1024, tk_max=1024):
    """out = a @ b; bf16 operands on the MXU, f32 accumulation, out_dtype result."""
    M, K = a.shape
    K2, Ncol = b.shape
    assert K == K2

    a = a.astype(jnp.bfloat16)
    b = b.astype(jnp.bfloat16)

    Mp = _round_up(M, 8)
    tm = min(tm, Mp)
    Mp = _round_up(Mp, tm)

    Kp = _round_up(K, 128)
    if Kp <= tk_max:
        tk = Kp                      # single K block: kills the k grid axis entirely
    else:
        tk = tk_max
        Kp = _round_up(Kp, tk)

    Np = _round_up(Ncol, 128)
    tn = min(tn, Np)
    Np = _round_up(Np, tn)

    if (Mp, Kp) != (M, K):
        a = jnp.pad(a, ((0, Mp - M), (0, Kp - K)))
    if (Kp, Np) != (K, Ncol):
        b = jnp.pad(b, ((0, Kp - K), (0, Np - Ncol)))

    gm, gn, gk = Mp // tm, Np // tn, Kp // tk
    cost = pl.CostEstimate(
        flops=2 * M * K * Ncol,
        transcendentals=0,
        bytes_accessed=(Mp * Kp * 2 + Kp * Np * 2
                        + Mp * Np * jnp.dtype(out_dtype).itemsize),
    )

    if gk == 1:
        out = pl.pallas_call(
            _gemm_kernel,
            out_shape=jax.ShapeDtypeStruct((Mp, Np), out_dtype),
            grid_spec=pltpu.PrefetchScalarGridSpec(
                num_scalar_prefetch=0,
                grid=(gm, gn),
                in_specs=[
                    pl.BlockSpec((tm, Kp), lambda i, j: (i, 0)),
                    pl.BlockSpec((Kp, tn), lambda i, j: (0, j)),
                ],
                out_specs=pl.BlockSpec((tm, tn), lambda i, j: (i, j)),
            ),
            compiler_params=pltpu.CompilerParams(
                dimension_semantics=("parallel", "parallel"),
                vmem_limit_bytes=_VMEM_LIMIT,
            ),
            cost_estimate=cost,
        )(a, b)
    else:
        out = pl.pallas_call(
            _gemm_acc_kernel,
            out_shape=jax.ShapeDtypeStruct((Mp, Np), out_dtype),
            grid_spec=pltpu.PrefetchScalarGridSpec(
                num_scalar_prefetch=0,
                grid=(gm, gn, gk),
                in_specs=[
                    pl.BlockSpec((tm, tk), lambda i, j, k: (i, k)),
                    pl.BlockSpec((tk, tn), lambda i, j, k: (k, j)),
                ],
                out_specs=pl.BlockSpec((tm, tn), lambda i, j, k: (i, j)),
                scratch_shapes=[pltpu.VMEM((tm, tn), jnp.float32)],
            ),
            compiler_params=pltpu.CompilerParams(
                dimension_semantics=("parallel", "parallel", "arbitrary"),
                vmem_limit_bytes=_VMEM_LIMIT,
            ),
            cost_estimate=cost,
        )(a, b)

    if (Mp, Np) != (M, Ncol):
        out = out[:M, :Ncol]
    return out


# ----------------------------------------------------------------------------
# Pallas kernel: lane-dense elementwise tanh (final activation)
# ----------------------------------------------------------------------------
def _tanh_kernel(x_ref, o_ref):
    o_ref[...] = jnp.tanh(x_ref[...])


def tanh_pallas(x2d, *, tr_max=256):
    """Elementwise tanh over a 2-D slab whose last dim is a multiple of 128."""
    R, L = x2d.shape
    assert L % 128 == 0
    Rp = _round_up(R, 8)
    tr = min(tr_max, Rp)
    Rp = _round_up(Rp, tr)
    xp = x2d if Rp == R else jnp.pad(x2d, ((0, Rp - R), (0, 0)))
    out = pl.pallas_call(
        _tanh_kernel,
        out_shape=jax.ShapeDtypeStruct((Rp, L), x2d.dtype),
        grid_spec=pltpu.PrefetchScalarGridSpec(
            num_scalar_prefetch=0,
            grid=(Rp // tr,),
            in_specs=[pl.BlockSpec((tr, L), lambda i: (i, 0))],
            out_specs=pl.BlockSpec((tr, L), lambda i: (i, 0)),
        ),
        compiler_params=pltpu.CompilerParams(
            dimension_semantics=("parallel",),
            vmem_limit_bytes=_VMEM_LIMIT,
        ),
    )(xp)
    return out if Rp == R else out[:R]


# ----------------------------------------------------------------------------
# col2im overlap-add for stride=2, padding=1, k=4 (4 shifted adds, summed in f32)
#   out[2m]   = y[h=m, ky=1] + y[h=m-1, ky=3]
#   out[2m+1] = y[h=m, ky=2] + y[h=m+1, ky=0]   (same along the W axis)
# TODO(synk): this 4-tap overlap-add stays as fused XLA shifted adds; a Pallas
# epilogue fused with the GEMM writeback would save one more HBM pass per layer.
# ----------------------------------------------------------------------------
def _col2im_s2p1_nhwc(y):
    """y: (N, H, W, 4, 4, C) bf16 taps -> (N, 2H, 2W, C) f32."""
    N, H, W, _, _, C = y.shape
    f32 = lambda t: t.astype(jnp.float32)
    yp = jnp.pad(y, ((0, 0), (1, 1), (0, 0), (0, 0), (0, 0), (0, 0)))
    r_even = f32(yp[:, 1:H + 1, :, 1]) + f32(yp[:, 0:H, :, 3])      # (N,H,W,4,C)
    r_odd = f32(yp[:, 1:H + 1, :, 2]) + f32(yp[:, 2:H + 2, :, 0])
    rows = jnp.stack([r_even, r_odd], axis=2)                        # (N,H,2,W,4,C)
    rp = jnp.pad(rows, ((0, 0), (0, 0), (0, 0), (1, 1), (0, 0), (0, 0)))
    c_even = rp[:, :, :, 1:W + 1, 1] + rp[:, :, :, 0:W, 3]           # (N,H,2,W,C)
    c_odd = rp[:, :, :, 1:W + 1, 2] + rp[:, :, :, 2:W + 2, 0]
    out = jnp.stack([c_even, c_odd], axis=4)                         # (N,H,2,W,2,C)
    return out.reshape(N, 2 * H, 2 * W, C)


def _col2im_s2p1_cfirst(y):
    """y: (4, 4, C, N, H, W) bf16 taps -> (C, N, 2H, 2W) f32 (channels-first)."""
    _, _, C, N, H, W = y.shape
    f32 = lambda t: t.astype(jnp.float32)
    yp = jnp.pad(y, ((0, 0), (0, 0), (0, 0), (0, 0), (1, 1), (0, 0)))
    r_even = f32(yp[1, :, :, :, 1:H + 1, :]) + f32(yp[3, :, :, :, 0:H, :])   # (4,C,N,H,W)
    r_odd = f32(yp[2, :, :, :, 1:H + 1, :]) + f32(yp[0, :, :, :, 2:H + 2, :])
    rows = jnp.stack([r_even, r_odd], axis=4)                                # (4,C,N,H,2,W)
    rp = jnp.pad(rows, ((0, 0), (0, 0), (0, 0), (0, 0), (0, 0), (1, 1)))
    c_even = rp[1, :, :, :, :, 1:W + 1] + rp[3, :, :, :, :, 0:W]             # (C,N,H,2,W)
    c_odd = rp[2, :, :, :, :, 1:W + 1] + rp[0, :, :, :, :, 2:W + 2]
    out = jnp.stack([c_even, c_odd], axis=5)                                 # (C,N,H,2,W,2)
    return out.reshape(C, N, 2 * H, 2 * W)


# ----------------------------------------------------------------------------
# ConvTranspose2d(kernel=4, stride=2, pad=1, bias=False) layers
# ----------------------------------------------------------------------------
def _deconv_nhwc(x, wmat):
    """x: (N,H,W,Cin) bf16; wmat: (Cin, 16*Cout) bf16.  Returns relu(deconv) in bf16."""
    N, H, W, Cin = x.shape
    Cout = wmat.shape[1] // 16
    y = matmul_pallas(x.reshape(N * H * W, Cin), wmat)      # (N*H*W, 16*Cout) bf16
    y = y.reshape(N, H, W, 4, 4, Cout)
    out = _col2im_s2p1_nhwc(y)                              # f32 (N, 2H, 2W, Cout)
    return jnp.maximum(out, 0.0).astype(jnp.bfloat16)       # fused ReLU + bf16 cast


def _deconv_last_cfirst(x, w_t_packed):
    """Final layer as a transposed GEMM (spatial dim on lanes); returns f32 (C,N,2H,2W)."""
    N, H, W, Cin = x.shape
    Cout = w_t_packed.shape[0] // 16
    xT = x.reshape(N * H * W, Cin).T                        # (Cin, M)
    yT = matmul_pallas(w_t_packed, xT, tn=4096)             # (16*Cout, M) bf16
    y = yT.reshape(4, 4, Cout, N, H, W)
    return _col2im_s2p1_cfirst(y)                           # f32 (Cout, N, 2H, 2W)


# ----------------------------------------------------------------------------
# Generator (Wasserstein=False): 5 x ConvTranspose2d, ReLU between, Tanh at end
# ----------------------------------------------------------------------------
def init_generator_params(key, num_z, ngf, color_channels):
    shapes = [
        (num_z, ngf * 16, 4, 4),
        (ngf * 16, ngf * 8, 4, 4),
        (ngf * 8, ngf * 4, 4, 4),
        (ngf * 4, ngf * 2, 4, 4),
        (ngf * 2, color_channels, 4, 4),
    ]
    keys = jax.random.split(key, len(shapes))
    params = []
    for k_, s in zip(keys, shapes):
        std = (2.0 / (s[0] * 4)) ** 0.5   # keep activations O(1) so validation is meaningful
        params.append(std * jax.random.normal(k_, s, jnp.float32))
    return params


def pack_generator_params(params):
    """One-time weight packing (transpose/reshape + bf16), hoisted out of the forward."""
    packed = []
    for w in params[:-1]:                                   # layers 0..3: (Cin, 16*Cout)
        cin, cout = w.shape[0], w.shape[1]
        packed.append(
            jnp.transpose(w, (0, 2, 3, 1)).reshape(cin, 16 * cout).astype(jnp.bfloat16))
    w = params[-1]                                          # layer 4 (transposed GEMM)
    cin, cout = w.shape[0], w.shape[1]
    packed.append(
        jnp.transpose(w, (2, 3, 1, 0)).reshape(16 * cout, cin).astype(jnp.bfloat16))
    return tuple(packed)


@jax.jit
def generator_forward(z, packed):
    wm0, wm1, wm2, wm3, w4t = packed
    N = z.shape[0]
    x = z.reshape(N, -1).astype(jnp.bfloat16)               # (N, numZ): H=W=1
    # Layer 0: 1x1 input, stride 1, pad 0 -> output pixels are exactly the 16 taps.
    c0 = wm0.shape[1] // 16
    y0 = matmul_pallas(x, wm0)                              # (N, 16*c0) bf16
    x = jax.nn.relu(y0).reshape(N, 4, 4, c0)                # (N, 4, 4, c0) bf16
    x = _deconv_nhwc(x, wm1)                                # (N,  8,  8, .)
    x = _deconv_nhwc(x, wm2)                                # (N, 16, 16, .)
    x = _deconv_nhwc(x, wm3)                                # (N, 32, 32, .)
    out_cf = _deconv_last_cfirst(x, w4t)                    # (C, N, 64, 64) f32
    C, _, H2, W2 = out_cf.shape
    out = jnp.transpose(out_cf, (1, 0, 2, 3))               # NCHW once, at the very end
    out = tanh_pallas(out.reshape(N * C, H2 * W2)).reshape(N, C, H2, W2)
    return out


# ----------------------------------------------------------------------------
# Pure-JAX reference (lax conv), quantization-matched to the bf16 kernel path
# ----------------------------------------------------------------------------
def _conv_transpose_ref(x, w_t, stride, padding):
    k = w_t.shape[-1]
    w_conv = jnp.flip(w_t, axis=(2, 3)).transpose(1, 0, 2, 3)  # (Cout, Cin, k, k)
    return jax.lax.conv_general_dilated(
        x, w_conv, window_strides=(1, 1),
        padding=[(k - 1 - padding,) * 2] * 2,
        lhs_dilation=(stride, stride),
        dimension_numbers=("NCHW", "OIHW", "NCHW"))


def _generator_ref(z, params):
    q = lambda t: t.astype(jnp.bfloat16).astype(jnp.float32)
    x = _conv_transpose_ref(q(z), q(params[0]), 1, 0)
    for w in params[1:]:
        x = _conv_transpose_ref(q(jax.nn.relu(x)), q(w), 2, 1)
    return jnp.tanh(x)


if __name__ == "__main__":
    # small config consistent with the module: numZ=16, numGenFeat=4, colorChannels=1
    batch, num_z, ngf, color_channels = 2, 16, 4, 1

    key = jax.random.PRNGKey(0)
    kz, kp = jax.random.split(key)
    z = jax.random.normal(kz, (batch, num_z, 1, 1), jnp.float32)
    params = init_generator_params(kp, num_z, ngf, color_channels)
    packed = pack_generator_params(params)

    out = jax.block_until_ready(generator_forward(z, packed))
    assert out.shape == (batch, color_channels, 64, 64), out.shape

    ref = jax.block_until_ready(_generator_ref(z, params))
    max_err = float(jnp.max(jnp.abs(out - ref)))
    # Tolerance is wider than a pure-f32-intermediate pipeline: the kernel stores
    # per-tap GEMM outputs in bf16 before the col2im sum, while the reference sums
    # taps in f32 and quantizes only at layer boundaries.
    assert jnp.allclose(out, ref, rtol=2e-2, atol=2e-2), max_err

    print("KERNEL_OK")
</pallas_src>

<mosaic_0001>
module attributes {stable_mosaic.version = 11 : i64} {
  func.func @_gemm_kernel(%arg0: i32, %arg1: i32, %arg2: memref<8x128xbf16, #tpu.memory_space<vmem>>, %arg3: memref<128x1024xbf16, #tpu.memory_space<vmem>>, %arg4: memref<8x1024xbf16, #tpu.memory_space<vmem>>) attributes {dimension_semantics = [#tpu.dimension_semantics<parallel>, #tpu.dimension_semantics<parallel>], iteration_bounds = array<i64: 1, 1>, scalar_prefetch = 0 : i64, scratch_operands = 0 : i64, tpu.core_type = #tpu.core_type<tc>, window_params = [{transform_indices = @transform_0, window_bounds = array<i64: 8, 128>}, {transform_indices = @transform_1, window_bounds = array<i64: 128, 1024>}, {transform_indices = @transform_2, window_bounds = array<i64: 8, 1024>}]} {
    %c0 = arith.constant 0 : index
    %c0_0 = arith.constant 0 : index
    %0 = vector.load %arg2[%c0, %c0_0] : memref<8x128xbf16, #tpu.memory_space<vmem>>, vector<8x128xbf16>
    %c0_1 = arith.constant 0 : index
    %c0_2 = arith.constant 0 : index
    %1 = vector.load %arg3[%c0_1, %c0_2] : memref<128x1024xbf16, #tpu.memory_space<vmem>>, vector<128x1024xbf16>
    %cst = arith.constant dense<0.000000e+00> : vector<8x1024xf32>
    %2 = tpu.matmul %0, %1, %cst {dimension_numbers = #tpu.dot_dimension_numbers<[1], [0], [0], [1], [0, 0, 1, 1], [], []>} : vector<8x128xbf16>, vector<128x1024xbf16>, vector<8x1024xf32> -> vector<8x1024xf32>
    %3 = arith.truncf %2 : vector<8x1024xf32> to vector<8x1024xbf16>
    %c0_3 = arith.constant 0 : index
    %c0_4 = arith.constant 0 : index
    %4 = vector.load %arg4[%c0_3, %c0_4] : memref<8x1024xbf16, #tpu.memory_space<vmem>>, vector<8x1024xbf16>
    tpu.vector_store %arg4[%c0_3, %c0_4], %3 {strides = array<i32>} : memref<8x1024xbf16, #tpu.memory_space<vmem>>, vector<8x1024xbf16>,
    return
  }
  func.func @transform_0(%arg0: i32, %arg1: i32) -> (i32, i32) {
    %c0_i32 = arith.constant 0 : i32
    %c0_i32_0 = arith.constant 0 : i32
    return %arg0, %c0_i32 : i32, i32
  }
  func.func @transform_1(%arg0: i32, %arg1: i32) -> (i32, i32) {
    %c0_i32 = arith.constant 0 : i32
    %c0_i32_0 = arith.constant 0 : i32
    return %c0_i32, %arg1 : i32, i32
  }
  func.func @transform_2(%arg0: i32, %arg1: i32) -> (i32, i32) {
    %c0_i32 = arith.constant 0 : i32
    return %arg0, %arg1 : i32, i32
  }
}

module attributes {stable_mosaic.version = 11 : i64} {
  func.func @_gemm_kernel(%arg0: i32, %arg1: i32, %arg2: memref<32x128xbf16, #tpu.memory_space<vmem>>, %arg3: memref<128x512xbf16, #tpu.memory_space<vmem>>, %arg4: memref<32x512xbf16, #tpu.memory_space<vmem>>) attributes {dimension_semantics = [#tpu.dimension_semantics<parallel>, #tpu.dimension_semantics<parallel>], iteration_bounds = array<i64: 1, 1>, scalar_prefetch = 0 : i64, scratch_operands = 0 : i64, tpu.core_type = #tpu.core_type<tc>, window_params = [{transform_indices = @transform_0, window_bounds = array<i64: 32, 128>}, {transform_indices = @transform_1, window_bounds = array<i64: 128, 512>}, {transform_indices = @transform_2, window_bounds = array<i64: 32, 512>}]} {
    %c0 = arith.constant 0 : index
    %c0_0 = arith.constant 0 : index
    %0 = vector.load %arg2[%c0, %c0_0] : memref<32x128xbf16, #tpu.memory_space<vmem>>, vector<32x128xbf16>
    %c0_1 = arith.constant 0 : index
    %c0_2 = arith.constant 0 : index
    %1 = vector.load %arg3[%c0_1, %c0_2] : memref<128x512xbf16, #tpu.memory_space<vmem>>, vector<128x512xbf16>
    %cst = arith.constant dense<0.000000e+00> : vector<32x512xf32>
    %2 = tpu.matmul %0, %1, %cst {dimension_numbers = #tpu.dot_dimension_numbers<[1], [0], [0], [1], [0, 0, 1, 1], [], []>} : vector<32x128xbf16>, vector<128x512xbf16>, vector<32x512xf32> -> vector<32x512xf32>
    %3 = arith.truncf %2 : vector<32x512xf32> to vector<32x512xbf16>
    %c0_3 = arith.constant 0 : index
    %c0_4 = arith.constant 0 : index
    %4 = vector.load %arg4[%c0_3, %c0_4] : memref<32x512xbf16, #tpu.memory_space<vmem>>, vector<32x512xbf16>
    tpu.vector_store %arg4[%c0_3, %c0_4], %3 {strides = array<i32>} : memref<32x512xbf16, #tpu.memory_space<vmem>>, vector<32x512xbf16>,
    return
  }
  func.func @transform_0(%arg0: i32, %arg1: i32) -> (i32, i32) {
    %c0_i32 = arith.constant 0 : i32
    %c0_i32_0 = arith.constant 0 : i32
    return %arg0, %c0_i32 : i32, i32
  }
  func.func @transform_1(%arg0: i32, %arg1: i32) -> (i32, i32) {
    %c0_i32 = arith.constant 0 : i32
    %c0_i32_0 = arith.constant 0 : i32
    return %c0_i32, %arg1 : i32, i32
  }
  func.func @transform_2(%arg0: i32, %arg1: i32) -> (i32, i32) {
    %c0_i32 = arith.constant 0 : i32
    return %arg0, %arg1 : i32, i32
  }
}

module attributes {stable_mosaic.version = 11 : i64} {
  func.func @_gemm_kernel(%arg0: i32, %arg1: i32, %arg2: memref<128x128xbf16, #tpu.memory_space<vmem>>, %arg3: memref<128x256xbf16, #tpu.memory_space<vmem>>, %arg4: memref<128x256xbf16, #tpu.memory_space<vmem>>) attributes {dimension_semantics = [#tpu.dimension_semantics<parallel>, #tpu.dimension_semantics<parallel>], iteration_bounds = array<i64: 1, 1>, scalar_prefetch = 0 : i64, scratch_operands = 0 : i64, tpu.core_type = #tpu.core_type<tc>, window_params = [{transform_indices = @transform_0, window_bounds = array<i64: 128, 128>}, {transform_indices = @transform_1, window_bounds = array<i64: 128, 256>}, {transform_indices = @transform_2, window_bounds = array<i64: 128, 256>}]} {
    %c0 = arith.constant 0 : index
    %c0_0 = arith.constant 0 : index
    %0 = vector.load %arg2[%c0, %c0_0] : memref<128x128xbf16, #tpu.memory_space<vmem>>, vector<128x128xbf16>
    %c0_1 = arith.constant 0 : index
    %c0_2 = arith.constant 0 : index
    %1 = vector.load %arg3[%c0_1, %c0_2] : memref<128x256xbf16, #tpu.memory_space<vmem>>, vector<128x256xbf16>
    %cst = arith.constant dense<0.000000e+00> : vector<128x256xf32>
    %2 = tpu.matmul %0, %1, %cst {dimension_numbers = #tpu.dot_dimension_numbers<[1], [0], [0], [1], [0, 0, 1, 1], [], []>} : vector<128x128xbf16>, vector<128x256xbf16>, vector<128x256xf32> -> vector<128x256xf32>
    %3 = arith.truncf %2 : vector<128x256xf32> to vector<128x256xbf16>
    %c0_3 = arith.constant 0 : index
    %c0_4 = arith.constant 0 : index
    %4 = vector.load %arg4[%c0_3, %c0_4] : memref<128x256xbf16, #tpu.memory_space<vmem>>, vector<128x256xbf16>
    tpu.vector_store %arg4[%c0_3, %c0_4], %3 {strides = array<i32>} : memref<128x256xbf16, #tpu.memory_space<vmem>>, vector<128x256xbf16>,
    return
  }
  func.func @transform_0(%arg0: i32, %arg1: i32) -> (i32, i32) {
    %c0_i32 = arith.constant 0 : i32
    %c0_i32_0 = arith.constant 0 : i32
    return %arg0, %c0_i32 : i32, i32
  }
  func.func @transform_1(%arg0: i32, %arg1: i32) -> (i32, i32) {
    %c0_i32 = arith.constant 0 : i32
    %c0_i32_0 = arith.constant 0 : i32
    return %c0_i32, %arg1 : i32, i32
  }
  func.func @transform_2(%arg0: i32, %arg1: i32) -> (i32, i32) {
    %c0_i32 = arith.constant 0 : i32
    return %arg0, %arg1 : i32, i32
  }
}

module attributes {stable_mosaic.version = 11 : i64} {
  func.func @_gemm_kernel(%arg0: i32, %arg1: i32, %arg2: memref<512x128xbf16, #tpu.memory_space<vmem>>, %arg3: memref<128x128xbf16, #tpu.memory_space<vmem>>, %arg4: memref<512x128xbf16, #tpu.memory_space<vmem>>) attributes {dimension_semantics = [#tpu.dimension_semantics<parallel>, #tpu.dimension_semantics<parallel>], iteration_bounds = array<i64: 1, 1>, scalar_prefetch = 0 : i64, scratch_operands = 0 : i64, tpu.core_type = #tpu.core_type<tc>, window_params = [{transform_indices = @transform_0, window_bounds = array<i64: 512, 128>}, {transform_indices = @transform_1, window_bounds = array<i64: 128, 128>}, {transform_indices = @transform_2, window_bounds = array<i64: 512, 128>}]} {
    %c0 = arith.constant 0 : index
    %c0_0 = arith.constant 0 : index
    %0 = vector.load %arg2[%c0, %c0_0] : memref<512x128xbf16, #tpu.memory_space<vmem>>, vector<512x128xbf16>
    %c0_1 = arith.constant 0 : index
    %c0_2 = arith.constant 0 : index
    %1 = vector.load %arg3[%c0_1, %c0_2] : memref<128x128xbf16, #tpu.memory_space<vmem>>, vector<128x128xbf16>
    %cst = arith.constant dense<0.000000e+00> : vector<512x128xf32>
    %2 = tpu.matmul %0, %1, %cst {dimension_numbers = #tpu.dot_dimension_numbers<[1], [0], [0], [1], [0, 0, 1, 1], [], []>} : vector<512x128xbf16>, vector<128x128xbf16>, vector<512x128xf32> -> vector<512x128xf32>
    %3 = arith.truncf %2 : vector<512x128xf32> to vector<512x128xbf16>
    %c0_3 = arith.constant 0 : index
    %c0_4 = arith.constant 0 : index
    %4 = vector.load %arg4[%c0_3, %c0_4] : memref<512x128xbf16, #tpu.memory_space<vmem>>, vector<512x128xbf16>
    tpu.vector_store %arg4[%c0_3, %c0_4], %3 {strides = array<i32>} : memref<512x128xbf16, #tpu.memory_space<vmem>>, vector<512x128xbf16>,
    return
  }
  func.func @transform_0(%arg0: i32, %arg1: i32) -> (i32, i32) {
    %c0_i32 = arith.constant 0 : i32
    %c0_i32_0 = arith.constant 0 : i32
    return %arg0, %c0_i32 : i32, i32
  }
  func.func @transform_1(%arg0: i32, %arg1: i32) -> (i32, i32) {
    %c0_i32 = arith.constant 0 : i32
    %c0_i32_0 = arith.constant 0 : i32
    return %c0_i32, %arg1 : i32, i32
  }
  func.func @transform_2(%arg0: i32, %arg1: i32) -> (i32, i32) {
    %c0_i32 = arith.constant 0 : i32
    return %arg0, %arg1 : i32, i32
  }
}

module attributes {stable_mosaic.version = 11 : i64} {
  func.func @_gemm_kernel(%arg0: i32, %arg1: i32, %arg2: memref<16x128xbf16, #tpu.memory_space<vmem>>, %arg3: memref<128x2048xbf16, #tpu.memory_space<vmem>>, %arg4: memref<16x2048xbf16, #tpu.memory_space<vmem>>) attributes {dimension_semantics = [#tpu.dimension_semantics<parallel>, #tpu.dimension_semantics<parallel>], iteration_bounds = array<i64: 1, 1>, scalar_prefetch = 0 : i64, scratch_operands = 0 : i64, tpu.core_type = #tpu.core_type<tc>, window_params = [{transform_indices = @transform_0, window_bounds = array<i64: 16, 128>}, {transform_indices = @transform_1, window_bounds = array<i64: 128, 2048>}, {transform_indices = @transform_2, window_bounds = array<i64: 16, 2048>}]} {
    %c0 = arith.constant 0 : index
    %c0_0 = arith.constant 0 : index
    %0 = vector.load %arg2[%c0, %c0_0] : memref<16x128xbf16, #tpu.memory_space<vmem>>, vector<16x128xbf16>
    %c0_1 = arith.constant 0 : index
    %c0_2 = arith.constant 0 : index
    %1 = vector.load %arg3[%c0_1, %c0_2] : memref<128x2048xbf16, #tpu.memory_space<vmem>>, vector<128x2048xbf16>
    %cst = arith.constant dense<0.000000e+00> : vector<16x2048xf32>
    %2 = tpu.matmul %0, %1, %cst {dimension_numbers = #tpu.dot_dimension_numbers<[1], [0], [0], [1], [0, 0, 1, 1], [], []>} : vector<16x128xbf16>, vector<128x2048xbf16>, vector<16x2048xf32> -> vector<16x2048xf32>
    %3 = arith.truncf %2 : vector<16x2048xf32> to vector<16x2048xbf16>
    %c0_3 = arith.constant 0 : index
    %c0_4 = arith.constant 0 : index
    %4 = vector.load %arg4[%c0_3, %c0_4] : memref<16x2048xbf16, #tpu.memory_space<vmem>>, vector<16x2048xbf16>
    tpu.vector_store %arg4[%c0_3, %c0_4], %3 {strides = array<i32>} : memref<16x2048xbf16, #tpu.memory_space<vmem>>, vector<16x2048xbf16>,
    return
  }
  func.func @transform_0(%arg0: i32, %arg1: i32) -> (i32, i32) {
    %c0_i32 = arith.constant 0 : i32
    %c0_i32_0 = arith.constant 0 : i32
    return %arg0, %c0_i32 : i32, i32
  }
  func.func @transform_1(%arg0: i32, %arg1: i32) -> (i32, i32) {
    %c0_i32 = arith.constant 0 : i32
    %c0_i32_0 = arith.constant 0 : i32
    return %c0_i32, %arg1 : i32, i32
  }
  func.func @transform_2(%arg0: i32, %arg1: i32) -> (i32, i32) {
    %c0_i32 = arith.constant 0 : i32
    return %arg0, %arg1 : i32, i32
  }
}

module attributes {stable_mosaic.version = 11 : i64} {
  func.func @_tanh_kernel(%arg0: i32, %arg1: memref<8x4096xf32, #tpu.memory_space<vmem>>, %arg2: memref<8x4096xf32, #tpu.memory_space<vmem>>) attributes {dimension_semantics = [#tpu.dimension_semantics<parallel>], iteration_bounds = array<i64: 1>, scalar_prefetch = 0 : i64, scratch_operands = 0 : i64, tpu.core_type = #tpu.core_type<tc>, window_params = [{transform_indices = @transform_0, window_bounds = array<i64: 8, 4096>}, {transform_indices = @transform_1, window_bounds = array<i64: 8, 4096>}]} {
    %c0 = arith.constant 0 : index
    %c0_0 = arith.constant 0 : index
    %0 = vector.load %arg1[%c0, %c0_0] : memref<8x4096xf32, #tpu.memory_space<vmem>>, vector<8x4096xf32>
    %1 = math.tanh %0 : vector<8x4096xf32>
    %c0_1 = arith.constant 0 : index
    %c0_2 = arith.constant 0 : index
    %2 = vector.load %arg2[%c0_1, %c0_2] : memref<8x4096xf32, #tpu.memory_space<vmem>>, vector<8x4096xf32>
    tpu.vector_store %arg2[%c0_1, %c0_2], %1 {strides = array<i32>} : memref<8x4096xf32, #tpu.memory_space<vmem>>, vector<8x4096xf32>,
    return
  }
  func.func @transform_0(%arg0: i32) -> (i32, i32) {
    %c0_i32 = arith.constant 0 : i32
    %c0_i32_0 = arith.constant 0 : i32
    return %arg0, %c0_i32 : i32, i32
  }
  func.func @transform_1(%arg0: i32) -> (i32, i32) {
    %c0_i32 = arith.constant 0 : i32
    %c0_i32_0 = arith.constant 0 : i32
    return %arg0, %c0_i32 : i32, i32
  }
}

</mosaic_0001>

<llo_original>
// kernel: generator_forward.7
$region0: #{generator_forward.7}
  #allocation0 [shape = 'u32[]', space=smem, size = 0x4, offset = 0x4, fixed_abs, tag = 'smem constant byte address 0x4 - core index']
  #allocation1 [shape = 'u32[144,128]{1,0:T(1,128)}', space=vmem, size = 0x12000, scoped, tag = 'internal scratch']
  %s0 = inlined_call_operand.vmem [shape: bf16[32,128], index: 0, kind: input, shape index: {}]
  %s1 = inlined_call_operand.vmem [shape: bf16[128,512], index: 1, kind: input, shape index: {}]
  %s2 = inlined_call_operand.vmem [shape: bf16[32,512], index: 2, kind: output, shape index: {}]
  %s3 = sld [smem:[#allocation0]]
  $region18: #{generator_forward.7} parent=0
    _
  %s5 = ssub.s32 1, %s3
  %s6 = scalar_select 0, %s5, %s3
  // Predicated region
  $region2: #{generator_forward.7} parent=0 // pred_check
    _
  $region3: #{generator_forward.7} parent=0 // pred_check_branch
    %8 = sbr.rel (0) target = $region5
  $region4: #{generator_forward.7} parent=0 // pred_region
    _
  $region5: #{generator_forward.7} parent=0 // pred_fallthru
    _
  // Predicated region
  $region6: #{generator_forward.7} parent=0 // pred_check
    _
  $region7: #{generator_forward.7} parent=0 // pred_check_branch
    %10 = sbr.rel (0) target = $region9
  $region8: #{generator_forward.7} parent=0 // pred_region
    _
  $region9: #{generator_forward.7} parent=0 // pred_fallthru
    _
  %v12 = vld [vmem:[%s0] sm:$0xf]
  %v13 = vld [vmem:[%s0 + $0x4] sm:$0xf]
  %v14 = vld [vmem:[%s0 + $0x8] sm:$0xf]
  %v15 = vld [vmem:[%s0 + $0xc] sm:$0xf]
  %v16 = vld [vmem:[%s1] sm:$0xff]
  %v17 = vld [vmem:[%s1 + $0x8] sm:$0xff]
  %v18 = vld [vmem:[%s1 + $0x10] sm:$0xff]
  %v19 = vld [vmem:[%s1 + $0x18] sm:$0xff]
  %v20 = vld [vmem:[%s1 + $0x20] sm:$0xff]
  %v21 = vld [vmem:[%s1 + $0x28] sm:$0xff]
  %v22 = vld [vmem:[%s1 + $0x30] sm:$0xff]
  %v23 = vld [vmem:[%s1 + $0x38] sm:$0xff]
  %v24 = vld [vmem:[%s1 + $0x40] sm:$0xff]
  %v25 = vld [vmem:[%s1 + $0x48] sm:$0xff]
  %v26 = vld [vmem:[%s1 + $0x50] sm:$0xff]
  %v27 = vld [vmem:[%s1 + $0x58] sm:$0xff]
  %v28 = vld [vmem:[%s1 + $0x60] sm:$0xff]
  %v29 = vld [vmem:[%s1 + $0x68] sm:$0xff]
  %v30 = vld [vmem:[%s1 + $0x70] sm:$0xff]
  %v31 = vld [vmem:[%s1 + $0x78] sm:$0xff]
  %v32 = vld [vmem:[%s1 + $0x80] sm:$0xff]
  %v33 = vld [vmem:[%s1 + $0x88] sm:$0xff]
  %v34 = vld [vmem:[%s1 + $0x90] sm:$0xff]
  %v35 = vld [vmem:[%s1 + $0x98] sm:$0xff]
  %v36 = vld [vmem:[%s1 + $0xa0] sm:$0xff]
  %v37 = vld [vmem:[%s1 + $0xa8] sm:$0xff]
  %v38 = vld [vmem:[%s1 + $0xb0] sm:$0xff]
  %v39 = vld [vmem:[%s1 + $0xb8] sm:$0xff]
  %v40 = vld [vmem:[%s1 + $0xc0] sm:$0xff]
  %v41 = vld [vmem:[%s1 + $0xc8] sm:$0xff]
  %v42 = vld [vmem:[%s1 + $0xd0] sm:$0xff]
  %v43 = vld [vmem:[%s1 + $0xd8] sm:$0xff]
  %v44 = vld [vmem:[%s1 + $0xe0] sm:$0xff]
  %v45 = vld [vmem:[%s1 + $0xe8] sm:$0xff]
  %v46 = vld [vmem:[%s1 + $0xf0] sm:$0xff]
  %v47 = vld [vmem:[%s1 + $0xf8] sm:$0xff]
  %v52 = vunpack.c.l.b16 %v12
  %v53 = vunpack.c.l.b16 %v13
  %v54 = vunpack.c.l.b16 %v14
  %v55 = vunpack.c.l.b16 %v15
  %v56 = vpack.c.b16 %v53, %v52
  %v57 = vpack.c.b16 %v55, %v54
  %v92 = vunpack.c.l.b16 %v16
  %v93 = vunpack.c.h.b16 %v16
  %v94 = vunpack.c.l.b16 %v17
  %v95 = vunpack.c.h.b16 %v17
  %v96 = vunpack.c.l.b16 %v18
  %v97 = vunpack.c.h.b16 %v18
  %v98 = vunpack.c.l.b16 %v19
  %v99 = vunpack.c.h.b16 %v19
  %v100 = vunpack.c.l.b16 %v20
  %v101 = vunpack.c.h.b16 %v20
  %v102 = vunpack.c.l.b16 %v21
  %v103 = vunpack.c.h.b16 %v21
  %v104 = vunpack.c.l.b16 %v22
  %v105 = vunpack.c.h.b16 %v22
  %v106 = vunpack.c.l.b16 %v23
  %v107 = vunpack.c.h.b16 %v23
  %v108 = vunpack.c.l.b16 %v24
  %v109 = vunpack.c.h.b16 %v24
  %v110 = vunpack.c.l.b16 %v25
  %v111 = vunpack.c.h.b16 %v25
  %v112 = vunpack.c.l.b16 %v26
  %v113 = vunpack.c.h.b16 %v26
  %v114 = vunpack.c.l.b16 %v27
  %v115 = vunpack.c.h.b16 %v27
  %v116 = vunpack.c.l.b16 %v28
  %v117 = vunpack.c.h.b16 %v28
  %v118 = vunpack.c.l.b16 %v29
  %v119 = vunpack.c.h.b16 %v29
  %v120 = vunpack.c.l.b16 %v30
  %v121 = vunpack.c.h.b16 %v30
  %v122 = vunpack.c.l.b16 %v31
  %v123 = vunpack.c.h.b16 %v31
  %v124 = vunpack.c.l.b16 %v32
  %v125 = vunpack.c.h.b16 %v32
  %v126 = vunpack.c.l.b16 %v33
  %v127 = vunpack.c.h.b16 %v33
  %v128 = vunpack.c.l.b16 %v34
  %v129 = vunpack.c.h.b16 %v34
  %v130 = vunpack.c.l.b16 %v35
  %v131 = vunpack.c.h.b16 %v35
  %v132 = vunpack.c.l.b16 %v36
  %v133 = vunpack.c.h.b16 %v36
  %v134 = vunpack.c.l.b16 %v37
  %v135 = vunpack.c.h.b16 %v37
  %v136 = vunpack.c.l.b16 %v38
  %v137 = vunpack.c.h.b16 %v38
  %v138 = vunpack.c.l.b16 %v39
  %v139 = vunpack.c.h.b16 %v39
  %v140 = vunpack.c.l.b16 %v40
  %v141 = vunpack.c.h.b16 %v40
  %v142 = vunpack.c.l.b16 %v41
  %v143 = vunpack.c.h.b16 %v41
  %v144 = vunpack.c.l.b16 %v42
  %v145 = vunpack.c.h.b16 %v42
  %v146 = vunpack.c.l.b16 %v43
  %v147 = vunpack.c.h.b16 %v43
  %v148 = vunpack.c.l.b16 %v44
  %v149 = vunpack.c.h.b16 %v44
  %v150 = vunpack.c.l.b16 %v45
  %v151 = vunpack.c.h.b16 %v45
  %v152 = vunpack.c.l.b16 %v46
  %v153 = vunpack.c.h.b16 %v46
  %v154 = vunpack.c.l.b16 %v47
  %v155 = vunpack.c.h.b16 %v47
  %v156 = vpack.c.b16 %v96, %v92
  %v157 = vpack.c.b16 %v97, %v93
  %v158 = vpack.c.b16 %v98, %v94
  %v159 = vpack.c.b16 %v99, %v95
  %v160 = vpack.c.b16 %v104, %v100
  %v161 = vpack.c.b16 %v105, %v101
  %v162 = vpack.c.b16 %v106, %v102
  %v163 = vpack.c.b16 %v107, %v103
  %v164 = vpack.c.b16 %v112, %v108
  %v165 = vpack.c.b16 %v113, %v109
  %v166 = vpack.c.b16 %v114, %v110
  %v167 = vpack.c.b16 %v115, %v111
  %v168 = vpack.c.b16 %v120, %v116
  %v169 = vpack.c.b16 %v121, %v117
  %v170 = vpack.c.b16 %v122, %v118
  %v171 = vpack.c.b16 %v123, %v119
  %v172 = vpack.c.b16 %v128, %v124
  %v173 = vpack.c.b16 %v129, %v125
  %v174 = vpack.c.b16 %v130, %v126
  %v175 = vpack.c.b16 %v131, %v127
  %v176 = vpack.c.b16 %v136, %v132
  %v177 = vpack.c.b16 %v137, %v133
  %v178 = vpack.c.b16 %v138, %v134
  %v179 = vpack.c.b16 %v139, %v135
  %v180 = vpack.c.b16 %v144, %v140
  %v181 = vpack.c.b16 %v145, %v141
  %v182 = vpack.c.b16 %v146, %v142
  %v183 = vpack.c.b16 %v147, %v143
  %v184 = vpack.c.b16 %v152, %v148
  %v185 = vpack.c.b16 %v153, %v149
  %v186 = vpack.c.b16 %v154, %v150
  %v187 = vpack.c.b16 %v155, %v151
  %220 = vmatprep.subr.bf16.mxu0 %v157
  %221 = vmatpush1.bf16.msra.mxu0 %v156
  %222 = vmatprep.subr.bf16.mxu0 %v161
  %223 = vmatpush1.bf16.msra.mxu0 %v160
  %224 = vmatprep.subr.bf16.mxu0 %v165
  %225 = vmatpush1.bf16.msra.mxu0 %v164
  %226 = vmatprep.subr.bf16.mxu0 %v169
  %227 = vmatpush1.bf16.msra.mxu0 %v168
  %228 = vmatprep.subr.bf16.mxu0 %v173
  %229 = vmatpush1.bf16.msra.mxu0 %v172
  %230 = vmatprep.subr.bf16.mxu0 %v177
  %231 = vmatpush1.bf16.msra.mxu0 %v176
  %232 = vmatprep.subr.bf16.mxu0 %v181
  %233 = vmatpush1.bf16.msra.mxu0 %v180
  %234 = vmatprep.subr.bf16.mxu0 %v185
  %235 = vmatpush1.bf16.msra.mxu0 %v184
  %236 = vmatprep.subr.bf16.mxu0 0
  %237 = vmatpush1.bf16.msra.mxu0 0
  %238 = vmatprep.subr.bf16.mxu0 0
  %239 = vmatpush1.bf16.msra.mxu0 0
  %240 = vmatprep.subr.bf16.mxu0 0
  %241 = vmatpush1.bf16.msra.mxu0 0
  %242 = vmatprep.subr.bf16.mxu0 0
  %243 = vmatpush1.bf16.msra.mxu0 0
  %244 = vmatprep.subr.bf16.mxu0 0
  %245 = vmatpush1.bf16.msra.mxu0 0
  %246 = vmatprep.subr.bf16.mxu0 0
  %247 = vmatpush1.bf16.msra.mxu0 0
  %248 = vmatprep.subr.bf16.mxu0 0
  %249 = vmatpush1.bf16.msra.mxu0 0
  %250 = vmatprep.subr.bf16.mxu0 0
  %251 = vmatpush1.bf16.msra.mxu0 0
  %252 = vmatprep.mubr.bf16.mxu0 0
  %253 = vmatmul.mubr.bf16.gmra.mrb[0].mxu0 %v56
  %v254 = vpop.f32.mrb[0].mxu0
  %v255 = vadd.f32 0.0, %v254
  %v256 = vpop.f32.mrb[0].mxu0
  %v257 = vadd.f32 0.0, %v256
  %v258 = vpop.f32.mrb[0].mxu0
  %v259 = vadd.f32 0.0, %v258
  %v260 = vpop.f32.mrb[0].mxu0
  %v261 = vadd.f32 0.0, %v260
  %262 = vmatprep.mubr.bf16.mxu0 0
  %263 = vmatmul.mubr.bf16.gmra.mrb[0].mxu0 %v57
  %v264 = vpop.f32.mrb[0].mxu0
  %v265 = vadd.f32 0.0, %v264
  %v266 = vpop.f32.mrb[0].mxu0
  %v267 = vadd.f32 0.0, %v266
  %v268 = vpop.f32.mrb[0].mxu0
  %v269 = vadd.f32 0.0, %v268
  %v270 = vpop.f32.mrb[0].mxu0
  %v271 = vadd.f32 0.0, %v270
  %272 = vdwg.mxu0
  %273 = vmatprep.subr.bf16.mxu0 %v159
  %274 = vmatpush1.bf16.msra.mxu0 %v158
  %275 = vmatprep.subr.bf16.mxu0 %v163
  %276 = vmatpush1.bf16.msra.mxu0 %v162
  %277 = vmatprep.subr.bf16.mxu0 %v167
  %278 = vmatpush1.bf16.msra.mxu0 %v166
  %279 = vmatprep.subr.bf16.mxu0 %v171
  %280 = vmatpush1.bf16.msra.mxu0 %v170
  %281 = vmatprep.subr.bf16.mxu0 %v175
  %282 = vmatpush1.bf16.msra.mxu0 %v174
  %283 = vmatprep.subr.bf16.mxu0 %v179
  %284 = vmatpush1.bf16.msra.mxu0 %v178
  %285 = vmatprep.subr.bf16.mxu0 %v183
  %286 = vmatpush1.bf16.msra.mxu0 %v182
  %287 = vmatprep.subr.bf16.mxu0 %v187
  %288 = vmatpush1.bf16.msra.mxu0 %v186
  %289 = vmatprep.subr.bf16.mxu0 0
  %290 = vmatpush1.bf16.msra.mxu0 0
  %291 = vmatprep.subr.bf16.mxu0 0
  %292 = vmatpush1.bf16.msra.mxu0 0
  %293 = vmatprep.subr.bf16.mxu0 0
  %294 = vmatpush1.bf16.msra.mxu0 0
  %295 = vmatprep.subr.bf16.mxu0 0
  %296 = vmatpush1.bf16.msra.mxu0 0
  %297 = vmatprep.subr.bf16.mxu0 0
  %298 = vmatpush1.bf16.msra.mxu0 0
  %299 = vmatprep.subr.bf16.mxu0 0
  %300 = vmatpush1.bf16.msra.mxu0 0
  %301 = vmatprep.subr.bf16.mxu0 0
  %302 = vmatpush1.bf16.msra.mxu0 0
  %303 = vmatprep.subr.bf16.mxu0 0
  %304 = vmatpush1.bf16.msra.mxu0 0
  %305 = vmatprep.mubr.bf16.mxu0 0
  %306 = vmatmul.mubr.bf16.gmra.mrb[0].mxu0 %v56
  %v307 = vpop.f32.mrb[0].mxu0
  %v308 = vadd.f32 0.0, %v307
  %v309 = vpop.f32.mrb[0].mxu0
  %v310 = vadd.f32 0.0, %v309
  %v311 = vpop.f32.mrb[0].mxu0
  %v312 = vadd.f32 0.0, %v311
  %v313 = vpop.f32.mrb[0].mxu0
  %v314 = vadd.f32 0.0, %v313
  %315 = vmatprep.mubr.bf16.mxu0 0
  %316 = vmatmul.mubr.bf16.gmra.mrb[0].mxu0 %v57
  %v317 = vpop.f32.mrb[0].mxu0
  %v318 = vadd.f32 0.0, %v317
  %v319 = vpop.f32.mrb[0].mxu0
  %v320 = vadd.f32 0.0, %v319
  %v321 = vpop.f32.mrb[0].mxu0
  %v322 = vadd.f32 0.0, %v321
  %v323 = vpop.f32.mrb[0].mxu0
  %v324 = vadd.f32 0.0, %v323
  %325 = vdwg.mxu0
  %v326 = vpack.c.bf16 %v259, %v255
  %v327 = vpack.c.bf16 %v261, %v257
  %v328 = vpack.c.bf16 %v312, %v308
  %v329 = vpack.c.bf16 %v314, %v310
  %v330 = vpack.c.bf16 %v269, %v265
  %v331 = vpack.c.bf16 %v271, %v267
  %v332 = vpack.c.bf16 %v322, %v318
  %v333 = vpack.c.bf16 %v324, %v320
  %v342 = vunpack.c.l.b16 %v326
  %v343 = vunpack.c.l.b16 %v327
  %v344 = vunpack.c.l.b16 %v328
  %v345 = vunpack.c.l.b16 %v329
  %v346 = vunpack.c.h.b16 %v326
  %v347 = vunpack.c.h.b16 %v327
  %v348 = vunpack.c.h.b16 %v328
  %v349 = vunpack.c.h.b16 %v329
  %v350 = vunpack.c.l.b16 %v330
  %v351 = vunpack.c.l.b16 %v331
  %v352 = vunpack.c.l.b16 %v332
  %v353 = vunpack.c.l.b16 %v333
  %v354 = vunpack.c.h.b16 %v330
  %v355 = vunpack.c.h.b16 %v331
  %v356 = vunpack.c.h.b16 %v332
  %v357 = vunpack.c.h.b16 %v333
  %v358 = vpack.c.b16 %v343, %v342
  %v359 = vpack.c.b16 %v345, %v344
  %v360 = vpack.c.b16 %v347, %v346
  %v361 = vpack.c.b16 %v349, %v348
  %v362 = vpack.c.b16 %v351, %v350
  %v363 = vpack.c.b16 %v353, %v352
  %v364 = vpack.c.b16 %v355, %v354
  %v365 = vpack.c.b16 %v357, %v356
  %374 = vst [vmem:[%s2] sm:$0xff] %v358
  %375 = vst [vmem:[%s2 + $0x8] sm:$0xff] %v359
  %376 = vst [vmem:[%s2 + $0x10] sm:$0xff] %v360
  %377 = vst [vmem:[%s2 + $0x18] sm:$0xff] %v361
  %378 = vst [vmem:[%s2 + $0x20] sm:$0xff] %v362
  %379 = vst [vmem:[%s2 + $0x28] sm:$0xff] %v363
  %380 = vst [vmem:[%s2 + $0x30] sm:$0xff] %v364
  %381 = vst [vmem:[%s2 + $0x38] sm:$0xff] %v365
  // Predicated region
  $region10: #{generator_forward.7} parent=0 // pred_check
    _
  $region11: #{generator_forward.7} parent=0 // pred_check_branch
    %383 = sbr.rel (0) target = $region13
  $region12: #{generator_forward.7} parent=0 // pred_region
    _
  $region13: #{generator_forward.7} parent=0 // pred_fallthru
    _
  // Predicated region
  $region14: #{generator_forward.7} parent=0 // pred_check
    _
  $region15: #{generator_forward.7} parent=0 // pred_check_branch
    %385 = sbr.rel (0) target = $region17
  $region16: #{generator_forward.7} parent=0 // pred_region
    _
  $region17: #{generator_forward.7} parent=0 // pred_fallthru
    _

// kernel: generator_forward.6
$region0: #{generator_forward.6}
  #allocation0 [shape = 'u32[]', space=smem, size = 0x4, offset = 0x4, fixed_abs, tag = 'smem constant byte address 0x4 - core index']
  #allocation1 [shape = 'u32[144,128]{1,0:T(1,128)}', space=vmem, size = 0x12000, scoped, tag = 'internal scratch']
  %s0 = inlined_call_operand.vmem [shape: bf16[8,128], index: 0, kind: input, shape index: {}]
  %s1 = inlined_call_operand.vmem [shape: bf16[128,1024], index: 1, kind: input, shape index: {}]
  %s2 = inlined_call_operand.vmem [shape: bf16[8,1024], index: 2, kind: output, shape index: {}]
  %s3 = sld [smem:[#allocation0]]
  $region18: #{generator_forward.6} parent=0
    _
  %s5 = ssub.s32 1, %s3
  %s6 = scalar_select 0, %s5, %s3
  // Predicated region
  $region2: #{generator_forward.6} parent=0 // pred_check
    _
  $region3: #{generator_forward.6} parent=0 // pred_check_branch
    %8 = sbr.rel (0) target = $region5
  $region4: #{generator_forward.6} parent=0 // pred_region
    _
  $region5: #{generator_forward.6} parent=0 // pred_fallthru
    _
  // Predicated region
  $region6: #{generator_forward.6} parent=0 // pred_check
    _
  $region7: #{generator_forward.6} parent=0 // pred_check_branch
    %10 = sbr.rel (0) target = $region9
  $region8: #{generator_forward.6} parent=0 // pred_region
    _
  $region9: #{generator_forward.6} parent=0 // pred_fallthru
    _
  %v12 = vld [vmem:[%s0] sm:$0xf]
  %v13 = vld [vmem:[%s1] sm:$0xff]
  %v14 = vld [vmem:[%s1 + $0x8] sm:$0xff]
  %v15 = vld [vmem:[%s1 + $0x10] sm:$0xff]
  %v16 = vld [vmem:[%s1 + $0x18] sm:$0xff]
  %v17 = vld [vmem:[%s1 + $0x20] sm:$0xff]
  %v18 = vld [vmem:[%s1 + $0x28] sm:$0xff]
  %v19 = vld [vmem:[%s1 + $0x30] sm:$0xff]
  %v20 = vld [vmem:[%s1 + $0x38] sm:$0xff]
  %v21 = vld [vmem:[%s1 + $0x40] sm:$0xff]
  %v22 = vld [vmem:[%s1 + $0x48] sm:$0xff]
  %v23 = vld [vmem:[%s1 + $0x50] sm:$0xff]
  %v24 = vld [vmem:[%s1 + $0x58] sm:$0xff]
  %v25 = vld [vmem:[%s1 + $0x60] sm:$0xff]
  %v26 = vld [vmem:[%s1 + $0x68] sm:$0xff]
  %v27 = vld [vmem:[%s1 + $0x70] sm:$0xff]
  %v28 = vld [vmem:[%s1 + $0x78] sm:$0xff]
  %v29 = vld [vmem:[%s1 + $0x80] sm:$0xff]
  %v30 = vld [vmem:[%s1 + $0x88] sm:$0xff]
  %v31 = vld [vmem:[%s1 + $0x90] sm:$0xff]
  %v32 = vld [vmem:[%s1 + $0x98] sm:$0xff]
  %v33 = vld [vmem:[%s1 + $0xa0] sm:$0xff]
  %v34 = vld [vmem:[%s1 + $0xa8] sm:$0xff]
  %v35 = vld [vmem:[%s1 + $0xb0] sm:$0xff]
  %v36 = vld [vmem:[%s1 + $0xb8] sm:$0xff]
  %v37 = vld [vmem:[%s1 + $0xc0] sm:$0xff]
  %v38 = vld [vmem:[%s1 + $0xc8] sm:$0xff]
  %v39 = vld [vmem:[%s1 + $0xd0] sm:$0xff]
  %v40 = vld [vmem:[%s1 + $0xd8] sm:$0xff]
  %v41 = vld [vmem:[%s1 + $0xe0] sm:$0xff]
  %v42 = vld [vmem:[%s1 + $0xe8] sm:$0xff]
  %v43 = vld [vmem:[%s1 + $0xf0] sm:$0xff]
  %v44 = vld [vmem:[%s1 + $0xf8] sm:$0xff]
  %v45 = vld [vmem:[%s1 + $0x100] sm:$0xff]
  %v46 = vld [vmem:[%s1 + $0x108] sm:$0xff]
  %v47 = vld [vmem:[%s1 + $0x110] sm:$0xff]
  %v48 = vld [vmem:[%s1 + $0x118] sm:$0xff]
  %v49 = vld [vmem:[%s1 + $0x120] sm:$0xff]
  %v50 = vld [vmem:[%s1 + $0x128] sm:$0xff]
  %v51 = vld [vmem:[%s1 + $0x130] sm:$0xff]
  %v52 = vld [vmem:[%s1 + $0x138] sm:$0xff]
  %v53 = vld [vmem:[%s1 + $0x140] sm:$0xff]
  %v54 = vld [vmem:[%s1 + $0x148] sm:$0xff]
  %v55 = vld [vmem:[%s1 + $0x150] sm:$0xff]
  %v56 = vld [vmem:[%s1 + $0x158] sm:$0xff]
  %v57 = vld [vmem:[%s1 + $0x160] sm:$0xff]
  %v58 = vld [vmem:[%s1 + $0x168] sm:$0xff]
  %v59 = vld [vmem:[%s1 + $0x170] sm:$0xff]
  %v60 = vld [vmem:[%s1 + $0x178] sm:$0xff]
  %v61 = vld [vmem:[%s1 + $0x180] sm:$0xff]
  %v62 = vld [vmem:[%s1 + $0x188] sm:$0xff]
  %v63 = vld [vmem:[%s1 + $0x190] sm:$0xff]
  %v64 = vld [vmem:[%s1 + $0x198] sm:$0xff]
  %v65 = vld [vmem:[%s1 + $0x1a0] sm:$0xff]
  %v66 = vld [vmem:[%s1 + $0x1a8] sm:$0xff]
  %v67 = vld [vmem:[%s1 + $0x1b0] sm:$0xff]
  %v68 = vld [vmem:[%s1 + $0x1b8] sm:$0xff]
  %v69 = vld [vmem:[%s1 + $0x1c0] sm:$0xff]
  %v70 = vld [vmem:[%s1 + $0x1c8] sm:$0xff]
  %v71 = vld [vmem:[%s1 + $0x1d0] sm:$0xff]
  %v72 = vld [vmem:[%s1 + $0x1d8] sm:$0xff]
  %v73 = vld [vmem:[%s1 + $0x1e0] sm:$0xff]
  %v74 = vld [vmem:[%s1 + $0x1e8] sm:$0xff]
  %v75 = vld [vmem:[%s1 + $0x1f0] sm:$0xff]
  %v76 = vld [vmem:[%s1 + $0x1f8] sm:$0xff]
  %v141 = vunpack.c.l.b16 %v13
  %v142 = vunpack.c.h.b16 %v13
  %v143 = vunpack.c.l.b16 %v14
  %v144 = vunpack.c.h.b16 %v14
  %v145 = vunpack.c.l.b16 %v15
  %v146 = vunpack.c.h.b16 %v15
  %v147 = vunpack.c.l.b16 %v16
  %v148 = vunpack.c.h.b16 %v16
  %v149 = vunpack.c.l.b16 %v17
  %v150 = vunpack.c.h.b16 %v17
  %v151 = vunpack.c.l.b16 %v18
  %v152 = vunpack.c.h.b16 %v18
  %v153 = vunpack.c.l.b16 %v19
  %v154 = vunpack.c.h.b16 %v19
  %v155 = vunpack.c.l.b16 %v20
  %v156 = vunpack.c.h.b16 %v20
  %v157 = vunpack.c.l.b16 %v21
  %v158 = vunpack.c.h.b16 %v21
  %v159 = vunpack.c.l.b16 %v22
  %v160 = vunpack.c.h.b16 %v22
  %v161 = vunpack.c.l.b16 %v23
  %v162 = vunpack.c.h.b16 %v23
  %v163 = vunpack.c.l.b16 %v24
  %v164 = vunpack.c.h.b16 %v24
  %v165 = vunpack.c.l.b16 %v25
  %v166 = vunpack.c.h.b16 %v25
  %v167 = vunpack.c.l.b16 %v26
  %v168 = vunpack.c.h.b16 %v26
  %v169 = vunpack.c.l.b16 %v27
  %v170 = vunpack.c.h.b16 %v27
  %v171 = vunpack.c.l.b16 %v28
  %v172 = vunpack.c.h.b16 %v28
  %v173 = vunpack.c.l.b16 %v29
  %v174 = vunpack.c.h.b16 %v29
  %v175 = vunpack.c.l.b16 %v30
  %v176 = vunpack.c.h.b16 %v30
  %v177 = vunpack.c.l.b16 %v31
  %v178 = vunpack.c.h.b16 %v31
  %v179 = vunpack.c.l.b16 %v32
  %v180 = vunpack.c.h.b16 %v32
  %v181 = vunpack.c.l.b16 %v33
  %v182 = vunpack.c.h.b16 %v33
  %v183 = vunpack.c.l.b16 %v34
  %v184 = vunpack.c.h.b16 %v34
  %v185 = vunpack.c.l.b16 %v35
  %v186 = vunpack.c.h.b16 %v35
  %v187 = vunpack.c.l.b16 %v36
  %v188 = vunpack.c.h.b16 %v36
  %v189 = vunpack.c.l.b16 %v37
  %v190 = vunpack.c.h.b16 %v37
  %v191 = vunpack.c.l.b16 %v38
  %v192 = vunpack.c.h.b16 %v38
  %v193 = vunpack.c.l.b16 %v39
  %v194 = vunpack.c.h.b16 %v39
  %v195 = vunpack.c.l.b16 %v40
  %v196 = vunpack.c.h.b16 %v40
  %v197 = vunpack.c.l.b16 %v41
  %v198 = vunpack.c.h.b16 %v41
  %v199 = vunpack.c.l.b16 %v42
  %v200 = vunpack.c.h.b16 %v42
  %v201 = vunpack.c.l.b16 %v43
  %v202 = vunpack.c.h.b16 %v43
  %v203 = vunpack.c.l.b16 %v44
  %v204 = vunpack.c.h.b16 %v44
  %v205 = vunpack.c.l.b16 %v45
  %v206 = vunpack.c.h.b16 %v45
  %v207 = vunpack.c.l.b16 %v46
  %v208 = vunpack.c.h.b16 %v46
  %v209 = vunpack.c.l.b16 %v47
  %v210 = vunpack.c.h.b16 %v47
  %v211 = vunpack.c.l.b16 %v48
  %v212 = vunpack.c.h.b16 %v48
  %v213 = vunpack.c.l.b16 %v49
  %v214 = vunpack.c.h.b16 %v49
  %v215 = vunpack.c.l.b16 %v50
  %v216 = vunpack.c.h.b16 %v50
  %v217 = vunpack.c.l.b16 %v51
  %v218 = vunpack.c.h.b16 %v51
  %v219 = vunpack.c.l.b16 %v52
  %v220 = vunpack.c.h.b16 %v52
  %v221 = vunpack.c.l.b16 %v53
  %v222 = vunpack.c.h.b16 %v53
  %v223 = vunpack.c.l.b16 %v54
  %v224 = vunpack.c.h.b16 %v54
  %v225 = vunpack.c.l.b16 %v55
  %v226 = vunpack.c.h.b16 %v55
  %v227 = vunpack.c.l.b16 %v56
  %v228 = vunpack.c.h.b16 %v56
  %v229 = vunpack.c.l.b16 %v57
  %v230 = vunpack.c.h.b16 %v57
  %v231 = vunpack.c.l.b16 %v58
  %v232 = vunpack.c.h.b16 %v58
  %v233 = vunpack.c.l.b16 %v59
  %v234 = vunpack.c.h.b16 %v59
  %v235 = vunpack.c.l.b16 %v60
  %v236 = vunpack.c.h.b16 %v60
  %v237 = vunpack.c.l.b16 %v61
  %v238 = vunpack.c.h.b16 %v61
  %v239 = vunpack.c.l.b16 %v62
  %v240 = vunpack.c.h.b16 %v62
  %v241 = vunpack.c.l.b16 %v63
  %v242 = vunpack.c.h.b16 %v63
  %v243 = vunpack.c.l.b16 %v64
  %v244 = vunpack.c.h.b16 %v64
  %v245 = vunpack.c.l.b16 %v65
  %v246 = vunpack.c.h.b16 %v65
  %v247 = vunpack.c.l.b16 %v66
  %v248 = vunpack.c.h.b16 %v66
  %v249 = vunpack.c.l.b16 %v67
  %v250 = vunpack.c.h.b16 %v67
  %v251 = vunpack.c.l.b16 %v68
  %v252 = vunpack.c.h.b16 %v68
  %v253 = vunpack.c.l.b16 %v69
  %v254 = vunpack.c.h.b16 %v69
  %v255 = vunpack.c.l.b16 %v70
  %v256 = vunpack.c.h.b16 %v70
  %v257 = vunpack.c.l.b16 %v71
  %v258 = vunpack.c.h.b16 %v71
  %v259 = vunpack.c.l.b16 %v72
  %v260 = vunpack.c.h.b16 %v72
  %v261 = vunpack.c.l.b16 %v73
  %v262 = vunpack.c.h.b16 %v73
  %v263 = vunpack.c.l.b16 %v74
  %v264 = vunpack.c.h.b16 %v74
  %v265 = vunpack.c.l.b16 %v75
  %v266 = vunpack.c.h.b16 %v75
  %v267 = vunpack.c.l.b16 %v76
  %v268 = vunpack.c.h.b16 %v76
  %v269 = vpack.c.b16 %v149, %v141
  %v270 = vpack.c.b16 %v150, %v142
  %v271 = vpack.c.b16 %v151, %v143
  %v272 = vpack.c.b16 %v152, %v144
  %v273 = vpack.c.b16 %v153, %v145
  %v274 = vpack.c.b16 %v154, %v146
  %v275 = vpack.c.b16 %v155, %v147
  %v276 = vpack.c.b16 %v156, %v148
  %v277 = vpack.c.b16 %v165, %v157
  %v278 = vpack.c.b16 %v166, %v158
  %v279 = vpack.c.b16 %v167, %v159
  %v280 = vpack.c.b16 %v168, %v160
  %v281 = vpack.c.b16 %v169, %v161
  %v282 = vpack.c.b16 %v170, %v162
  %v283 = vpack.c.b16 %v171, %v163
  %v284 = vpack.c.b16 %v172, %v164
  %v285 = vpack.c.b16 %v181, %v173
  %v286 = vpack.c.b16 %v182, %v174
  %v287 = vpack.c.b16 %v183, %v175
  %v288 = vpack.c.b16 %v184, %v176
  %v289 = vpack.c.b16 %v185, %v177
  %v290 = vpack.c.b16 %v186, %v178
  %v291 = vpack.c.b16 %v187, %v179
  %v292 = vpack.c.b16 %v188, %v180
  %v293 = vpack.c.b16 %v197, %v189
  %v294 = vpack.c.b16 %v198, %v190
  %v295 = vpack.c.b16 %v199, %v191
  %v296 = vpack.c.b16 %v200, %v192
  %v297 = vpack.c.b16 %v201, %v193
  %v298 = vpack.c.b16 %v202, %v194
  %v299 = vpack.c.b16 %v203, %v195
  %v300 = vpack.c.b16 %v204, %v196
  %v301 = vpack.c.b16 %v213, %v205
  %v302 = vpack.c.b16 %v214, %v206
  %v303 = vpack.c.b16 %v215, %v207
  %v304 = vpack.c.b16 %v216, %v208
  %v305 = vpack.c.b16 %v217, %v209
  %v306 = vpack.c.b16 %v218, %v210
  %v307 = vpack.c.b16 %v219, %v211
  %v308 = vpack.c.b16 %v220, %v212
  %v309 = vpack.c.b16 %v229, %v221
  %v310 = vpack.c.b16 %v230, %v222
  %v311 = vpack.c.b16 %v231, %v223
  %v312 = vpack.c.b16 %v232, %v224
  %v313 = vpack.c.b16 %v233, %v225
  %v314 = vpack.c.b16 %v234, %v226
  %v315 = vpack.c.b16 %v235, %v227
  %v316 = vpack.c.b16 %v236, %v228
  %v317 = vpack.c.b16 %v245, %v237
  %v318 = vpack.c.b16 %v246, %v238
  %v319 = vpack.c.b16 %v247, %v239
  %v320 = vpack.c.b16 %v248, %v240
  %v321 = vpack.c.b16 %v249, %v241
  %v322 = vpack.c.b16 %v250, %v242
  %v323 = vpack.c.b16 %v251, %v243
  %v324 = vpack.c.b16 %v252, %v244
  %v325 = vpack.c.b16 %v261, %v253
  %v326 = vpack.c.b16 %v262, %v254
  %v327 = vpack.c.b16 %v263, %v255
  %v328 = vpack.c.b16 %v264, %v256
  %v329 = vpack.c.b16 %v265, %v257
  %v330 = vpack.c.b16 %v266, %v258
  %v331 = vpack.c.b16 %v267, %v259
  %v332 = vpack.c.b16 %v268, %v260
  %397 = vmatprep.subr.bf16.mxu0 %v270
  %398 = vmatpush1.bf16.msra.mxu0 %v269
  %399 = vmatprep.subr.bf16.mxu0 %v278
  %400 = vmatpush1.bf16.msra.mxu0 %v277
  %401 = vmatprep.subr.bf16.mxu0 %v286
  %402 = vmatpush1.bf16.msra.mxu0 %v285
  %403 = vmatprep.subr.bf16.mxu0 %v294
  %404 = vmatpush1.bf16.msra.mxu0 %v293
  %405 = vmatprep.subr.bf16.mxu0 %v302
  %406 = vmatpush1.bf16.msra.mxu0 %v301
  %407 = vmatprep.subr.bf16.mxu0 %v310
  %408 = vmatpush1.bf16.msra.mxu0 %v309
  %409 = vmatprep.subr.bf16.mxu0 %v318
  %410 = vmatpush1.bf16.msra.mxu0 %v317
  %411 = vmatprep.subr.bf16.mxu0 %v326
  %412 = vmatpush1.bf16.msra.mxu0 %v325
  %413 = vmatprep.subr.bf16.mxu0 0
  %414 = vmatpush1.bf16.msra.mxu0 0
  %415 = vmatprep.subr.bf16.mxu0 0
  %416 = vmatpush1.bf16.msra.mxu0 0
  %417 = vmatprep.subr.bf16.mxu0 0
  %418 = vmatpush1.bf16.msra.mxu0 0
  %419 = vmatprep.subr.bf16.mxu0 0
  %420 = vmatpush1.bf16.msra.mxu0 0
  %421 = vmatprep.subr.bf16.mxu0 0
  %422 = vmatpush1.bf16.msra.mxu0 0
  %423 = vmatprep.subr.bf16.mxu0 0
  %424 = vmatpush1.bf16.msra.mxu0 0
  %425 = vmatprep.subr.bf16.mxu0 0
  %426 = vmatpush1.bf16.msra.mxu0 0
  %427 = vmatprep.subr.bf16.mxu0 0
  %428 = vmatpush1.bf16.msra.mxu0 0
  %429 = vmatprep.mubr.bf16.mxu0 0
  %430 = vmatmul.mubr.bf16.gmra.mrb[0].mxu0 %v12
  %v431 = vpop.f32.mrb[0].mxu0
  %v432 = vadd.f32 0.0, %v431
  %v433 = vpop.f32.mrb[0].mxu0
  %v434 = vadd.f32 0.0, %v433
  %v435 = vpop.f32.mrb[0].mxu0
  %v436 = vpop.f32.mrb[0].mxu0
  %437 = vdwg.mxu0
  %438 = vmatprep.subr.bf16.mxu0 %v272
  %439 = vmatpush1.bf16.msra.mxu0 %v271
  %440 = vmatprep.subr.bf16.mxu0 %v280
  %441 = vmatpush1.bf16.msra.mxu0 %v279
  %442 = vmatprep.subr.bf16.mxu0 %v288
  %443 = vmatpush1.bf16.msra.mxu0 %v287
  %444 = vmatprep.subr.bf16.mxu0 %v296
  %445 = vmatpush1.bf16.msra.mxu0 %v295
  %446 = vmatprep.subr.bf16.mxu0 %v304
  %447 = vmatpush1.bf16.msra.mxu0 %v303
  %448 = vmatprep.subr.bf16.mxu0 %v312
  %449 = vmatpush1.bf16.msra.mxu0 %v311
  %450 = vmatprep.subr.bf16.mxu0 %v320
  %451 = vmatpush1.bf16.msra.mxu0 %v319
  %452 = vmatprep.subr.bf16.mxu0 %v328
  %453 = vmatpush1.bf16.msra.mxu0 %v327
  %454 = vmatprep.subr.bf16.mxu0 0
  %455 = vmatpush1.bf16.msra.mxu0 0
  %456 = vmatprep.subr.bf16.mxu0 0
  %457 = vmatpush1.bf16.msra.mxu0 0
  %458 = vmatprep.subr.bf16.mxu0 0
  %459 = vmatpush1.bf16.msra.mxu0 0
  %460 = vmatprep.subr.bf16.mxu0 0
  %461 = vmatpush1.bf16.msra.mxu0 0
  %462 = vmatprep.subr.bf16.mxu0 0
  %463 = vmatpush1.bf16.msra.mxu0 0
  %464 = vmatprep.subr.bf16.mxu0 0
  %465 = vmatpush1.bf16.msra.mxu0 0
  %466 = vmatprep.subr.bf16.mxu0 0
  %467 = vmatpush1.bf16.msra.mxu0 0
  %468 = vmatprep.subr.bf16.mxu0 0
  %469 = vmatpush1.bf16.msra.mxu0 0
  %470 = vmatprep.mubr.bf16.mxu0 0
  %471 = vmatmul.mubr.bf16.gmra.mrb[0].mxu0 %v12
  %v472 = vpop.f32.mrb[0].mxu0
  %v473 = vadd.f32 0.0, %v472
  %v474 = vpop.f32.mrb[0].mxu0
  %v475 = vadd.f32 0.0, %v474
  %v476 = vpop.f32.mrb[0].mxu0
  %v477 = vpop.f32.mrb[0].mxu0
  %478 = vdwg.mxu0
  %479 = vmatprep.subr.bf16.mxu0 %v274
  %480 = vmatpush1.bf16.msra.mxu0 %v273
  %481 = vmatprep.subr.bf16.mxu0 %v282
  %482 = vmatpush1.bf16.msra.mxu0 %v281
  %483 = vmatprep.subr.bf16.mxu0 %v290
  %484 = vmatpush1.bf16.msra.mxu0 %v289
  %485 = vmatprep.subr.bf16.mxu0 %v298
  %486 = vmatpush1.bf16.msra.mxu0 %v297
  %487 = vmatprep.subr.bf16.mxu0 %v306
  %488 = vmatpush1.bf16.msra.mxu0 %v305
  %489 = vmatprep.subr.bf16.mxu0 %v314
  %490 = vmatpush1.bf16.msra.mxu0 %v313
  %491 = vmatprep.subr.bf16.mxu0 %v322
  %492 = vmatpush1.bf16.msra.mxu0 %v321
  %493 = vmatprep.subr.bf16.mxu0 %v330
  %494 = vmatpush1.bf16.msra.mxu0 %v329
  %495 = vmatprep.subr.bf16.mxu0 0
  %496 = vmatpush1.bf16.msra.mxu0 0
  %497 = vmatprep.subr.bf16.mxu0 0
  %498 = vmatpush1.bf16.msra.mxu0 0
  %499 = vmatprep.subr.bf16.mxu0 0
  %500 = vmatpush1.bf16.msra.mxu0 0
  %501 = vmatprep.subr.bf16.mxu0 0
  %502 = vmatpush1.bf16.msra.mxu0 0
  %503 = vmatprep.subr.bf16.mxu0 0
  %504 = vmatpush1.bf16.msra.mxu0 0
  %505 = vmatprep.subr.bf16.mxu0 0
  %506 = vmatpush1.bf16.msra.mxu0 0
  %507 = vmatprep.subr.bf16.mxu0 0
  %508 = vmatpush1.bf16.msra.mxu0 0
  %509 = vmatprep.subr.bf16.mxu0 0
  %510 = vmatpush1.bf16.msra.mxu0 0
  %511 = vmatprep.mubr.bf16.mxu0 0
  %512 = vmatmul.mubr.bf16.gmra.mrb[0].mxu0 %v12
  %v513 = vpop.f32.mrb[0].mxu0
  %v514 = vadd.f32 0.0, %v513
  %v515 = vpop.f32.mrb[0].mxu0
  %v516 = vadd.f32 0.0, %v515
  %v517 = vpop.f32.mrb[0].mxu0
  %v518 = vpop.f32.mrb[0].mxu0
  %519 = vdwg.mxu0
  %520 = vmatprep.subr.bf16.mxu0 %v276
  %521 = vmatpush1.bf16.msra.mxu0 %v275
  %522 = vmatprep.subr.bf16.mxu0 %v284
  %523 = vmatpush1.bf16.msra.mxu0 %v283
  %524 = vmatprep.subr.bf16.mxu0 %v292
  %525 = vmatpush1.bf16.msra.mxu0 %v291
  %526 = vmatprep.subr.bf16.mxu0 %v300
  %527 = vmatpush1.bf16.msra.mxu0 %v299
  %528 = vmatprep.subr.bf16.mxu0 %v308
  %529 = vmatpush1.bf16.msra.mxu0 %v307
  %530 = vmatprep.subr.bf16.mxu0 %v316
  %531 = vmatpush1.bf16.msra.mxu0 %v315
  %532 = vmatprep.subr.bf16.mxu0 %v324
  %533 = vmatpush1.bf16.msra.mxu0 %v323
  %534 = vmatprep.subr.bf16.mxu0 %v332
  %535 = vmatpush1.bf16.msra.mxu0 %v331
  %536 = vmatprep.subr.bf16.mxu0 0
  %537 = vmatpush1.bf16.msra.mxu0 0
  %538 = vmatprep.subr.bf16.mxu0 0
  %539 = vmatpush1.bf16.msra.mxu0 0
  %540 = vmatprep.subr.bf16.mxu0 0
  %541 = vmatpush1.bf16.msra.mxu0 0
  %542 = vmatprep.subr.bf16.mxu0 0
  %543 = vmatpush1.bf16.msra.mxu0 0
  %544 = vmatprep.subr.bf16.mxu0 0
  %545 = vmatpush1.bf16.msra.mxu0 0
  %546 = vmatprep.subr.bf16.mxu0 0
  %547 = vmatpush1.bf16.msra.mxu0 0
  %548 = vmatprep.subr.bf16.mxu0 0
  %549 = vmatpush1.bf16.msra.mxu0 0
  %550 = vmatprep.subr.bf16.mxu0 0
  %551 = vmatpush1.bf16.msra.mxu0 0
  %552 = vmatprep.mubr.bf16.mxu0 0
  %553 = vmatmul.mubr.bf16.gmra.mrb[0].mxu0 %v12
  %v554 = vpop.f32.mrb[0].mxu0
  %v555 = vadd.f32 0.0, %v554
  %v556 = vpop.f32.mrb[0].mxu0
  %v557 = vadd.f32 0.0, %v556
  %v558 = vpop.f32.mrb[0].mxu0
  %v559 = vpop.f32.mrb[0].mxu0
  %560 = vdwg.mxu0
  %v561 = vpack.c.bf16 %v432, %v432
  %v562 = vpack.c.bf16 %v434, %v434
  %v563 = vpack.c.bf16 %v473, %v473
  %v564 = vpack.c.bf16 %v475, %v475
  %v565 = vpack.c.bf16 %v514, %v514
  %v566 = vpack.c.bf16 %v516, %v516
  %v567 = vpack.c.bf16 %v555, %v555
  %v568 = vpack.c.bf16 %v557, %v557
  %v577 = vunpack.c.l.b16 %v561
  %v578 = vunpack.c.l.b16 %v562
  %v579 = vunpack.c.l.b16 %v563
  %v580 = vunpack.c.l.b16 %v564
  %v581 = vunpack.c.l.b16 %v565
  %v582 = vunpack.c.l.b16 %v566
  %v583 = vunpack.c.l.b16 %v567
  %v584 = vunpack.c.l.b16 %v568
  %v585 = vpack.c.b16 %v578, %v577
  %v586 = vpack.c.b16 %v580, %v579
  %v587 = vpack.c.b16 %v582, %v581
  %v588 = vpack.c.b16 %v584, %v583
  %593 = vst [vmem:[%s2] sm:$0xff] %v585
  %594 = vst [vmem:[%s2 + $0x8] sm:$0xff] %v586
  %595 = vst [vmem:[%s2 + $0x10] sm:$0xff] %v587
  %596 = vst [vmem:[%s2 + $0x18] sm:$0xff] %v588
  // Predicated region
  $region10: #{generator_forward.6} parent=0 // pred_check
    _
  $region11: #{generator_forward.6} parent=0 // pred_check_branch
    %598 = sbr.rel (0) target = $region13
  $region12: #{generator_forward.6} parent=0 // pred_region
    _
  $region13: #{generator_forward.6} parent=0 // pred_fallthru
    _
  // Predicated region
  $region14: #{generator_forward.6} parent=0 // pred_check
    _
  $region15: #{generator_forward.6} parent=0 // pred_check_branch
    %600 = sbr.rel (0) target = $region17
  $region16: #{generator_forward.6} parent=0 // pred_region
    _
  $region17: #{generator_forward.6} parent=0 // pred_fallthru
    _

// kernel: generator_forward.8
$region0: #{generator_forward.8}
  #allocation0 [shape = 'u32[]', space=smem, size = 0x4, offset = 0x4, fixed_abs, tag = 'smem constant byte address 0x4 - core index']
  #allocation1 [shape = 'u32[144,128]{1,0:T(1,128)}', space=vmem, size = 0x12000, scoped, tag = 'internal scratch']
  %s0 = inlined_call_operand.vmem [shape: bf16[128,128], index: 0, kind: input, shape index: {}]
  %s1 = inlined_call_operand.vmem [shape: bf16[128,256], index: 1, kind: input, shape index: {}]
  %s2 = inlined_call_operand.vmem [shape: bf16[128,256], index: 2, kind: output, shape index: {}]
  %s3 = sld [smem:[#allocation0]]
  $region18: #{generator_forward.8} parent=0
    _
  %s5 = ssub.s32 1, %s3
  %s6 = scalar_select 0, %s5, %s3
  // Predicated region
  $region2: #{generator_forward.8} parent=0 // pred_check
    _
  $region3: #{generator_forward.8} parent=0 // pred_check_branch
    %8 = sbr.rel (0) target = $region5
  $region4: #{generator_forward.8} parent=0 // pred_region
    _
  $region5: #{generator_forward.8} parent=0 // pred_fallthru
    _
  // Predicated region
  $region6: #{generator_forward.8} parent=0 // pred_check
    _
  $region7: #{generator_forward.8} parent=0 // pred_check_branch
    %10 = sbr.rel (0) target = $region9
  $region8: #{generator_forward.8} parent=0 // pred_region
    _
  $region9: #{generator_forward.8} parent=0 // pred_fallthru
    _
  %v12 = vld [vmem:[%s0] sm:$0xf]
  %v13 = vld [vmem:[%s0 + $0x4] sm:$0xf]
  %v14 = vld [vmem:[%s0 + $0x8] sm:$0xf]
  %v15 = vld [vmem:[%s0 + $0xc] sm:$0xf]
  %v16 = vld [vmem:[%s0 + $0x10] sm:$0xf]
  %v17 = vld [vmem:[%s0 + $0x14] sm:$0xf]
  %v18 = vld [vmem:[%s0 + $0x18] sm:$0xf]
  %v19 = vld [vmem:[%s0 + $0x1c] sm:$0xf]
  %v20 = vld [vmem:[%s0 + $0x20] sm:$0xf]
  %v21 = vld [vmem:[%s0 + $0x24] sm:$0xf]
  %v22 = vld [vmem:[%s0 + $0x28] sm:$0xf]
  %v23 = vld [vmem:[%s0 + $0x2c] sm:$0xf]
  %v24 = vld [vmem:[%s0 + $0x30] sm:$0xf]
  %v25 = vld [vmem:[%s0 + $0x34] sm:$0xf]
  %v26 = vld [vmem:[%s0 + $0x38] sm:$0xf]
  %v27 = vld [vmem:[%s0 + $0x3c] sm:$0xf]
  %v28 = vld [vmem:[%s1] sm:$0xff]
  %v29 = vld [vmem:[%s1 + $0x8] sm:$0xff]
  %v30 = vld [vmem:[%s1 + $0x10] sm:$0xff]
  %v31 = vld [vmem:[%s1 + $0x18] sm:$0xff]
  %v32 = vld [vmem:[%s1 + $0x20] sm:$0xff]
  %v33 = vld [vmem:[%s1 + $0x28] sm:$0xff]
  %v34 = vld [vmem:[%s1 + $0x30] sm:$0xff]
  %v35 = vld [vmem:[%s1 + $0x38] sm:$0xff]
  %v36 = vld [vmem:[%s1 + $0x40] sm:$0xff]
  %v37 = vld [vmem:[%s1 + $0x48] sm:$0xff]
  %v38 = vld [vmem:[%s1 + $0x50] sm:$0xff]
  %v39 = vld [vmem:[%s1 + $0x58] sm:$0xff]
  %v40 = vld [vmem:[%s1 + $0x60] sm:$0xff]
  %v41 = vld [vmem:[%s1 + $0x68] sm:$0xff]
  %v42 = vld [vmem:[%s1 + $0x70] sm:$0xff]
  %v43 = vld [vmem:[%s1 + $0x78] sm:$0xff]
  %v60 = vunpack.c.l.b16 %v12
  %v61 = vunpack.c.l.b16 %v13
  %v62 = vunpack.c.l.b16 %v14
  %v63 = vunpack.c.l.b16 %v15
  %v64 = vunpack.c.l.b16 %v16
  %v65 = vunpack.c.l.b16 %v17
  %v66 = vunpack.c.l.b16 %v18
  %v67 = vunpack.c.l.b16 %v19
  %v68 = vunpack.c.l.b16 %v20
  %v69 = vunpack.c.l.b16 %v21
  %v70 = vunpack.c.l.b16 %v22
  %v71 = vunpack.c.l.b16 %v23
  %v72 = vunpack.c.l.b16 %v24
  %v73 = vunpack.c.l.b16 %v25
  %v74 = vunpack.c.l.b16 %v26
  %v75 = vunpack.c.l.b16 %v27
  %v76 = vpack.c.b16 %v61, %v60
  %v77 = vpack.c.b16 %v63, %v62
  %v78 = vpack.c.b16 %v65, %v64
  %v79 = vpack.c.b16 %v67, %v66
  %v80 = vpack.c.b16 %v69, %v68
  %v81 = vpack.c.b16 %v71, %v70
  %v82 = vpack.c.b16 %v73, %v72
  %v83 = vpack.c.b16 %v75, %v74
  %v108 = vunpack.c.l.b16 %v28
  %v109 = vunpack.c.h.b16 %v28
  %v110 = vunpack.c.l.b16 %v29
  %v111 = vunpack.c.h.b16 %v29
  %v112 = vunpack.c.l.b16 %v30
  %v113 = vunpack.c.h.b16 %v30
  %v114 = vunpack.c.l.b16 %v31
  %v115 = vunpack.c.h.b16 %v31
  %v116 = vunpack.c.l.b16 %v32
  %v117 = vunpack.c.h.b16 %v32
  %v118 = vunpack.c.l.b16 %v33
  %v119 = vunpack.c.h.b16 %v33
  %v120 = vunpack.c.l.b16 %v34
  %v121 = vunpack.c.h.b16 %v34
  %v122 = vunpack.c.l.b16 %v35
  %v123 = vunpack.c.h.b16 %v35
  %v124 = vunpack.c.l.b16 %v36
  %v125 = vunpack.c.h.b16 %v36
  %v126 = vunpack.c.l.b16 %v37
  %v127 = vunpack.c.h.b16 %v37
  %v128 = vunpack.c.l.b16 %v38
  %v129 = vunpack.c.h.b16 %v38
  %v130 = vunpack.c.l.b16 %v39
  %v131 = vunpack.c.h.b16 %v39
  %v132 = vunpack.c.l.b16 %v40
  %v133 = vunpack.c.h.b16 %v40
  %v134 = vunpack.c.l.b16 %v41
  %v135 = vunpack.c.h.b16 %v41
  %v136 = vunpack.c.l.b16 %v42
  %v137 = vunpack.c.h.b16 %v42
  %v138 = vunpack.c.l.b16 %v43
  %v139 = vunpack.c.h.b16 %v43
  %v140 = vpack.c.b16 %v110, %v108
  %v141 = vpack.c.b16 %v111, %v109
  %v142 = vpack.c.b16 %v114, %v112
  %v143 = vpack.c.b16 %v115, %v113
  %v144 = vpack.c.b16 %v118, %v116
  %v145 = vpack.c.b16 %v119, %v117
  %v146 = vpack.c.b16 %v122, %v120
  %v147 = vpack.c.b16 %v123, %v121
  %v148 = vpack.c.b16 %v126, %v124
  %v149 = vpack.c.b16 %v127, %v125
  %v150 = vpack.c.b16 %v130, %v128
  %v151 = vpack.c.b16 %v131, %v129
  %v152 = vpack.c.b16 %v134, %v132
  %v153 = vpack.c.b16 %v135, %v133
  %v154 = vpack.c.b16 %v138, %v136
  %v155 = vpack.c.b16 %v139, %v137
  %172 = vmatprep.subr.bf16.mxu0 %v141
  %173 = vmatpush1.bf16.msra.mxu0 %v140
  %174 = vmatprep.subr.bf16.mxu0 %v143
  %175 = vmatpush1.bf16.msra.mxu0 %v142
  %176 = vmatprep.subr.bf16.mxu0 %v145
  %177 = vmatpush1.bf16.msra.mxu0 %v144
  %178 = vmatprep.subr.bf16.mxu0 %v147
  %179 = vmatpush1.bf16.msra.mxu0 %v146
  %180 = vmatprep.subr.bf16.mxu0 %v149
  %181 = vmatpush1.bf16.msra.mxu0 %v148
  %182 = vmatprep.subr.bf16.mxu0 %v151
  %183 = vmatpush1.bf16.msra.mxu0 %v150
  %184 = vmatprep.subr.bf16.mxu0 %v153
  %185 = vmatpush1.bf16.msra.mxu0 %v152
  %186 = vmatprep.subr.bf16.mxu0 %v155
  %187 = vmatpush1.bf16.msra.mxu0 %v154
  %188 = vmatprep.subr.bf16.mxu0 0
  %189 = vmatpush1.bf16.msra.mxu0 0
  %190 = vmatprep.subr.bf16.mxu0 0
  %191 = vmatpush1.bf16.msra.mxu0 0
  %192 = vmatprep.subr.bf16.mxu0 0
  %193 = vmatpush1.bf16.msra.mxu0 0
  %194 = vmatprep.subr.bf16.mxu0 0
  %195 = vmatpush1.bf16.msra.mxu0 0
  %196 = vmatprep.subr.bf16.mxu0 0
  %197 = vmatpush1.bf16.msra.mxu0 0
  %198 = vmatprep.subr.bf16.mxu0 0
  %199 = vmatpush1.bf16.msra.mxu0 0
  %200 = vmatprep.subr.bf16.mxu0 0
  %201 = vmatpush1.bf16.msra.mxu0 0
  %202 = vmatprep.subr.bf16.mxu0 0
  %203 = vmatpush1.bf16.msra.mxu0 0
  %204 = vmatprep.mubr.bf16.mxu0 0
  %205 = vmatmul.mubr.bf16.gmra.mrb[0].mxu0 %v76
  %v206 = vpop.f32.mrb[0].mxu0
  %v207 = vadd.f32 0.0, %v206
  %v208 = vpop.f32.mrb[0].mxu0
  %v209 = vadd.f32 0.0, %v208
  %v210 = vpop.f32.mrb[0].mxu0
  %v211 = vadd.f32 0.0, %v210
  %v212 = vpop.f32.mrb[0].mxu0
  %v213 = vadd.f32 0.0, %v212
  %214 = vmatprep.mubr.bf16.mxu0 0
  %215 = vmatmul.mubr.bf16.gmra.mrb[0].mxu0 %v77
  %v216 = vpop.f32.mrb[0].mxu0
  %v217 = vadd.f32 0.0, %v216
  %v218 = vpop.f32.mrb[0].mxu0
  %v219 = vadd.f32 0.0, %v218
  %v220 = vpop.f32.mrb[0].mxu0
  %v221 = vadd.f32 0.0, %v220
  %v222 = vpop.f32.mrb[0].mxu0
  %v223 = vadd.f32 0.0, %v222
  %224 = vmatprep.mubr.bf16.mxu0 0
  %225 = vmatmul.mubr.bf16.gmra.mrb[0].mxu0 %v78
  %v226 = vpop.f32.mrb[0].mxu0
  %v227 = vadd.f32 0.0, %v226
  %v228 = vpop.f32.mrb[0].mxu0
  %v229 = vadd.f32 0.0, %v228
  %v230 = vpop.f32.mrb[0].mxu0
  %v231 = vadd.f32 0.0, %v230
  %v232 = vpop.f32.mrb[0].mxu0
  %v233 = vadd.f32 0.0, %v232
  %234 = vmatprep.mubr.bf16.mxu0 0
  %235 = vmatmul.mubr.bf16.gmra.mrb[0].mxu0 %v79
  %v236 = vpop.f32.mrb[0].mxu0
  %v237 = vadd.f32 0.0, %v236
  %v238 = vpop.f32.mrb[0].mxu0
  %v239 = vadd.f32 0.0, %v238
  %v240 = vpop.f32.mrb[0].mxu0
  %v241 = vadd.f32 0.0, %v240
  %v242 = vpop.f32.mrb[0].mxu0
  %v243 = vadd.f32 0.0, %v242
  %244 = vmatprep.mubr.bf16.mxu0 0
  %245 = vmatmul.mubr.bf16.gmra.mrb[0].mxu0 %v80
  %v246 = vpop.f32.mrb[0].mxu0
  %v247 = vadd.f32 0.0, %v246
  %v248 = vpop.f32.mrb[0].mxu0
  %v249 = vadd.f32 0.0, %v248
  %v250 = vpop.f32.mrb[0].mxu0
  %v251 = vadd.f32 0.0, %v250
  %v252 = vpop.f32.mrb[0].mxu0
  %v253 = vadd.f32 0.0, %v252
  %254 = vmatprep.mubr.bf16.mxu0 0
  %255 = vmatmul.mubr.bf16.gmra.mrb[0].mxu0 %v81
  %v256 = vpop.f32.mrb[0].mxu0
  %v257 = vadd.f32 0.0, %v256
  %v258 = vpop.f32.mrb[0].mxu0
  %v259 = vadd.f32 0.0, %v258
  %v260 = vpop.f32.mrb[0].mxu0
  %v261 = vadd.f32 0.0, %v260
  %v262 = vpop.f32.mrb[0].mxu0
  %v263 = vadd.f32 0.0, %v262
  %264 = vmatprep.mubr.bf16.mxu0 0
  %265 = vmatmul.mubr.bf16.gmra.mrb[0].mxu0 %v82
  %v266 = vpop.f32.mrb[0].mxu0
  %v267 = vadd.f32 0.0, %v266
  %v268 = vpop.f32.mrb[0].mxu0
  %v269 = vadd.f32 0.0, %v268
  %v270 = vpop.f32.mrb[0].mxu0
  %v271 = vadd.f32 0.0, %v270
  %v272 = vpop.f32.mrb[0].mxu0
  %v273 = vadd.f32 0.0, %v272
  %274 = vmatprep.mubr.bf16.mxu0 0
  %275 = vmatmul.mubr.bf16.gmra.mrb[0].mxu0 %v83
  %v276 = vpop.f32.mrb[0].mxu0
  %v277 = vadd.f32 0.0, %v276
  %v278 = vpop.f32.mrb[0].mxu0
  %v279 = vadd.f32 0.0, %v278
  %v280 = vpop.f32.mrb[0].mxu0
  %v281 = vadd.f32 0.0, %v280
  %v282 = vpop.f32.mrb[0].mxu0
  %v283 = vadd.f32 0.0, %v282
  %284 = vdwg.mxu0
  %v285 = vpack.c.bf16 %v211, %v207
  %v286 = vpack.c.bf16 %v213, %v209
  %v287 = vpack.c.bf16 %v221, %v217
  %v288 = vpack.c.bf16 %v223, %v219
  %v289 = vpack.c.bf16 %v231, %v227
  %v290 = vpack.c.bf16 %v233, %v229
  %v291 = vpack.c.bf16 %v241, %v237
  %v292 = vpack.c.bf16 %v243, %v239
  %v293 = vpack.c.bf16 %v251, %v247
  %v294 = vpack.c.bf16 %v253, %v249
  %v295 = vpack.c.bf16 %v261, %v257
  %v296 = vpack.c.bf16 %v263, %v259
  %v297 = vpack.c.bf16 %v271, %v267
  %v298 = vpack.c.bf16 %v273, %v269
  %v299 = vpack.c.bf16 %v281, %v277
  %v300 = vpack.c.bf16 %v283, %v279
  %v317 = vunpack.c.l.b16 %v285
  %v318 = vunpack.c.l.b16 %v286
  %v319 = vunpack.c.h.b16 %v285
  %v320 = vunpack.c.h.b16 %v286
  %v321 = vunpack.c.l.b16 %v287
  %v322 = vunpack.c.l.b16 %v288
  %v323 = vunpack.c.h.b16 %v287
  %v324 = vunpack.c.h.b16 %v288
  %v325 = vunpack.c.l.b16 %v289
  %v326 = vunpack.c.l.b16 %v290
  %v327 = vunpack.c.h.b16 %v289
  %v328 = vunpack.c.h.b16 %v290
  %v329 = vunpack.c.l.b16 %v291
  %v330 = vunpack.c.l.b16 %v292
  %v331 = vunpack.c.h.b16 %v291
  %v332 = vunpack.c.h.b16 %v292
  %v333 = vunpack.c.l.b16 %v293
  %v334 = vunpack.c.l.b16 %v294
  %v335 = vunpack.c.h.b16 %v293
  %v336 = vunpack.c.h.b16 %v294
  %v337 = vunpack.c.l.b16 %v295
  %v338 = vunpack.c.l.b16 %v296
  %v339 = vunpack.c.h.b16 %v295
  %v340 = vunpack.c.h.b16 %v296
  %v341 = vunpack.c.l.b16 %v297
  %v342 = vunpack.c.l.b16 %v298
  %v343 = vunpack.c.h.b16 %v297
  %v344 = vunpack.c.h.b16 %v298
  %v345 = vunpack.c.l.b16 %v299
  %v346 = vunpack.c.l.b16 %v300
  %v347 = vunpack.c.h.b16 %v299
  %v348 = vunpack.c.h.b16 %v300
  %v349 = vpack.c.b16 %v318, %v317
  %v350 = vpack.c.b16 %v320, %v319
  %v351 = vpack.c.b16 %v322, %v321
  %v352 = vpack.c.b16 %v324, %v323
  %v353 = vpack.c.b16 %v326, %v325
  %v354 = vpack.c.b16 %v328, %v327
  %v355 = vpack.c.b16 %v330, %v329
  %v356 = vpack.c.b16 %v332, %v331
  %v357 = vpack.c.b16 %v334, %v333
  %v358 = vpack.c.b16 %v336, %v335
  %v359 = vpack.c.b16 %v338, %v337
  %v360 = vpack.c.b16 %v340, %v339
  %v361 = vpack.c.b16 %v342, %v341
  %v362 = vpack.c.b16 %v344, %v343
  %v363 = vpack.c.b16 %v346, %v345
  %v364 = vpack.c.b16 %v348, %v347
  %381 = vst [vmem:[%s2] sm:$0xff] %v349
  %382 = vst [vmem:[%s2 + $0x8] sm:$0xff] %v350
  %383 = vst [vmem:[%s2 + $0x10] sm:$0xff] %v351
  %384 = vst [vmem:[%s2 + $0x18] sm:$0xff] %v352
  %385 = vst [vmem:[%s2 + $0x20] sm:$0xff] %v353
  %386 = vst [vmem:[%s2 + $0x28] sm:$0xff] %v354
  %387 = vst [vmem:[%s2 + $0x30] sm:$0xff] %v355
  %388 = vst [vmem:[%s2 + $0x38] sm:$0xff] %v356
  %389 = vst [vmem:[%s2 + $0x40] sm:$0xff] %v357
  %390 = vst [vmem:[%s2 + $0x48] sm:$0xff] %v358
  %391 = vst [vmem:[%s2 + $0x50] sm:$0xff] %v359
  %392 = vst [vmem:[%s2 + $0x58] sm:$0xff] %v360
  %393 = vst [vmem:[%s2 + $0x60] sm:$0xff] %v361
  %394 = vst [vmem:[%s2 + $0x68] sm:$0xff] %v362
  %395 = vst [vmem:[%s2 + $0x70] sm:$0xff] %v363
  %396 = vst [vmem:[%s2 + $0x78] sm:$0xff] %v364
  // Predicated region
  $region10: #{generator_forward.8} parent=0 // pred_check
    _
  $region11: #{generator_forward.8} parent=0 // pred_check_branch
    %398 = sbr.rel (0) target = $region13
  $region12: #{generator_forward.8} parent=0 // pred_region
    _
  $region13: #{generator_forward.8} parent=0 // pred_fallthru
    _
  // Predicated region
  $region14: #{generator_forward.8} parent=0 // pred_check
    _
  $region15: #{generator_forward.8} parent=0 // pred_check_branch
    %400 = sbr.rel (0) target = $region17
  $region16: #{generator_forward.8} parent=0 // pred_region
    _
  $region17: #{generator_forward.8} parent=0 // pred_fallthru
    _

// kernel: generator_forward.9
$region0: #{generator_forward.9}
  #allocation0 [shape = 'u32[]', space=smem, size = 0x4, offset = 0x4, fixed_abs, tag = 'smem constant byte address 0x4 - core index']
  #allocation1 [shape = 'u32[144,128]{1,0:T(1,128)}', space=vmem, size = 0x12000, scoped, tag = 'internal scratch']
  %s0 = inlined_call_operand.vmem [shape: bf16[512,128], index: 0, kind: input, shape index: {}]
  %s1 = inlined_call_operand.vmem [shape: bf16[128,128], index: 1, kind: input, shape index: {}]
  %s2 = inlined_call_operand.vmem [shape: bf16[512,128], index: 2, kind: output, shape index: {}]
  %s3 = sld [smem:[#allocation0]]
  $region18: #{generator_forward.9} parent=0
    _
  %s5 = ssub.s32 1, %s3
  %s6 = scalar_select 0, %s5, %s3
  // Predicated region
  $region2: #{generator_forward.9} parent=0 // pred_check
    _
  $region3: #{generator_forward.9} parent=0 // pred_check_branch
    %8 = sbr.rel (0) target = $region5
  $region4: #{generator_forward.9} parent=0 // pred_region
    _
  $region5: #{generator_forward.9} parent=0 // pred_fallthru
    _
  // Predicated region
  $region6: #{generator_forward.9} parent=0 // pred_check
    _
  $region7: #{generator_forward.9} parent=0 // pred_check_branch
    %10 = sbr.rel (0) target = $region9
  $region8: #{generator_forward.9} parent=0 // pred_region
    _
  $region9: #{generator_forward.9} parent=0 // pred_fallthru
    _
  %v12 = vld [vmem:[%s0] sm:$0xf]
  %v13 = vld [vmem:[%s0 + $0x4] sm:$0xf]
  %v14 = vld [vmem:[%s0 + $0x8] sm:$0xf]
  %v15 = vld [vmem:[%s0 + $0xc] sm:$0xf]
  %v16 = vld [vmem:[%s0 + $0x10] sm:$0xf]
  %v17 = vld [vmem:[%s0 + $0x14] sm:$0xf]
  %v18 = vld [vmem:[%s0 + $0x18] sm:$0xf]
  %v19 = vld [vmem:[%s0 + $0x1c] sm:$0xf]
  %v20 = vld [vmem:[%s0 + $0x20] sm:$0xf]
  %v21 = vld [vmem:[%s0 + $0x24] sm:$0xf]
  %v22 = vld [vmem:[%s0 + $0x28] sm:$0xf]
  %v23 = vld [vmem:[%s0 + $0x2c] sm:$0xf]
  %v24 = vld [vmem:[%s0 + $0x30] sm:$0xf]
  %v25 = vld [vmem:[%s0 + $0x34] sm:$0xf]
  %v26 = vld [vmem:[%s0 + $0x38] sm:$0xf]
  %v27 = vld [vmem:[%s0 + $0x3c] sm:$0xf]
  %v28 = vld [vmem:[%s0 + $0x40] sm:$0xf]
  %v29 = vld [vmem:[%s0 + $0x44] sm:$0xf]
  %v30 = vld [vmem:[%s0 + $0x48] sm:$0xf]
  %v31 = vld [vmem:[%s0 + $0x4c] sm:$0xf]
  %v32 = vld [vmem:[%s0 + $0x50] sm:$0xf]
  %v33 = vld [vmem:[%s0 + $0x54] sm:$0xf]
  %v34 = vld [vmem:[%s0 + $0x58] sm:$0xf]
  %v35 = vld [vmem:[%s0 + $0x5c] sm:$0xf]
  %v36 = vld [vmem:[%s0 + $0x60] sm:$0xf]
  %v37 = vld [vmem:[%s0 + $0x64] sm:$0xf]
  %v38 = vld [vmem:[%s0 + $0x68] sm:$0xf]
  %v39 = vld [vmem:[%s0 + $0x6c] sm:$0xf]
  %v40 = vld [vmem:[%s0 + $0x70] sm:$0xf]
  %v41 = vld [vmem:[%s0 + $0x74] sm:$0xf]
  %v42 = vld [vmem:[%s0 + $0x78] sm:$0xf]
  %v43 = vld [vmem:[%s0 + $0x7c] sm:$0xf]
  %v44 = vld [vmem:[%s0 + $0x80] sm:$0xf]
  %v45 = vld [vmem:[%s0 + $0x84] sm:$0xf]
  %v46 = vld [vmem:[%s0 + $0x88] sm:$0xf]
  %v47 = vld [vmem:[%s0 + $0x8c] sm:$0xf]
  %v48 = vld [vmem:[%s0 + $0x90] sm:$0xf]
  %v49 = vld [vmem:[%s0 + $0x94] sm:$0xf]
  %v50 = vld [vmem:[%s0 + $0x98] sm:$0xf]
  %v51 = vld [vmem:[%s0 + $0x9c] sm:$0xf]
  %v52 = vld [vmem:[%s0 + $0xa0] sm:$0xf]
  %v53 = vld [vmem:[%s0 + $0xa4] sm:$0xf]
  %v54 = vld [vmem:[%s0 + $0xa8] sm:$0xf]
  %v55 = vld [vmem:[%s0 + $0xac] sm:$0xf]
  %v56 = vld [vmem:[%s0 + $0xb0] sm:$0xf]
  %v57 = vld [vmem:[%s0 + $0xb4] sm:$0xf]
  %v58 = vld [vmem:[%s0 + $0xb8] sm:$0xf]
  %v59 = vld [vmem:[%s0 + $0xbc] sm:$0xf]
  %v60 = vld [vmem:[%s0 + $0xc0] sm:$0xf]
  %v61 = vld [vmem:[%s0 + $0xc4] sm:$0xf]
  %v62 = vld [vmem:[%s0 + $0xc8] sm:$0xf]
  %v63 = vld [vmem:[%s0 + $0xcc] sm:$0xf]
  %v64 = vld [vmem:[%s0 + $0xd0] sm:$0xf]
  %v65 = vld [vmem:[%s0 + $0xd4] sm:$0xf]
  %v66 = vld [vmem:[%s0 + $0xd8] sm:$0xf]
  %v67 = vld [vmem:[%s0 + $0xdc] sm:$0xf]
  %v68 = vld [vmem:[%s0 + $0xe0] sm:$0xf]
  %v69 = vld [vmem:[%s0 + $0xe4] sm:$0xf]
  %v70 = vld [vmem:[%s0 + $0xe8] sm:$0xf]
  %v71 = vld [vmem:[%s0 + $0xec] sm:$0xf]
  %v72 = vld [vmem:[%s0 + $0xf0] sm:$0xf]
  %v73 = vld [vmem:[%s0 + $0xf4] sm:$0xf]
  %v74 = vld [vmem:[%s0 + $0xf8] sm:$0xf]
  %v75 = vld [vmem:[%s0 + $0xfc] sm:$0xf]
  %v76 = vld [vmem:[%s1] sm:$0xf]
  %v77 = vld [vmem:[%s1 + $0x4] sm:$0xf]
  %v78 = vld [vmem:[%s1 + $0x8] sm:$0xf]
  %v79 = vld [vmem:[%s1 + $0xc] sm:$0xf]
  %v80 = vld [vmem:[%s1 + $0x10] sm:$0xf]
  %v81 = vld [vmem:[%s1 + $0x14] sm:$0xf]
  %v82 = vld [vmem:[%s1 + $0x18] sm:$0xf]
  %v83 = vld [vmem:[%s1 + $0x1c] sm:$0xf]
  %v84 = vld [vmem:[%s1 + $0x20] sm:$0xf]
  %v85 = vld [vmem:[%s1 + $0x24] sm:$0xf]
  %v86 = vld [vmem:[%s1 + $0x28] sm:$0xf]
  %v87 = vld [vmem:[%s1 + $0x2c] sm:$0xf]
  %v88 = vld [vmem:[%s1 + $0x30] sm:$0xf]
  %v89 = vld [vmem:[%s1 + $0x34] sm:$0xf]
  %v90 = vld [vmem:[%s1 + $0x38] sm:$0xf]
  %v91 = vld [vmem:[%s1 + $0x3c] sm:$0xf]
  %v156 = vunpack.c.l.b16 %v12
  %v157 = vunpack.c.l.b16 %v13
  %v158 = vunpack.c.l.b16 %v14
  %v159 = vunpack.c.l.b16 %v15
  %v160 = vunpack.c.l.b16 %v16
  %v161 = vunpack.c.l.b16 %v17
  %v162 = vunpack.c.l.b16 %v18
  %v163 = vunpack.c.l.b16 %v19
  %v164 = vunpack.c.l.b16 %v20
  %v165 = vunpack.c.l.b16 %v21
  %v166 = vunpack.c.l.b16 %v22
  %v167 = vunpack.c.l.b16 %v23
  %v168 = vunpack.c.l.b16 %v24
  %v169 = vunpack.c.l.b16 %v25
  %v170 = vunpack.c.l.b16 %v26
  %v171 = vunpack.c.l.b16 %v27
  %v172 = vunpack.c.l.b16 %v28
  %v173 = vunpack.c.l.b16 %v29
  %v174 = vunpack.c.l.b16 %v30
  %v175 = vunpack.c.l.b16 %v31
  %v176 = vunpack.c.l.b16 %v32
  %v177 = vunpack.c.l.b16 %v33
  %v178 = vunpack.c.l.b16 %v34
  %v179 = vunpack.c.l.b16 %v35
  %v180 = vunpack.c.l.b16 %v36
  %v181 = vunpack.c.l.b16 %v37
  %v182 = vunpack.c.l.b16 %v38
  %v183 = vunpack.c.l.b16 %v39
  %v184 = vunpack.c.l.b16 %v40
  %v185 = vunpack.c.l.b16 %v41
  %v186 = vunpack.c.l.b16 %v42
  %v187 = vunpack.c.l.b16 %v43
  %v188 = vunpack.c.l.b16 %v44
  %v189 = vunpack.c.l.b16 %v45
  %v190 = vunpack.c.l.b16 %v46
  %v191 = vunpack.c.l.b16 %v47
  %v192 = vunpack.c.l.b16 %v48
  %v193 = vunpack.c.l.b16 %v49
  %v194 = vunpack.c.l.b16 %v50
  %v195 = vunpack.c.l.b16 %v51
  %v196 = vunpack.c.l.b16 %v52
  %v197 = vunpack.c.l.b16 %v53
  %v198 = vunpack.c.l.b16 %v54
  %v199 = vunpack.c.l.b16 %v55
  %v200 = vunpack.c.l.b16 %v56
  %v201 = vunpack.c.l.b16 %v57
  %v202 = vunpack.c.l.b16 %v58
  %v203 = vunpack.c.l.b16 %v59
  %v204 = vunpack.c.l.b16 %v60
  %v205 = vunpack.c.l.b16 %v61
  %v206 = vunpack.c.l.b16 %v62
  %v207 = vunpack.c.l.b16 %v63
  %v208 = vunpack.c.l.b16 %v64
  %v209 = vunpack.c.l.b16 %v65
  %v210 = vunpack.c.l.b16 %v66
  %v211 = vunpack.c.l.b16 %v67
  %v212 = vunpack.c.l.b16 %v68
  %v213 = vunpack.c.l.b16 %v69
  %v214 = vunpack.c.l.b16 %v70
  %v215 = vunpack.c.l.b16 %v71
  %v216 = vunpack.c.l.b16 %v72
  %v217 = vunpack.c.l.b16 %v73
  %v218 = vunpack.c.l.b16 %v74
  %v219 = vunpack.c.l.b16 %v75
  %v220 = vpack.c.b16 %v157, %v156
  %v221 = vpack.c.b16 %v159, %v158
  %v222 = vpack.c.b16 %v161, %v160
  %v223 = vpack.c.b16 %v163, %v162
  %v224 = vpack.c.b16 %v165, %v164
  %v225 = vpack.c.b16 %v167, %v166
  %v226 = vpack.c.b16 %v169, %v168
  %v227 = vpack.c.b16 %v171, %v170
  %v228 = vpack.c.b16 %v173, %v172
  %v229 = vpack.c.b16 %v175, %v174
  %v230 = vpack.c.b16 %v177, %v176
  %v231 = vpack.c.b16 %v179, %v178
  %v232 = vpack.c.b16 %v181, %v180
  %v233 = vpack.c.b16 %v183, %v182
  %v234 = vpack.c.b16 %v185, %v184
  %v235 = vpack.c.b16 %v187, %v186
  %v236 = vpack.c.b16 %v189, %v188
  %v237 = vpack.c.b16 %v191, %v190
  %v238 = vpack.c.b16 %v193, %v192
  %v239 = vpack.c.b16 %v195, %v194
  %v240 = vpack.c.b16 %v197, %v196
  %v241 = vpack.c.b16 %v199, %v198
  %v242 = vpack.c.b16 %v201, %v200
  %v243 = vpack.c.b16 %v203, %v202
  %v244 = vpack.c.b16 %v205, %v204
  %v245 = vpack.c.b16 %v207, %v206
  %v246 = vpack.c.b16 %v209, %v208
  %v247 = vpack.c.b16 %v211, %v210
  %v248 = vpack.c.b16 %v213, %v212
  %v249 = vpack.c.b16 %v215, %v214
  %v250 = vpack.c.b16 %v217, %v216
  %v251 = vpack.c.b16 %v219, %v218
  %v300 = vunpack.c.l.b16 %v76
  %v301 = vunpack.c.l.b16 %v77
  %v302 = vunpack.c.l.b16 %v78
  %v303 = vunpack.c.l.b16 %v79
  %v304 = vunpack.c.l.b16 %v80
  %v305 = vunpack.c.l.b16 %v81
  %v306 = vunpack.c.l.b16 %v82
  %v307 = vunpack.c.l.b16 %v83
  %v308 = vunpack.c.l.b16 %v84
  %v309 = vunpack.c.l.b16 %v85
  %v310 = vunpack.c.l.b16 %v86
  %v311 = vunpack.c.l.b16 %v87
  %v312 = vunpack.c.l.b16 %v88
  %v313 = vunpack.c.l.b16 %v89
  %v314 = vunpack.c.l.b16 %v90
  %v315 = vunpack.c.l.b16 %v91
  %v316 = vpack.c.b16 %v301, %v300
  %v317 = vpack.c.b16 %v303, %v302
  %v318 = vpack.c.b16 %v305, %v304
  %v319 = vpack.c.b16 %v307, %v306
  %v320 = vpack.c.b16 %v309, %v308
  %v321 = vpack.c.b16 %v311, %v310
  %v322 = vpack.c.b16 %v313, %v312
  %v323 = vpack.c.b16 %v315, %v314
  %332 = vmatprep.subr.bf16.mxu0 0
  %333 = vmatpush1.bf16.msra.mxu0 %v316
  %334 = vmatprep.subr.bf16.mxu0 0
  %335 = vmatpush1.bf16.msra.mxu0 %v317
  %336 = vmatprep.subr.bf16.mxu0 0
  %337 = vmatpush1.bf16.msra.mxu0 %v318
  %338 = vmatprep.subr.bf16.mxu0 0
  %339 = vmatpush1.bf16.msra.mxu0 %v319
  %340 = vmatprep.subr.bf16.mxu0 0
  %341 = vmatpush1.bf16.msra.mxu0 %v320
  %342 = vmatprep.subr.bf16.mxu0 0
  %343 = vmatpush1.bf16.msra.mxu0 %v321
  %344 = vmatprep.subr.bf16.mxu0 0
  %345 = vmatpush1.bf16.msra.mxu0 %v322
  %346 = vmatprep.subr.bf16.mxu0 0
  %347 = vmatpush1.bf16.msra.mxu0 %v323
  %348 = vmatprep.subr.bf16.mxu0 0
  %349 = vmatpush1.bf16.msra.mxu0 0
  %350 = vmatprep.subr.bf16.mxu0 0
  %351 = vmatpush1.bf16.msra.mxu0 0
  %352 = vmatprep.subr.bf16.mxu0 0
  %353 = vmatpush1.bf16.msra.mxu0 0
  %354 = vmatprep.subr.bf16.mxu0 0
  %355 = vmatpush1.bf16.msra.mxu0 0
  %356 = vmatprep.subr.bf16.mxu0 0
  %357 = vmatpush1.bf16.msra.mxu0 0
  %358 = vmatprep.subr.bf16.mxu0 0
  %359 = vmatpush1.bf16.msra.mxu0 0
  %360 = vmatprep.subr.bf16.mxu0 0
  %361 = vmatpush1.bf16.msra.mxu0 0
  %362 = vmatprep.subr.bf16.mxu0 0
  %363 = vmatpush1.bf16.msra.mxu0 0
  %364 = vmatprep.mubr.bf16.mxu0 0
  %365 = vmatmul.mubr.bf16.gmra.mrb[0].mxu0 %v220
  %v366 = vpop.f32.mrb[0].mxu0
  %v367 = vadd.f32 0.0, %v366
  %v368 = vpop.f32.mrb[0].mxu0
  %v369 = vpop.f32.mrb[0].mxu0
  %v370 = vadd.f32 0.0, %v369
  %v371 = vpop.f32.mrb[0].mxu0
  %372 = vmatprep.mubr.bf16.mxu0 0
  %373 = vmatmul.mubr.bf16.gmra.mrb[0].mxu0 %v221
  %v374 = vpop.f32.mrb[0].mxu0
  %v375 = vadd.f32 0.0, %v374
  %v376 = vpop.f32.mrb[0].mxu0
  %v377 = vpop.f32.mrb[0].mxu0
  %v378 = vadd.f32 0.0, %v377
  %v379 = vpop.f32.mrb[0].mxu0
  %380 = vmatprep.mubr.bf16.mxu0 0
  %381 = vmatmul.mubr.bf16.gmra.mrb[0].mxu0 %v222
  %v382 = vpop.f32.mrb[0].mxu0
  %v383 = vadd.f32 0.0, %v382
  %v384 = vpop.f32.mrb[0].mxu0
  %v385 = vpop.f32.mrb[0].mxu0
  %v386 = vadd.f32 0.0, %v385
  %v387 = vpop.f32.mrb[0].mxu0
  %388 = vmatprep.mubr.bf16.mxu0 0
  %389 = vmatmul.mubr.bf16.gmra.mrb[0].mxu0 %v223
  %v390 = vpop.f32.mrb[0].mxu0
  %v391 = vadd.f32 0.0, %v390
  %v392 = vpop.f32.mrb[0].mxu0
  %v393 = vpop.f32.mrb[0].mxu0
  %v394 = vadd.f32 0.0, %v393
  %v395 = vpop.f32.mrb[0].mxu0
  %396 = vmatprep.mubr.bf16.mxu0 0
  %397 = vmatmul.mubr.bf16.gmra.mrb[0].mxu0 %v224
  %v398 = vpop.f32.mrb[0].mxu0
  %v399 = vadd.f32 0.0, %v398
  %v400 = vpop.f32.mrb[0].mxu0
  %v401 = vpop.f32.mrb[0].mxu0
  %v402 = vadd.f32 0.0, %v401
  %v403 = vpop.f32.mrb[0].mxu0
  %404 = vmatprep.mubr.bf16.mxu0 0
  %405 = vmatmul.mubr.bf16.gmra.mrb[0].mxu0 %v225
  %v406 = vpop.f32.mrb[0].mxu0
  %v407 = vadd.f32 0.0, %v406
  %v408 = vpop.f32.mrb[0].mxu0
  %v409 = vpop.f32.mrb[0].mxu0
  %v410 = vadd.f32 0.0, %v409
  %v411 = vpop.f32.mrb[0].mxu0
  %412 = vmatprep.mubr.bf16.mxu0 0
  %413 = vmatmul.mubr.bf16.gmra.mrb[0].mxu0 %v226
  %v414 = vpop.f32.mrb[0].mxu0
  %v415 = vadd.f32 0.0, %v414
  %v416 = vpop.f32.mrb[0].mxu0
  %v417 = vpop.f32.mrb[0].mxu0
  %v418 = vadd.f32 0.0, %v417
  %v419 = vpop.f32.mrb[0].mxu0
  %420 = vmatprep.mubr.bf16.mxu0 0
  %421 = vmatmul.mubr.bf16.gmra.mrb[0].mxu0 %v227
  %v422 = vpop.f32.mrb[0].mxu0
  %v423 = vadd.f32 0.0, %v422
  %v424 = vpop.f32.mrb[0].mxu0
  %v425 = vpop.f32.mrb[0].mxu0
  %v426 = vadd.f32 0.0, %v425
  %v427 = vpop.f32.mrb[0].mxu0
  %428 = vmatprep.mubr.bf16.mxu0 0
  %429 = vmatmul.mubr.bf16.gmra.mrb[0].mxu0 %v228
  %v430 = vpop.f32.mrb[0].mxu0
  %v431 = vadd.f32 0.0, %v430
  %v432 = vpop.f32.mrb[0].mxu0
  %v433 = vpop.f32.mrb[0].mxu0
  %v434 = vadd.f32 0.0, %v433
  %v435 = vpop.f32.mrb[0].mxu0
  %436 = vmatprep.mubr.bf16.mxu0 0
  %437 = vmatmul.mubr.bf16.gmra.mrb[0].mxu0 %v229
  %v438 = vpop.f32.mrb[0].mxu0
  %v439 = vadd.f32 0.0, %v438
  %v440 = vpop.f32.mrb[0].mxu0
  %v441 = vpop.f32.mrb[0].mxu0
  %v442 = vadd.f32 0.0, %v441
  %v443 = vpop.f32.mrb[0].mxu0
  %444 = vmatprep.mubr.bf16.mxu0 0
  %445 = vmatmul.mubr.bf16.gmra.mrb[0].mxu0 %v230
  %v446 = vpop.f32.mrb[0].mxu0
  %v447 = vadd.f32 0.0, %v446
  %v448 = vpop.f32.mrb[0].mxu0
  %v449 = vpop.f32.mrb[0].mxu0
  %v450 = vadd.f32 0.0, %v449
  %v451 = vpop.f32.mrb[0].mxu0
  %452 = vmatprep.mubr.bf16.mxu0 0
  %453 = vmatmul.mubr.bf16.gmra.mrb[0].mxu0 %v231
  %v454 = vpop.f32.mrb[0].mxu0
  %v455 = vadd.f32 0.0, %v454
  %v456 = vpop.f32.mrb[0].mxu0
  %v457 = vpop.f32.mrb[0].mxu0
  %v458 = vadd.f32 0.0, %v457
  %v459 = vpop.f32.mrb[0].mxu0
  %460 = vmatprep.mubr.bf16.mxu0 0
  %461 = vmatmul.mubr.bf16.gmra.mrb[0].mxu0 %v232
  %v462 = vpop.f32.mrb[0].mxu0
  %v463 = vadd.f32 0.0, %v462
  %v464 = vpop.f32.mrb[0].mxu0
  %v465 = vpop.f32.mrb[0].mxu0
  %v466 = vadd.f32 0.0, %v465
  %v467 = vpop.f32.mrb[0].mxu0
  %468 = vmatprep.mubr.bf16.mxu0 0
  %469 = vmatmul.mubr.bf16.gmra.mrb[0].mxu0 %v233
  %v470 = vpop.f32.mrb[0].mxu0
  %v471 = vadd.f32 0.0, %v470
  %v472 = vpop.f32.mrb[0].mxu0
  %v473 = vpop.f32.mrb[0].mxu0
  %v474 = vadd.f32 0.0, %v473
  %v475 = vpop.f32.mrb[0].mxu0
  %476 = vmatprep.mubr.bf16.mxu0 0
  %477 = vmatmul.mubr.bf16.gmra.mrb[0].mxu0 %v234
  %v478 = vpop.f32.mrb[0].mxu0
  %v479 = vadd.f32 0.0, %v478
  %v480 = vpop.f32.mrb[0].mxu0
  %v481 = vpop.f32.mrb[0].mxu0
  %v482 = vadd.f32 0.0, %v481
  %v483 = vpop.f32.mrb[0].mxu0
  %484 = vmatprep.mubr.bf16.mxu0 0
  %485 = vmatmul.mubr.bf16.gmra.mrb[0].mxu0 %v235
  %v486 = vpop.f32.mrb[0].mxu0
  %v487 = vadd.f32 0.0, %v486
  %v488 = vpop.f32.mrb[0].mxu0
  %v489 = vpop.f32.mrb[0].mxu0
  %v490 = vadd.f32 0.0, %v489
  %v491 = vpop.f32.mrb[0].mxu0
  %492 = vmatprep.mubr.bf16.mxu0 0
  %493 = vmatmul.mubr.bf16.gmra.mrb[0].mxu0 %v236
  %v494 = vpop.f32.mrb[0].mxu0
  %v495 = vadd.f32 0.0, %v494
  %v496 = vpop.f32.mrb[0].mxu0
  %v497 = vpop.f32.mrb[0].mxu0
  %v498 = vadd.f32 0.0, %v497
  %v499 = vpop.f32.mrb[0].mxu0
  %500 = vmatprep.mubr.bf16.mxu0 0
  %501 = vmatmul.mubr.bf16.gmra.mrb[0].mxu0 %v237
  %v502 = vpop.f32.mrb[0].mxu0
  %v503 = vadd.f32 0.0, %v502
  %v504 = vpop.f32.mrb[0].mxu0
  %v505 = vpop.f32.mrb[0].mxu0
  %v506 = vadd.f32 0.0, %v505
  %v507 = vpop.f32.mrb[0].mxu0
  %508 = vmatprep.mubr.bf16.mxu0 0
  %509 = vmatmul.mubr.bf16.gmra.mrb[0].mxu0 %v238
  %v510 = vpop.f32.mrb[0].mxu0
  %v511 = vadd.f32 0.0, %v510
  %v512 = vpop.f32.mrb[0].mxu0
  %v513 = vpop.f32.mrb[0].mxu0
  %v514 = vadd.f32 0.0, %v513
  %v515 = vpop.f32.mrb[0].mxu0
  %516 = vmatprep.mubr.bf16.mxu0 0
  %517 = vmatmul.mubr.bf16.gmra.mrb[0].mxu0 %v239
  %v518 = vpop.f32.mrb[0].mxu0
  %v519 = vadd.f32 0.0, %v518
  %v520 = vpop.f32.mrb[0].mxu0
  %v521 = vpop.f32.mrb[0].mxu0
  %v522 = vadd.f32 0.0, %v521
  %v523 = vpop.f32.mrb[0].mxu0
  %524 = vmatprep.mubr.bf16.mxu0 0
  %525 = vmatmul.mubr.bf16.gmra.mrb[0].mxu0 %v240
  %v526 = vpop.f32.mrb[0].mxu0
  %v527 = vadd.f32 0.0, %v526
  %v528 = vpop.f32.mrb[0].mxu0
  %v529 = vpop.f32.mrb[0].mxu0
  %v530 = vadd.f32 0.0, %v529
  %v531 = vpop.f32.mrb[0].mxu0
  %532 = vmatprep.mubr.bf16.mxu0 0
  %533 = vmatmul.mubr.bf16.gmra.mrb[0].mxu0 %v241
  %v534 = vpop.f32.mrb[0].mxu0
  %v535 = vadd.f32 0.0, %v534
  %v536 = vpop.f32.mrb[0].mxu0
  %v537 = vpop.f32.mrb[0].mxu0
  %v538 = vadd.f32 0.0, %v537
  %v539 = vpop.f32.mrb[0].mxu0
  %540 = vmatprep.mubr.bf16.mxu0 0
  %541 = vmatmul.mubr.bf16.gmra.mrb[0].mxu0 %v242
  %v542 = vpop.f32.mrb[0].mxu0
  %v543 = vadd.f32 0.0, %v542
  %v544 = vpop.f32.mrb[0].mxu0
  %v545 = vpop.f32.mrb[0].mxu0
  %v546 = vadd.f32 0.0, %v545
  %v547 = vpop.f32.mrb[0].mxu0
  %548 = vmatprep.mubr.bf16.mxu0 0
  %549 = vmatmul.mubr.bf16.gmra.mrb[0].mxu0 %v243
  %v550 = vpop.f32.mrb[0].mxu0
  %v551 = vadd.f32 0.0, %v550
  %v552 = vpop.f32.mrb[0].mxu0
  %v553 = vpop.f32.mrb[0].mxu0
  %v554 = vadd.f32 0.0, %v553
  %v555 = vpop.f32.mrb[0].mxu0
  %556 = vmatprep.mubr.bf16.mxu0 0
  %557 = vmatmul.mubr.bf16.gmra.mrb[0].mxu0 %v244
  %v558 = vpop.f32.mrb[0].mxu0
  %v559 = vadd.f32 0.0, %v558
  %v560 = vpop.f32.mrb[0].mxu0
  %v561 = vpop.f32.mrb[0].mxu0
  %v562 = vadd.f32 0.0, %v561
  %v563 = vpop.f32.mrb[0].mxu0
  %564 = vmatprep.mubr.bf16.mxu0 0
  %565 = vmatmul.mubr.bf16.gmra.mrb[0].mxu0 %v245
  %v566 = vpop.f32.mrb[0].mxu0
  %v567 = vadd.f32 0.0, %v566
  %v568 = vpop.f32.mrb[0].mxu0
  %v569 = vpop.f32.mrb[0].mxu0
  %v570 = vadd.f32 0.0, %v569
  %v571 = vpop.f32.mrb[0].mxu0
  %572 = vmatprep.mubr.bf16.mxu0 0
  %573 = vmatmul.mubr.bf16.gmra.mrb[0].mxu0 %v246
  %v574 = vpop.f32.mrb[0].mxu0
  %v575 = vadd.f32 0.0, %v574
  %v576 = vpop.f32.mrb[0].mxu0
  %v577 = vpop.f32.mrb[0].mxu0
  %v578 = vadd.f32 0.0, %v577
  %v579 = vpop.f32.mrb[0].mxu0
  %580 = vmatprep.mubr.bf16.mxu0 0
  %581 = vmatmul.mubr.bf16.gmra.mrb[0].mxu0 %v247
  %v582 = vpop.f32.mrb[0].mxu0
  %v583 = vadd.f32 0.0, %v582
  %v584 = vpop.f32.mrb[0].mxu0
  %v585 = vpop.f32.mrb[0].mxu0
  %v586 = vadd.f32 0.0, %v585
  %v587 = vpop.f32.mrb[0].mxu0
  %588 = vmatprep.mubr.bf16.mxu0 0
  %589 = vmatmul.mubr.bf16.gmra.mrb[0].mxu0 %v248
  %v590 = vpop.f32.mrb[0].mxu0
  %v591 = vadd.f32 0.0, %v590
  %v592 = vpop.f32.mrb[0].mxu0
  %v593 = vpop.f32.mrb[0].mxu0
  %v594 = vadd.f32 0.0, %v593
  %v595 = vpop.f32.mrb[0].mxu0
  %596 = vmatprep.mubr.bf16.mxu0 0
  %597 = vmatmul.mubr.bf16.gmra.mrb[0].mxu0 %v249
  %v598 = vpop.f32.mrb[0].mxu0
  %v599 = vadd.f32 0.0, %v598
  %v600 = vpop.f32.mrb[0].mxu0
  %v601 = vpop.f32.mrb[0].mxu0
  %v602 = vadd.f32 0.0, %v601
  %v603 = vpop.f32.mrb[0].mxu0
  %604 = vmatprep.mubr.bf16.mxu0 0
  %605 = vmatmul.mubr.bf16.gmra.mrb[0].mxu0 %v250
  %v606 = vpop.f32.mrb[0].mxu0
  %v607 = vadd.f32 0.0, %v606
  %v608 = vpop.f32.mrb[0].mxu0
  %v609 = vpop.f32.mrb[0].mxu0
  %v610 = vadd.f32 0.0, %v609
  %v611 = vpop.f32.mrb[0].mxu0
  %612 = vmatprep.mubr.bf16.mxu0 0
  %613 = vmatmul.mubr.bf16.gmra.mrb[0].mxu0 %v251
  %v614 = vpop.f32.mrb[0].mxu0
  %v615 = vadd.f32 0.0, %v614
  %v616 = vpop.f32.mrb[0].mxu0
  %v617 = vpop.f32.mrb[0].mxu0
  %v618 = vadd.f32 0.0, %v617
  %v619 = vpop.f32.mrb[0].mxu0
  %620 = vdwg.mxu0
  %v621 = vpack.c.bf16 %v370, %v367
  %v622 = vpack.c.bf16 %v378, %v375
  %v623 = vpack.c.bf16 %v386, %v383
  %v624 = vpack.c.bf16 %v394, %v391
  %v625 = vpack.c.bf16 %v402, %v399
  %v626 = vpack.c.bf16 %v410, %v407
  %v627 = vpack.c.bf16 %v418, %v415
  %v628 = vpack.c.bf16 %v426, %v423
  %v629 = vpack.c.bf16 %v434, %v431
  %v630 = vpack.c.bf16 %v442, %v439
  %v631 = vpack.c.bf16 %v450, %v447
  %v632 = vpack.c.bf16 %v458, %v455
  %v633 = vpack.c.bf16 %v466, %v463
  %v634 = vpack.c.bf16 %v474, %v471
  %v635 = vpack.c.bf16 %v482, %v479
  %v636 = vpack.c.bf16 %v490, %v487
  %v637 = vpack.c.bf16 %v498, %v495
  %v638 = vpack.c.bf16 %v506, %v503
  %v639 = vpack.c.bf16 %v514, %v511
  %v640 = vpack.c.bf16 %v522, %v519
  %v641 = vpack.c.bf16 %v530, %v527
  %v642 = vpack.c.bf16 %v538, %v535
  %v643 = vpack.c.bf16 %v546, %v543
  %v644 = vpack.c.bf16 %v554, %v551
  %v645 = vpack.c.bf16 %v562, %v559
  %v646 = vpack.c.bf16 %v570, %v567
  %v647 = vpack.c.bf16 %v578, %v575
  %v648 = vpack.c.bf16 %v586, %v583
  %v649 = vpack.c.bf16 %v594, %v591
  %v650 = vpack.c.bf16 %v602, %v599
  %v651 = vpack.c.bf16 %v610, %v607
  %v652 = vpack.c.bf16 %v618, %v615
  %v685 = vunpack.c.l.b16 %v621
  %v686 = vunpack.c.h.b16 %v621
  %v687 = vunpack.c.l.b16 %v622
  %v688 = vunpack.c.h.b16 %v622
  %v689 = vunpack.c.l.b16 %v623
  %v690 = vunpack.c.h.b16 %v623
  %v691 = vunpack.c.l.b16 %v624
  %v692 = vunpack.c.h.b16 %v624
  %v693 = vunpack.c.l.b16 %v625
  %v694 = vunpack.c.h.b16 %v625
  %v695 = vunpack.c.l.b16 %v626
  %v696 = vunpack.c.h.b16 %v626
  %v697 = vunpack.c.l.b16 %v627
  %v698 = vunpack.c.h.b16 %v627
  %v699 = vunpack.c.l.b16 %v628
  %v700 = vunpack.c.h.b16 %v628
  %v701 = vunpack.c.l.b16 %v629
  %v702 = vunpack.c.h.b16 %v629
  %v703 = vunpack.c.l.b16 %v630
  %v704 = vunpack.c.h.b16 %v630
  %v705 = vunpack.c.l.b16 %v631
  %v706 = vunpack.c.h.b16 %v631
  %v707 = vunpack.c.l.b16 %v632
  %v708 = vunpack.c.h.b16 %v632
  %v709 = vunpack.c.l.b16 %v633
  %v710 = vunpack.c.h.b16 %v633
  %v711 = vunpack.c.l.b16 %v634
  %v712 = vunpack.c.h.b16 %v634
  %v713 = vunpack.c.l.b16 %v635
  %v714 = vunpack.c.h.b16 %v635
  %v715 = vunpack.c.l.b16 %v636
  %v716 = vunpack.c.h.b16 %v636
  %v717 = vunpack.c.l.b16 %v637
  %v718 = vunpack.c.h.b16 %v637
  %v719 = vunpack.c.l.b16 %v638
  %v720 = vunpack.c.h.b16 %v638
  %v721 = vunpack.c.l.b16 %v639
  %v722 = vunpack.c.h.b16 %v639
  %v723 = vunpack.c.l.b16 %v640
  %v724 = vunpack.c.h.b16 %v640
  %v725 = vunpack.c.l.b16 %v641
  %v726 = vunpack.c.h.b16 %v641
  %v727 = vunpack.c.l.b16 %v642
  %v728 = vunpack.c.h.b16 %v642
  %v729 = vunpack.c.l.b16 %v643
  %v730 = vunpack.c.h.b16 %v643
  %v731 = vunpack.c.l.b16 %v644
  %v732 = vunpack.c.h.b16 %v644
  %v733 = vunpack.c.l.b16 %v645
  %v734 = vunpack.c.h.b16 %v645
  %v735 = vunpack.c.l.b16 %v646
  %v736 = vunpack.c.h.b16 %v646
  %v737 = vunpack.c.l.b16 %v647
  %v738 = vunpack.c.h.b16 %v647
  %v739 = vunpack.c.l.b16 %v648
  %v740 = vunpack.c.h.b16 %v648
  %v741 = vunpack.c.l.b16 %v649
  %v742 = vunpack.c.h.b16 %v649
  %v743 = vunpack.c.l.b16 %v650
  %v744 = vunpack.c.h.b16 %v650
  %v745 = vunpack.c.l.b16 %v651
  %v746 = vunpack.c.h.b16 %v651
  %v747 = vunpack.c.l.b16 %v652
  %v748 = vunpack.c.h.b16 %v652
  %v749 = vpack.c.b16 %v685, %v685
  %v750 = vpack.c.b16 %v686, %v686
  %v751 = vpack.c.b16 %v687, %v687
  %v752 = vpack.c.b16 %v688, %v688
  %v753 = vpack.c.b16 %v689, %v689
  %v754 = vpack.c.b16 %v690, %v690
  %v755 = vpack.c.b16 %v691, %v691
  %v756 = vpack.c.b16 %v692, %v692
  %v757 = vpack.c.b16 %v693, %v693
  %v758 = vpack.c.b16 %v694, %v694
  %v759 = vpack.c.b16 %v695, %v695
  %v760 = vpack.c.b16 %v696, %v696
  %v761 = vpack.c.b16 %v697, %v697
  %v762 = vpack.c.b16 %v698, %v698
  %v763 = vpack.c.b16 %v699, %v699
  %v764 = vpack.c.b16 %v700, %v700
  %v765 = vpack.c.b16 %v701, %v701
  %v766 = vpack.c.b16 %v702, %v702
  %v767 = vpack.c.b16 %v703, %v703
  %v768 = vpack.c.b16 %v704, %v704
  %v769 = vpack.c.b16 %v705, %v705
  %v770 = vpack.c.b16 %v706, %v706
  %v771 = vpack.c.b16 %v707, %v707
  %v772 = vpack.c.b16 %v708, %v708
  %v773 = vpack.c.b16 %v709, %v709
  %v774 = vpack.c.b16 %v710, %v710
  %v775 = vpack.c.b16 %v711, %v711
  %v776 = vpack.c.b16 %v712, %v712
  %v777 = vpack.c.b16 %v713, %v713
  %v778 = vpack.c.b16 %v714, %v714
  %v779 = vpack.c.b16 %v715, %v715
  %v780 = vpack.c.b16 %v716, %v716
  %v781 = vpack.c.b16 %v717, %v717
  %v782 = vpack.c.b16 %v718, %v718
  %v783 = vpack.c.b16 %v719, %v719
  %v784 = vpack.c.b16 %v720, %v720
  %v785 = vpack.c.b16 %v721, %v721
  %v786 = vpack.c.b16 %v722, %v722
  %v787 = vpack.c.b16 %v723, %v723
  %v788 = vpack.c.b16 %v724, %v724
  %v789 = vpack.c.b16 %v725, %v725
  %v790 = vpack.c.b16 %v726, %v726
  %v791 = vpack.c.b16 %v727, %v727
  %v792 = vpack.c.b16 %v728, %v728
  %v793 = vpack.c.b16 %v729, %v729
  %v794 = vpack.c.b16 %v730, %v730
  %v795 = vpack.c.b16 %v731, %v731
  %v796 = vpack.c.b16 %v732, %v732
  %v797 = vpack.c.b16 %v733, %v733
  %v798 = vpack.c.b16 %v734, %v734
  %v799 = vpack.c.b16 %v735, %v735
  %v800 = vpack.c.b16 %v736, %v736
  %v801 = vpack.c.b16 %v737, %v737
  %v802 = vpack.c.b16 %v738, %v738
  %v803 = vpack.c.b16 %v739, %v739
  %v804 = vpack.c.b16 %v740, %v740
  %v805 = vpack.c.b16 %v741, %v741
  %v806 = vpack.c.b16 %v742, %v742
  %v807 = vpack.c.b16 %v743, %v743
  %v808 = vpack.c.b16 %v744, %v744
  %v809 = vpack.c.b16 %v745, %v745
  %v810 = vpack.c.b16 %v746, %v746
  %v811 = vpack.c.b16 %v747, %v747
  %v812 = vpack.c.b16 %v748, %v748
  %877 = vst [vmem:[%s2] sm:$0xf] %v749
  %878 = vst [vmem:[%s2 + $0x4] sm:$0xf] %v750
  %879 = vst [vmem:[%s2 + $0x8] sm:$0xf] %v751
  %880 = vst [vmem:[%s2 + $0xc] sm:$0xf] %v752
  %881 = vst [vmem:[%s2 + $0x10] sm:$0xf] %v753
  %882 = vst [vmem:[%s2 + $0x14] sm:$0xf] %v754
  %883 = vst [vmem:[%s2 + $0x18] sm:$0xf] %v755
  %884 = vst [vmem:[%s2 + $0x1c] sm:$0xf] %v756
  %885 = vst [vmem:[%s2 + $0x20] sm:$0xf] %v757
  %886 = vst [vmem:[%s2 + $0x24] sm:$0xf] %v758
  %887 = vst [vmem:[%s2 + $0x28] sm:$0xf] %v759
  %888 = vst [vmem:[%s2 + $0x2c] sm:$0xf] %v760
  %889 = vst [vmem:[%s2 + $0x30] sm:$0xf] %v761
  %890 = vst [vmem:[%s2 + $0x34] sm:$0xf] %v762
  %891 = vst [vmem:[%s2 + $0x38] sm:$0xf] %v763
  %892 = vst [vmem:[%s2 + $0x3c] sm:$0xf] %v764
  %893 = vst [vmem:[%s2 + $0x40] sm:$0xf] %v765
  %894 = vst [vmem:[%s2 + $0x44] sm:$0xf] %v766
  %895 = vst [vmem:[%s2 + $0x48] sm:$0xf] %v767
  %896 = vst [vmem:[%s2 + $0x4c] sm:$0xf] %v768
  %897 = vst [vmem:[%s2 + $0x50] sm:$0xf] %v769
  %898 = vst [vmem:[%s2 + $0x54] sm:$0xf] %v770
  %899 = vst [vmem:[%s2 + $0x58] sm:$0xf] %v771
  %900 = vst [vmem:[%s2 + $0x5c] sm:$0xf] %v772
  %901 = vst [vmem:[%s2 + $0x60] sm:$0xf] %v773
  %902 = vst [vmem:[%s2 + $0x64] sm:$0xf] %v774
  %903 = vst [vmem:[%s2 + $0x68] sm:$0xf] %v775
  %904 = vst [vmem:[%s2 + $0x6c] sm:$0xf] %v776
  %905 = vst [vmem:[%s2 + $0x70] sm:$0xf] %v777
  %906 = vst [vmem:[%s2 + $0x74] sm:$0xf] %v778
  %907 = vst [vmem:[%s2 + $0x78] sm:$0xf] %v779
  %908 = vst [vmem:[%s2 + $0x7c] sm:$0xf] %v780
  %909 = vst [vmem:[%s2 + $0x80] sm:$0xf] %v781
  %910 = vst [vmem:[%s2 + $0x84] sm:$0xf] %v782
  %911 = vst [vmem:[%s2 + $0x88] sm:$0xf] %v783
  %912 = vst [vmem:[%s2 + $0x8c] sm:$0xf] %v784
  %913 = vst [vmem:[%s2 + $0x90] sm:$0xf] %v785
  %914 = vst [vmem:[%s2 + $0x94] sm:$0xf] %v786
  %915 = vst [vmem:[%s2 + $0x98] sm:$0xf] %v787
  %916 = vst [vmem:[%s2 + $0x9c] sm:$0xf] %v788
  %917 = vst [vmem:[%s2 + $0xa0] sm:$0xf] %v789
  %918 = vst [vmem:[%s2 + $0xa4] sm:$0xf] %v790
  %919 = vst [vmem:[%s2 + $0xa8] sm:$0xf] %v791
  %920 = vst [vmem:[%s2 + $0xac] sm:$0xf] %v792
  %921 = vst [vmem:[%s2 + $0xb0] sm:$0xf] %v793
  %922 = vst [vmem:[%s2 + $0xb4] sm:$0xf] %v794
  %923 = vst [vmem:[%s2 + $0xb8] sm:$0xf] %v795
  %924 = vst [vmem:[%s2 + $0xbc] sm:$0xf] %v796
  %925 = vst [vmem:[%s2 + $0xc0] sm:$0xf] %v797
  %926 = vst [vmem:[%s2 + $0xc4] sm:$0xf] %v798
  %927 = vst [vmem:[%s2 + $0xc8] sm:$0xf] %v799
  %928 = vst [vmem:[%s2 + $0xcc] sm:$0xf] %v800
  %929 = vst [vmem:[%s2 + $0xd0] sm:$0xf] %v801
  %930 = vst [vmem:[%s2 + $0xd4] sm:$0xf] %v802
  %931 = vst [vmem:[%s2 + $0xd8] sm:$0xf] %v803
  %932 = vst [vmem:[%s2 + $0xdc] sm:$0xf] %v804
  %933 = vst [vmem:[%s2 + $0xe0] sm:$0xf] %v805
  %934 = vst [vmem:[%s2 + $0xe4] sm:$0xf] %v806
  %935 = vst [vmem:[%s2 + $0xe8] sm:$0xf] %v807
  %936 = vst [vmem:[%s2 + $0xec] sm:$0xf] %v808
  %937 = vst [vmem:[%s2 + $0xf0] sm:$0xf] %v809
  %938 = vst [vmem:[%s2 + $0xf4] sm:$0xf] %v810
  %939 = vst [vmem:[%s2 + $0xf8] sm:$0xf] %v811
  %940 = vst [vmem:[%s2 + $0xfc] sm:$0xf] %v812
  // Predicated region
  $region10: #{generator_forward.9} parent=0 // pred_check
    _
  $region11: #{generator_forward.9} parent=0 // pred_check_branch
    %942 = sbr.rel (0) target = $region13
  $region12: #{generator_forward.9} parent=0 // pred_region
    _
  $region13: #{generator_forward.9} parent=0 // pred_fallthru
    _
  // Predicated region
  $region14: #{generator_forward.9} parent=0 // pred_check
    _
  $region15: #{generator_forward.9} parent=0 // pred_check_branch
    %944 = sbr.rel (0) target = $region17
  $region16: #{generator_forward.9} parent=0 // pred_region
    _
  $region17: #{generator_forward.9} parent=0 // pred_fallthru
    _

// kernel: generator_forward.10
$region0: #{generator_forward.10}
  #allocation0 [shape = 'u32[]', space=smem, size = 0x4, offset = 0x4, fixed_abs, tag = 'smem constant byte address 0x4 - core index']
  #allocation1 [shape = 'u32[144,128]{1,0:T(1,128)}', space=vmem, size = 0x12000, scoped, tag = 'internal scratch']
  %s0 = inlined_call_operand.vmem [shape: bf16[16,128], index: 0, kind: input, shape index: {}]
  %s1 = inlined_call_operand.vmem [shape: bf16[128,2048], index: 1, kind: input, shape index: {}]
  %s2 = inlined_call_operand.vmem [shape: bf16[16,2048], index: 2, kind: output, shape index: {}]
  %s3 = sld [smem:[#allocation0]]
  $region18: #{generator_forward.10} parent=0
    _
  %s5 = ssub.s32 1, %s3
  %s6 = scalar_select 0, %s5, %s3
  // Predicated region
  $region2: #{generator_forward.10} parent=0 // pred_check
    _
  $region3: #{generator_forward.10} parent=0 // pred_check_branch
    %8 = sbr.rel (0) target = $region5
  $region4: #{generator_forward.10} parent=0 // pred_region
    _
  $region5: #{generator_forward.10} parent=0 // pred_fallthru
    _
  // Predicated region
  $region6: #{generator_forward.10} parent=0 // pred_check
    _
  $region7: #{generator_forward.10} parent=0 // pred_check_branch
    %10 = sbr.rel (0) target = $region9
  $region8: #{generator_forward.10} parent=0 // pred_region
    _
  $region9: #{generator_forward.10} parent=0 // pred_fallthru
    _
  %v12 = vld [vmem:[%s0] sm:$0xf]
  %v13 = vld [vmem:[%s0 + $0x4] sm:$0xf]
  %v14 = vld [vmem:[%s1] sm:$0xff]
  %v15 = vld [vmem:[%s1 + $0x8] sm:$0xff]
  %v16 = vld [vmem:[%s1 + $0x10] sm:$0xff]
  %v17 = vld [vmem:[%s1 + $0x18] sm:$0xff]
  %v18 = vld [vmem:[%s1 + $0x20] sm:$0xff]
  %v19 = vld [vmem:[%s1 + $0x28] sm:$0xff]
  %v20 = vld [vmem:[%s1 + $0x30] sm:$0xff]
  %v21 = vld [vmem:[%s1 + $0x38] sm:$0xff]
  %v22 = vld [vmem:[%s1 + $0x40] sm:$0xff]
  %v23 = vld [vmem:[%s1 + $0x48] sm:$0xff]
  %v24 = vld [vmem:[%s1 + $0x50] sm:$0xff]
  %v25 = vld [vmem:[%s1 + $0x58] sm:$0xff]
  %v26 = vld [vmem:[%s1 + $0x60] sm:$0xff]
  %v27 = vld [vmem:[%s1 + $0x68] sm:$0xff]
  %v28 = vld [vmem:[%s1 + $0x70] sm:$0xff]
  %v29 = vld [vmem:[%s1 + $0x78] sm:$0xff]
  %v30 = vld [vmem:[%s1 + $0x80] sm:$0xff]
  %v31 = vld [vmem:[%s1 + $0x88] sm:$0xff]
  %v32 = vld [vmem:[%s1 + $0x90] sm:$0xff]
  %v33 = vld [vmem:[%s1 + $0x98] sm:$0xff]
  %v34 = vld [vmem:[%s1 + $0xa0] sm:$0xff]
  %v35 = vld [vmem:[%s1 + $0xa8] sm:$0xff]
  %v36 = vld [vmem:[%s1 + $0xb0] sm:$0xff]
  %v37 = vld [vmem:[%s1 + $0xb8] sm:$0xff]
  %v38 = vld [vmem:[%s1 + $0xc0] sm:$0xff]
  %v39 = vld [vmem:[%s1 + $0xc8] sm:$0xff]
  %v40 = vld [vmem:[%s1 + $0xd0] sm:$0xff]
  %v41 = vld [vmem:[%s1 + $0xd8] sm:$0xff]
  %v42 = vld [vmem:[%s1 + $0xe0] sm:$0xff]
  %v43 = vld [vmem:[%s1 + $0xe8] sm:$0xff]
  %v44 = vld [vmem:[%s1 + $0xf0] sm:$0xff]
  %v45 = vld [vmem:[%s1 + $0xf8] sm:$0xff]
  %v46 = vld [vmem:[%s1 + $0x100] sm:$0xff]
  %v47 = vld [vmem:[%s1 + $0x108] sm:$0xff]
  %v48 = vld [vmem:[%s1 + $0x110] sm:$0xff]
  %v49 = vld [vmem:[%s1 + $0x118] sm:$0xff]
  %v50 = vld [vmem:[%s1 + $0x120] sm:$0xff]
  %v51 = vld [vmem:[%s1 + $0x128] sm:$0xff]
  %v52 = vld [vmem:[%s1 + $0x130] sm:$0xff]
  %v53 = vld [vmem:[%s1 + $0x138] sm:$0xff]
  %v54 = vld [vmem:[%s1 + $0x140] sm:$0xff]
  %v55 = vld [vmem:[%s1 + $0x148] sm:$0xff]
  %v56 = vld [vmem:[%s1 + $0x150] sm:$0xff]
  %v57 = vld [vmem:[%s1 + $0x158] sm:$0xff]
  %v58 = vld [vmem:[%s1 + $0x160] sm:$0xff]
  %v59 = vld [vmem:[%s1 + $0x168] sm:$0xff]
  %v60 = vld [vmem:[%s1 + $0x170] sm:$0xff]
  %v61 = vld [vmem:[%s1 + $0x178] sm:$0xff]
  %v62 = vld [vmem:[%s1 + $0x180] sm:$0xff]
  %v63 = vld [vmem:[%s1 + $0x188] sm:$0xff]
  %v64 = vld [vmem:[%s1 + $0x190] sm:$0xff]
  %v65 = vld [vmem:[%s1 + $0x198] sm:$0xff]
  %v66 = vld [vmem:[%s1 + $0x1a0] sm:$0xff]
  %v67 = vld [vmem:[%s1 + $0x1a8] sm:$0xff]
  %v68 = vld [vmem:[%s1 + $0x1b0] sm:$0xff]
  %v69 = vld [vmem:[%s1 + $0x1b8] sm:$0xff]
  %v70 = vld [vmem:[%s1 + $0x1c0] sm:$0xff]
  %v71 = vld [vmem:[%s1 + $0x1c8] sm:$0xff]
  %v72 = vld [vmem:[%s1 + $0x1d0] sm:$0xff]
  %v73 = vld [vmem:[%s1 + $0x1d8] sm:$0xff]
  %v74 = vld [vmem:[%s1 + $0x1e0] sm:$0xff]
  %v75 = vld [vmem:[%s1 + $0x1e8] sm:$0xff]
  %v76 = vld [vmem:[%s1 + $0x1f0] sm:$0xff]
  %v77 = vld [vmem:[%s1 + $0x1f8] sm:$0xff]
  %v78 = vld [vmem:[%s1 + $0x200] sm:$0xff]
  %v79 = vld [vmem:[%s1 + $0x208] sm:$0xff]
  %v80 = vld [vmem:[%s1 + $0x210] sm:$0xff]
  %v81 = vld [vmem:[%s1 + $0x218] sm:$0xff]
  %v82 = vld [vmem:[%s1 + $0x220] sm:$0xff]
  %v83 = vld [vmem:[%s1 + $0x228] sm:$0xff]
  %v84 = vld [vmem:[%s1 + $0x230] sm:$0xff]
  %v85 = vld [vmem:[%s1 + $0x238] sm:$0xff]
  %v86 = vld [vmem:[%s1 + $0x240] sm:$0xff]
  %v87 = vld [vmem:[%s1 + $0x248] sm:$0xff]
  %v88 = vld [vmem:[%s1 + $0x250] sm:$0xff]
  %v89 = vld [vmem:[%s1 + $0x258] sm:$0xff]
  %v90 = vld [vmem:[%s1 + $0x260] sm:$0xff]
  %v91 = vld [vmem:[%s1 + $0x268] sm:$0xff]
  %v92 = vld [vmem:[%s1 + $0x270] sm:$0xff]
  %v93 = vld [vmem:[%s1 + $0x278] sm:$0xff]
  %v94 = vld [vmem:[%s1 + $0x280] sm:$0xff]
  %v95 = vld [vmem:[%s1 + $0x288] sm:$0xff]
  %v96 = vld [vmem:[%s1 + $0x290] sm:$0xff]
  %v97 = vld [vmem:[%s1 + $0x298] sm:$0xff]
  %v98 = vld [vmem:[%s1 + $0x2a0] sm:$0xff]
  %v99 = vld [vmem:[%s1 + $0x2a8] sm:$0xff]
  %v100 = vld [vmem:[%s1 + $0x2b0] sm:$0xff]
  %v101 = vld [vmem:[%s1 + $0x2b8] sm:$0xff]
  %v102 = vld [vmem:[%s1 + $0x2c0] sm:$0xff]
  %v103 = vld [vmem:[%s1 + $0x2c8] sm:$0xff]
  %v104 = vld [vmem:[%s1 + $0x2d0] sm:$0xff]
  %v105 = vld [vmem:[%s1 + $0x2d8] sm:$0xff]
  %v106 = vld [vmem:[%s1 + $0x2e0] sm:$0xff]
  %v107 = vld [vmem:[%s1 + $0x2e8] sm:$0xff]
  %v108 = vld [vmem:[%s1 + $0x2f0] sm:$0xff]
  %v109 = vld [vmem:[%s1 + $0x2f8] sm:$0xff]
  %v110 = vld [vmem:[%s1 + $0x300] sm:$0xff]
  %v111 = vld [vmem:[%s1 + $0x308] sm:$0xff]
  %v112 = vld [vmem:[%s1 + $0x310] sm:$0xff]
  %v113 = vld [vmem:[%s1 + $0x318] sm:$0xff]
  %v114 = vld [vmem:[%s1 + $0x320] sm:$0xff]
  %v115 = vld [vmem:[%s1 + $0x328] sm:$0xff]
  %v116 = vld [vmem:[%s1 + $0x330] sm:$0xff]
  %v117 = vld [vmem:[%s1 + $0x338] sm:$0xff]
  %v118 = vld [vmem:[%s1 + $0x340] sm:$0xff]
  %v119 = vld [vmem:[%s1 + $0x348] sm:$0xff]
  %v120 = vld [vmem:[%s1 + $0x350] sm:$0xff]
  %v121 = vld [vmem:[%s1 + $0x358] sm:$0xff]
  %v122 = vld [vmem:[%s1 + $0x360] sm:$0xff]
  %v123 = vld [vmem:[%s1 + $0x368] sm:$0xff]
  %v124 = vld [vmem:[%s1 + $0x370] sm:$0xff]
  %v125 = vld [vmem:[%s1 + $0x378] sm:$0xff]
  %v126 = vld [vmem:[%s1 + $0x380] sm:$0xff]
  %v127 = vld [vmem:[%s1 + $0x388] sm:$0xff]
  %v128 = vld [vmem:[%s1 + $0x390] sm:$0xff]
  %v129 = vld [vmem:[%s1 + $0x398] sm:$0xff]
  %v130 = vld [vmem:[%s1 + $0x3a0] sm:$0xff]
  %v131 = vld [vmem:[%s1 + $0x3a8] sm:$0xff]
  %v132 = vld [vmem:[%s1 + $0x3b0] sm:$0xff]
  %v133 = vld [vmem:[%s1 + $0x3b8] sm:$0xff]
  %v134 = vld [vmem:[%s1 + $0x3c0] sm:$0xff]
  %v135 = vld [vmem:[%s1 + $0x3c8] sm:$0xff]
  %v136 = vld [vmem:[%s1 + $0x3d0] sm:$0xff]
  %v137 = vld [vmem:[%s1 + $0x3d8] sm:$0xff]
  %v138 = vld [vmem:[%s1 + $0x3e0] sm:$0xff]
  %v139 = vld [vmem:[%s1 + $0x3e8] sm:$0xff]
  %v140 = vld [vmem:[%s1 + $0x3f0] sm:$0xff]
  %v141 = vld [vmem:[%s1 + $0x3f8] sm:$0xff]
  %v144 = vunpack.c.l.b16 %v12
  %v145 = vunpack.c.l.b16 %v13
  %v146 = vpack.c.b16 %v145, %v144
  %v276 = vunpack.c.l.b16 %v14
  %v277 = vunpack.c.h.b16 %v14
  %v278 = vunpack.c.l.b16 %v15
  %v279 = vunpack.c.h.b16 %v15
  %v280 = vunpack.c.l.b16 %v16
  %v281 = vunpack.c.h.b16 %v16
  %v282 = vunpack.c.l.b16 %v17
  %v283 = vunpack.c.h.b16 %v17
  %v284 = vunpack.c.l.b16 %v18
  %v285 = vunpack.c.h.b16 %v18
  %v286 = vunpack.c.l.b16 %v19
  %v287 = vunpack.c.h.b16 %v19
  %v288 = vunpack.c.l.b16 %v20
  %v289 = vunpack.c.h.b16 %v20
  %v290 = vunpack.c.l.b16 %v21
  %v291 = vunpack.c.h.b16 %v21
  %v292 = vunpack.c.l.b16 %v22
  %v293 = vunpack.c.h.b16 %v22
  %v294 = vunpack.c.l.b16 %v23
  %v295 = vunpack.c.h.b16 %v23
  %v296 = vunpack.c.l.b16 %v24
  %v297 = vunpack.c.h.b16 %v24
  %v298 = vunpack.c.l.b16 %v25
  %v299 = vunpack.c.h.b16 %v25
  %v300 = vunpack.c.l.b16 %v26
  %v301 = vunpack.c.h.b16 %v26
  %v302 = vunpack.c.l.b16 %v27
  %v303 = vunpack.c.h.b16 %v27
  %v304 = vunpack.c.l.b16 %v28
  %v305 = vunpack.c.h.b16 %v28
  %v306 = vunpack.c.l.b16 %v29
  %v307 = vunpack.c.h.b16 %v29
  %v308 = vunpack.c.l.b16 %v30
  %v309 = vunpack.c.h.b16 %v30
  %v310 = vunpack.c.l.b16 %v31
  %v311 = vunpack.c.h.b16 %v31
  %v312 = vunpack.c.l.b16 %v32
  %v313 = vunpack.c.h.b16 %v32
  %v314 = vunpack.c.l.b16 %v33
  %v315 = vunpack.c.h.b16 %v33
  %v316 = vunpack.c.l.b16 %v34
  %v317 = vunpack.c.h.b16 %v34
  %v318 = vunpack.c.l.b16 %v35
  %v319 = vunpack.c.h.b16 %v35
  %v320 = vunpack.c.l.b16 %v36
  %v321 = vunpack.c.h.b16 %v36
  %v322 = vunpack.c.l.b16 %v37
  %v323 = vunpack.c.h.b16 %v37
  %v324 = vunpack.c.l.b16 %v38
  %v325 = vunpack.c.h.b16 %v38
  %v326 = vunpack.c.l.b16 %v39
  %v327 = vunpack.c.h.b16 %v39
  %v328 = vunpack.c.l.b16 %v40
  %v329 = vunpack.c.h.b16 %v40
  %v330 = vunpack.c.l.b16 %v41
  %v331 = vunpack.c.h.b16 %v41
  %v332 = vunpack.c.l.b16 %v42
  %v333 = vunpack.c.h.b16 %v42
  %v334 = vunpack.c.l.b16 %v43
  %v335 = vunpack.c.h.b16 %v43
  %v336 = vunpack.c.l.b16 %v44
  %v337 = vunpack.c.h.b16 %v44
  %v338 = vunpack.c.l.b16 %v45
  %v339 = vunpack.c.h.b16 %v45
  %v340 = vunpack.c.l.b16 %v46
  %v341 = vunpack.c.h.b16 %v46
  %v342 = vunpack.c.l.b16 %v47
  %v343 = vunpack.c.h.b16 %v47
  %v344 = vunpack.c.l.b16 %v48
  %v345 = vunpack.c.h.b16 %v48
  %v346 = vunpack.c.l.b16 %v49
  %v347 = vunpack.c.h.b16 %v49
  %v348 = vunpack.c.l.b16 %v50
  %v349 = vunpack.c.h.b16 %v50
  %v350 = vunpack.c.l.b16 %v51
  %v351 = vunpack.c.h.b16 %v51
  %v352 = vunpack.c.l.b16 %v52
  %v353 = vunpack.c.h.b16 %v52
  %v354 = vunpack.c.l.b16 %v53
  %v355 = vunpack.c.h.b16 %v53
  %v356 = vunpack.c.l.b16 %v54
  %v357 = vunpack.c.h.b16 %v54
  %v358 = vunpack.c.l.b16 %v55
  %v359 = vunpack.c.h.b16 %v55
  %v360 = vunpack.c.l.b16 %v56
  %v361 = vunpack.c.h.b16 %v56
  %v362 = vunpack.c.l.b16 %v57
  %v363 = vunpack.c.h.b16 %v57
  %v364 = vunpack.c.l.b16 %v58
  %v365 = vunpack.c.h.b16 %v58
  %v366 = vunpack.c.l.b16 %v59
  %v367 = vunpack.c.h.b16 %v59
  %v368 = vunpack.c.l.b16 %v60
  %v369 = vunpack.c.h.b16 %v60
  %v370 = vunpack.c.l.b16 %v61
  %v371 = vunpack.c.h.b16 %v61
  %v372 = vunpack.c.l.b16 %v62
  %v373 = vunpack.c.h.b16 %v62
  %v374 = vunpack.c.l.b16 %v63
  %v375 = vunpack.c.h.b16 %v63
  %v376 = vunpack.c.l.b16 %v64
  %v377 = vunpack.c.h.b16 %v64
  %v378 = vunpack.c.l.b16 %v65
  %v379 = vunpack.c.h.b16 %v65
  %v380 = vunpack.c.l.b16 %v66
  %v381 = vunpack.c.h.b16 %v66
  %v382 = vunpack.c.l.b16 %v67
  %v383 = vunpack.c.h.b16 %v67
  %v384 = vunpack.c.l.b16 %v68
  %v385 = vunpack.c.h.b16 %v68
  %v386 = vunpack.c.l.b16 %v69
  %v387 = vunpack.c.h.b16 %v69
  %v388 = vunpack.c.l.b16 %v70
  %v389 = vunpack.c.h.b16 %v70
  %v390 = vunpack.c.l.b16 %v71
  %v391 = vunpack.c.h.b16 %v71
  %v392 = vunpack.c.l.b16 %v72
  %v393 = vunpack.c.h.b16 %v72
  %v394 = vunpack.c.l.b16 %v73
  %v395 = vunpack.c.h.b16 %v73
  %v396 = vunpack.c.l.b16 %v74
  %v397 = vunpack.c.h.b16 %v74
  %v398 = vunpack.c.l.b16 %v75
  %v399 = vunpack.c.h.b16 %v75
  %v400 = vunpack.c.l.b16 %v76
  %v401 = vunpack.c.h.b16 %v76
  %v402 = vunpack.c.l.b16 %v77
  %v403 = vunpack.c.h.b16 %v77
  %v404 = vunpack.c.l.b16 %v78
  %v405 = vunpack.c.h.b16 %v78
  %v406 = vunpack.c.l.b16 %v79
  %v407 = vunpack.c.h.b16 %v79
  %v408 = vunpack.c.l.b16 %v80
  %v409 = vunpack.c.h.b16 %v80
  %v410 = vunpack.c.l.b16 %v81
  %v411 = vunpack.c.h.b16 %v81
  %v412 = vunpack.c.l.b16 %v82
  %v413 = vunpack.c.h.b16 %v82
  %v414 = vunpack.c.l.b16 %v83
  %v415 = vunpack.c.h.b16 %v83
  %v416 = vunpack.c.l.b16 %v84
  %v417 = vunpack.c.h.b16 %v84
  %v418 = vunpack.c.l.b16 %v85
  %v419 = vunpack.c.h.b16 %v85
  %v420 = vunpack.c.l.b16 %v86
  %v421 = vunpack.c.h.b16 %v86
  %v422 = vunpack.c.l.b16 %v87
  %v423 = vunpack.c.h.b16 %v87
  %v424 = vunpack.c.l.b16 %v88
  %v425 = vunpack.c.h.b16 %v88
  %v426 = vunpack.c.l.b16 %v89
  %v427 = vunpack.c.h.b16 %v89
  %v428 = vunpack.c.l.b16 %v90
  %v429 = vunpack.c.h.b16 %v90
  %v430 = vunpack.c.l.b16 %v91
  %v431 = vunpack.c.h.b16 %v91
  %v432 = vunpack.c.l.b16 %v92
  %v433 = vunpack.c.h.b16 %v92
  %v434 = vunpack.c.l.b16 %v93
  %v435 = vunpack.c.h.b16 %v93
  %v436 = vunpack.c.l.b16 %v94
  %v437 = vunpack.c.h.b16 %v94
  %v438 = vunpack.c.l.b16 %v95
  %v439 = vunpack.c.h.b16 %v95
  %v440 = vunpack.c.l.b16 %v96
  %v441 = vunpack.c.h.b16 %v96
  %v442 = vunpack.c.l.b16 %v97
  %v443 = vunpack.c.h.b16 %v97
  %v444 = vunpack.c.l.b16 %v98
  %v445 = vunpack.c.h.b16 %v98
  %v446 = vunpack.c.l.b16 %v99
  %v447 = vunpack.c.h.b16 %v99
  %v448 = vunpack.c.l.b16 %v100
  %v449 = vunpack.c.h.b16 %v100
  %v450 = vunpack.c.l.b16 %v101
  %v451 = vunpack.c.h.b16 %v101
  %v452 = vunpack.c.l.b16 %v102
  %v453 = vunpack.c.h.b16 %v102
  %v454 = vunpack.c.l.b16 %v103
  %v455 = vunpack.c.h.b16 %v103
  %v456 = vunpack.c.l.b16 %v104
  %v457 = vunpack.c.h.b16 %v104
  %v458 = vunpack.c.l.b16 %v105
  %v459 = vunpack.c.h.b16 %v105
  %v460 = vunpack.c.l.b16 %v106
  %v461 = vunpack.c.h.b16 %v106
  %v462 = vunpack.c.l.b16 %v107
  %v463 = vunpack.c.h.b16 %v107
  %v464 = vunpack.c.l.b16 %v108
  %v465 = vunpack.c.h.b16 %v108
  %v466 = vunpack.c.l.b16 %v109
  %v467 = vunpack.c.h.b16 %v109
  %v468 = vunpack.c.l.b16 %v110
  %v469 = vunpack.c.h.b16 %v110
  %v470 = vunpack.c.l.b16 %v111
  %v471 = vunpack.c.h.b16 %v111
  %v472 = vunpack.c.l.b16 %v112
  %v473 = vunpack.c.h.b16 %v112
  %v474 = vunpack.c.l.b16 %v113
  %v475 = vunpack.c.h.b16 %v113
  %v476 = vunpack.c.l.b16 %v114
  %v477 = vunpack.c.h.b16 %v114
  %v478 = vunpack.c.l.b16 %v115
  %v479 = vunpack.c.h.b16 %v115
  %v480 = vunpack.c.l.b16 %v116
  %v481 = vunpack.c.h.b16 %v116
  %v482 = vunpack.c.l.b16 %v117
  %v483 = vunpack.c.h.b16 %v117
  %v484 = vunpack.c.l.b16 %v118
  %v485 = vunpack.c.h.b16 %v118
  %v486 = vunpack.c.l.b16 %v119
  %v487 = vunpack.c.h.b16 %v119
  %v488 = vunpack.c.l.b16 %v120
  %v489 = vunpack.c.h.b16 %v120
  %v490 = vunpack.c.l.b16 %v121
  %v491 = vunpack.c.h.b16 %v121
  %v492 = vunpack.c.l.b16 %v122
  %v493 = vunpack.c.h.b16 %v122
  %v494 = vunpack.c.l.b16 %v123
  %v495 = vunpack.c.h.b16 %v123
  %v496 = vunpack.c.l.b16 %v124
  %v497 = vunpack.c.h.b16 %v124
  %v498 = vunpack.c.l.b16 %v125
  %v499 = vunpack.c.h.b16 %v125
  %v500 = vunpack.c.l.b16 %v126
  %v501 = vunpack.c.h.b16 %v126
  %v502 = vunpack.c.l.b16 %v127
  %v503 = vunpack.c.h.b16 %v127
  %v504 = vunpack.c.l.b16 %v128
  %v505 = vunpack.c.h.b16 %v128
  %v506 = vunpack.c.l.b16 %v129
  %v507 = vunpack.c.h.b16 %v129
  %v508 = vunpack.c.l.b16 %v130
  %v509 = vunpack.c.h.b16 %v130
  %v510 = vunpack.c.l.b16 %v131
  %v511 = vunpack.c.h.b16 %v131
  %v512 = vunpack.c.l.b16 %v132
  %v513 = vunpack.c.h.b16 %v132
  %v514 = vunpack.c.l.b16 %v133
  %v515 = vunpack.c.h.b16 %v133
  %v516 = vunpack.c.l.b16 %v134
  %v517 = vunpack.c.h.b16 %v134
  %v518 = vunpack.c.l.b16 %v135
  %v519 = vunpack.c.h.b16 %v135
  %v520 = vunpack.c.l.b16 %v136
  %v521 = vunpack.c.h.b16 %v136
  %v522 = vunpack.c.l.b16 %v137
  %v523 = vunpack.c.h.b16 %v137
  %v524 = vunpack.c.l.b16 %v138
  %v525 = vunpack.c.h.b16 %v138
  %v526 = vunpack.c.l.b16 %v139
  %v527 = vunpack.c.h.b16 %v139
  %v528 = vunpack.c.l.b16 %v140
  %v529 = vunpack.c.h.b16 %v140
  %v530 = vunpack.c.l.b16 %v141
  %v531 = vunpack.c.h.b16 %v141
  %v532 = vpack.c.b16 %v292, %v276
  %v533 = vpack.c.b16 %v293, %v277
  %v534 = vpack.c.b16 %v294, %v278
  %v535 = vpack.c.b16 %v295, %v279
  %v536 = vpack.c.b16 %v296, %v280
  %v537 = vpack.c.b16 %v297, %v281
  %v538 = vpack.c.b16 %v298, %v282
  %v539 = vpack.c.b16 %v299, %v283
  %v540 = vpack.c.b16 %v300, %v284
  %v541 = vpack.c.b16 %v301, %v285
  %v542 = vpack.c.b16 %v302, %v286
  %v543 = vpack.c.b16 %v303, %v287
  %v544 = vpack.c.b16 %v304, %v288
  %v545 = vpack.c.b16 %v305, %v289
  %v546 = vpack.c.b16 %v306, %v290
  %v547 = vpack.c.b16 %v307, %v291
  %v548 = vpack.c.b16 %v324, %v308
  %v549 = vpack.c.b16 %v325, %v309
  %v550 = vpack.c.b16 %v326, %v310
  %v551 = vpack.c.b16 %v327, %v311
  %v552 = vpack.c.b16 %v328, %v312
  %v553 = vpack.c.b16 %v329, %v313
  %v554 = vpack.c.b16 %v330, %v314
  %v555 = vpack.c.b16 %v331, %v315
  %v556 = vpack.c.b16 %v332, %v316
  %v557 = vpack.c.b16 %v333, %v317
  %v558 = vpack.c.b16 %v334, %v318
  %v559 = vpack.c.b16 %v335, %v319
  %v560 = vpack.c.b16 %v336, %v320
  %v561 = vpack.c.b16 %v337, %v321
  %v562 = vpack.c.b16 %v338, %v322
  %v563 = vpack.c.b16 %v339, %v323
  %v564 = vpack.c.b16 %v356, %v340
  %v565 = vpack.c.b16 %v357, %v341
  %v566 = vpack.c.b16 %v358, %v342
  %v567 = vpack.c.b16 %v359, %v343
  %v568 = vpack.c.b16 %v360, %v344
  %v569 = vpack.c.b16 %v361, %v345
  %v570 = vpack.c.b16 %v362, %v346
  %v571 = vpack.c.b16 %v363, %v347
  %v572 = vpack.c.b16 %v364, %v348
  %v573 = vpack.c.b16 %v365, %v349
  %v574 = vpack.c.b16 %v366, %v350
  %v575 = vpack.c.b16 %v367, %v351
  %v576 = vpack.c.b16 %v368, %v352
  %v577 = vpack.c.b16 %v369, %v353
  %v578 = vpack.c.b16 %v370, %v354
  %v579 = vpack.c.b16 %v371, %v355
  %v580 = vpack.c.b16 %v388, %v372
  %v581 = vpack.c.b16 %v389, %v373
  %v582 = vpack.c.b16 %v390, %v374
  %v583 = vpack.c.b16 %v391, %v375
  %v584 = vpack.c.b16 %v392, %v376
  %v585 = vpack.c.b16 %v393, %v377
  %v586 = vpack.c.b16 %v394, %v378
  %v587 = vpack.c.b16 %v395, %v379
  %v588 = vpack.c.b16 %v396, %v380
  %v589 = vpack.c.b16 %v397, %v381
  %v590 = vpack.c.b16 %v398, %v382
  %v591 = vpack.c.b16 %v399, %v383
  %v592 = vpack.c.b16 %v400, %v384
  %v593 = vpack.c.b16 %v401, %v385
  %v594 = vpack.c.b16 %v402, %v386
  %v595 = vpack.c.b16 %v403, %v387
  %v596 = vpack.c.b16 %v420, %v404
  %v597 = vpack.c.b16 %v421, %v405
  %v598 = vpack.c.b16 %v422, %v406
  %v599 = vpack.c.b16 %v423, %v407
  %v600 = vpack.c.b16 %v424, %v408
  %v601 = vpack.c.b16 %v425, %v409
  %v602 = vpack.c.b16 %v426, %v410
  %v603 = vpack.c.b16 %v427, %v411
  %v604 = vpack.c.b16 %v428, %v412
  %v605 = vpack.c.b16 %v429, %v413
  %v606 = vpack.c.b16 %v430, %v414
  %v607 = vpack.c.b16 %v431, %v415
  %v608 = vpack.c.b16 %v432, %v416
  %v609 = vpack.c.b16 %v433, %v417
  %v610 = vpack.c.b16 %v434, %v418
  %v611 = vpack.c.b16 %v435, %v419
  %v612 = vpack.c.b16 %v452, %v436
  %v613 = vpack.c.b16 %v453, %v437
  %v614 = vpack.c.b16 %v454, %v438
  %v615 = vpack.c.b16 %v455, %v439
  %v616 = vpack.c.b16 %v456, %v440
  %v617 = vpack.c.b16 %v457, %v441
  %v618 = vpack.c.b16 %v458, %v442
  %v619 = vpack.c.b16 %v459, %v443
  %v620 = vpack.c.b16 %v460, %v444
  %v621 = vpack.c.b16 %v461, %v445
  %v622 = vpack.c.b16 %v462, %v446
  %v623 = vpack.c.b16 %v463, %v447
  %v624 = vpack.c.b16 %v464, %v448
  %v625 = vpack.c.b16 %v465, %v449
  %v626 = vpack.c.b16 %v466, %v450
  %v627 = vpack.c.b16 %v467, %v451
  %v628 = vpack.c.b16 %v484, %v468
  %v629 = vpack.c.b16 %v485, %v469
  %v630 = vpack.c.b16 %v486, %v470
  %v631 = vpack.c.b16 %v487, %v471
  %v632 = vpack.c.b16 %v488, %v472
  %v633 = vpack.c.b16 %v489, %v473
  %v634 = vpack.c.b16 %v490, %v474
  %v635 = vpack.c.b16 %v491, %v475
  %v636 = vpack.c.b16 %v492, %v476
  %v637 = vpack.c.b16 %v493, %v477
  %v638 = vpack.c.b16 %v494, %v478
  %v639 = vpack.c.b16 %v495, %v479
  %v640 = vpack.c.b16 %v496, %v480
  %v641 = vpack.c.b16 %v497, %v481
  %v642 = vpack.c.b16 %v498, %v482
  %v643 = vpack.c.b16 %v499, %v483
  %v644 = vpack.c.b16 %v516, %v500
  %v645 = vpack.c.b16 %v517, %v501
  %v646 = vpack.c.b16 %v518, %v502
  %v647 = vpack.c.b16 %v519, %v503
  %v648 = vpack.c.b16 %v520, %v504
  %v649 = vpack.c.b16 %v521, %v505
  %v650 = vpack.c.b16 %v522, %v506
  %v651 = vpack.c.b16 %v523, %v507
  %v652 = vpack.c.b16 %v524, %v508
  %v653 = vpack.c.b16 %v525, %v509
  %v654 = vpack.c.b16 %v526, %v510
  %v655 = vpack.c.b16 %v527, %v511
  %v656 = vpack.c.b16 %v528, %v512
  %v657 = vpack.c.b16 %v529, %v513
  %v658 = vpack.c.b16 %v530, %v514
  %v659 = vpack.c.b16 %v531, %v515
  %788 = vmatprep.subr.bf16.mxu0 %v533
  %789 = vmatpush1.bf16.msra.mxu0 %v532
  %790 = vmatprep.subr.bf16.mxu0 %v549
  %791 = vmatpush1.bf16.msra.mxu0 %v548
  %792 = vmatprep.subr.bf16.mxu0 %v565
  %793 = vmatpush1.bf16.msra.mxu0 %v564
  %794 = vmatprep.subr.bf16.mxu0 %v581
  %795 = vmatpush1.bf16.msra.mxu0 %v580
  %796 = vmatprep.subr.bf16.mxu0 %v597
  %797 = vmatpush1.bf16.msra.mxu0 %v596
  %798 = vmatprep.subr.bf16.mxu0 %v613
  %799 = vmatpush1.bf16.msra.mxu0 %v612
  %800 = vmatprep.subr.bf16.mxu0 %v629
  %801 = vmatpush1.bf16.msra.mxu0 %v628
  %802 = vmatprep.subr.bf16.mxu0 %v645
  %803 = vmatpush1.bf16.msra.mxu0 %v644
  %804 = vmatprep.subr.bf16.mxu0 0
  %805 = vmatpush1.bf16.msra.mxu0 0
  %806 = vmatprep.subr.bf16.mxu0 0
  %807 = vmatpush1.bf16.msra.mxu0 0
  %808 = vmatprep.subr.bf16.mxu0 0
  %809 = vmatpush1.bf16.msra.mxu0 0
  %810 = vmatprep.subr.bf16.mxu0 0
  %811 = vmatpush1.bf16.msra.mxu0 0
  %812 = vmatprep.subr.bf16.mxu0 0
  %813 = vmatpush1.bf16.msra.mxu0 0
  %814 = vmatprep.subr.bf16.mxu0 0
  %815 = vmatpush1.bf16.msra.mxu0 0
  %816 = vmatprep.subr.bf16.mxu0 0
  %817 = vmatpush1.bf16.msra.mxu0 0
  %818 = vmatprep.subr.bf16.mxu0 0
  %819 = vmatpush1.bf16.msra.mxu0 0
  %820 = vmatprep.mubr.bf16.mxu0 0
  %821 = vmatmul.mubr.bf16.gmra.mrb[0].mxu0 %v146
  %v822 = vpop.f32.mrb[0].mxu0
  %v823 = vadd.f32 0.0, %v822
  %v824 = vpop.f32.mrb[0].mxu0
  %v825 = vadd.f32 0.0, %v824
  %v826 = vpop.f32.mrb[0].mxu0
  %v827 = vadd.f32 0.0, %v826
  %v828 = vpop.f32.mrb[0].mxu0
  %v829 = vadd.f32 0.0, %v828
  %830 = vdwg.mxu0
  %831 = vmatprep.subr.bf16.mxu0 %v535
  %832 = vmatpush1.bf16.msra.mxu0 %v534
  %833 = vmatprep.subr.bf16.mxu0 %v551
  %834 = vmatpush1.bf16.msra.mxu0 %v550
  %835 = vmatprep.subr.bf16.mxu0 %v567
  %836 = vmatpush1.bf16.msra.mxu0 %v566
  %837 = vmatprep.subr.bf16.mxu0 %v583
  %838 = vmatpush1.bf16.msra.mxu0 %v582
  %839 = vmatprep.subr.bf16.mxu0 %v599
  %840 = vmatpush1.bf16.msra.mxu0 %v598
  %841 = vmatprep.subr.bf16.mxu0 %v615
  %842 = vmatpush1.bf16.msra.mxu0 %v614
  %843 = vmatprep.subr.bf16.mxu0 %v631
  %844 = vmatpush1.bf16.msra.mxu0 %v630
  %845 = vmatprep.subr.bf16.mxu0 %v647
  %846 = vmatpush1.bf16.msra.mxu0 %v646
  %847 = vmatprep.subr.bf16.mxu0 0
  %848 = vmatpush1.bf16.msra.mxu0 0
  %849 = vmatprep.subr.bf16.mxu0 0
  %850 = vmatpush1.bf16.msra.mxu0 0
  %851 = vmatprep.subr.bf16.mxu0 0
  %852 = vmatpush1.bf16.msra.mxu0 0
  %853 = vmatprep.subr.bf16.mxu0 0
  %854 = vmatpush1.bf16.msra.mxu0 0
  %855 = vmatprep.subr.bf16.mxu0 0
  %856 = vmatpush1.bf16.msra.mxu0 0
  %857 = vmatprep.subr.bf16.mxu0 0
  %858 = vmatpush1.bf16.msra.mxu0 0
  %859 = vmatprep.subr.bf16.mxu0 0
  %860 = vmatpush1.bf16.msra.mxu0 0
  %861 = vmatprep.subr.bf16.mxu0 0
  %862 = vmatpush1.bf16.msra.mxu0 0
  %863 = vmatprep.mubr.bf16.mxu0 0
  %864 = vmatmul.mubr.bf16.gmra.mrb[0].mxu0 %v146
  %v865 = vpop.f32.mrb[0].mxu0
  %v866 = vadd.f32 0.0, %v865
  %v867 = vpop.f32.mrb[0].mxu0
  %v868 = vadd.f32 0.0, %v867
  %v869 = vpop.f32.mrb[0].mxu0
  %v870 = vadd.f32 0.0, %v869
  %v871 = vpop.f32.mrb[0].mxu0
  %v872 = vadd.f32 0.0, %v871
  %873 = vdwg.mxu0
  %874 = vmatprep.subr.bf16.mxu0 %v537
  %875 = vmatpush1.bf16.msra.mxu0 %v536
  %876 = vmatprep.subr.bf16.mxu0 %v553
  %877 = vmatpush1.bf16.msra.mxu0 %v552
  %878 = vmatprep.subr.bf16.mxu0 %v569
  %879 = vmatpush1.bf16.msra.mxu0 %v568
  %880 = vmatprep.subr.bf16.mxu0 %v585
  %881 = vmatpush1.bf16.msra.mxu0 %v584
  %882 = vmatprep.subr.bf16.mxu0 %v601
  %883 = vmatpush1.bf16.msra.mxu0 %v600
  %884 = vmatprep.subr.bf16.mxu0 %v617
  %885 = vmatpush1.bf16.msra.mxu0 %v616
  %886 = vmatprep.subr.bf16.mxu0 %v633
  %887 = vmatpush1.bf16.msra.mxu0 %v632
  %888 = vmatprep.subr.bf16.mxu0 %v649
  %889 = vmatpush1.bf16.msra.mxu0 %v648
  %890 = vmatprep.subr.bf16.mxu0 0
  %891 = vmatpush1.bf16.msra.mxu0 0
  %892 = vmatprep.subr.bf16.mxu0 0
  %893 = vmatpush1.bf16.msra.mxu0 0
  %894 = vmatprep.subr.bf16.mxu0 0
  %895 = vmatpush1.bf16.msra.mxu0 0
  %896 = vmatprep.subr.bf16.mxu0 0
  %897 = vmatpush1.bf16.msra.mxu0 0
  %898 = vmatprep.subr.bf16.mxu0 0
  %899 = vmatpush1.bf16.msra.mxu0 0
  %900 = vmatprep.subr.bf16.mxu0 0
  %901 = vmatpush1.bf16.msra.mxu0 0
  %902 = vmatprep.subr.bf16.mxu0 0
  %903 = vmatpush1.bf16.msra.mxu0 0
  %904 = vmatprep.subr.bf16.mxu0 0
  %905 = vmatpush1.bf16.msra.mxu0 0
  %906 = vmatprep.mubr.bf16.mxu0 0
  %907 = vmatmul.mubr.bf16.gmra.mrb[0].mxu0 %v146
  %v908 = vpop.f32.mrb[0].mxu0
  %v909 = vadd.f32 0.0, %v908
  %v910 = vpop.f32.mrb[0].mxu0
  %v911 = vadd.f32 0.0, %v910
  %v912 = vpop.f32.mrb[0].mxu0
  %v913 = vadd.f32 0.0, %v912
  %v914 = vpop.f32.mrb[0].mxu0
  %v915 = vadd.f32 0.0, %v914
  %916 = vdwg.mxu0
  %917 = vmatprep.subr.bf16.mxu0 %v539
  %918 = vmatpush1.bf16.msra.mxu0 %v538
  %919 = vmatprep.subr.bf16.mxu0 %v555
  %920 = vmatpush1.bf16.msra.mxu0 %v554
  %921 = vmatprep.subr.bf16.mxu0 %v571
  %922 = vmatpush1.bf16.msra.mxu0 %v570
  %923 = vmatprep.subr.bf16.mxu0 %v587
  %924 = vmatpush1.bf16.msra.mxu0 %v586
  %925 = vmatprep.subr.bf16.mxu0 %v603
  %926 = vmatpush1.bf16.msra.mxu0 %v602
  %927 = vmatprep.subr.bf16.mxu0 %v619
  %928 = vmatpush1.bf16.msra.mxu0 %v618
  %929 = vmatprep.subr.bf16.mxu0 %v635
  %930 = vmatpush1.bf16.msra.mxu0 %v634
  %931 = vmatprep.subr.bf16.mxu0 %v651
  %932 = vmatpush1.bf16.msra.mxu0 %v650
  %933 = vmatprep.subr.bf16.mxu0 0
  %934 = vmatpush1.bf16.msra.mxu0 0
  %935 = vmatprep.subr.bf16.mxu0 0
  %936 = vmatpush1.bf16.msra.mxu0 0
  %937 = vmatprep.subr.bf16.mxu0 0
  %938 = vmatpush1.bf16.msra.mxu0 0
  %939 = vmatprep.subr.bf16.mxu0 0
  %940 = vmatpush1.bf16.msra.mxu0 0
  %941 = vmatprep.subr.bf16.mxu0 0
  %942 = vmatpush1.bf16.msra.mxu0 0
  %943 = vmatprep.subr.bf16.mxu0 0
  %944 = vmatpush1.bf16.msra.mxu0 0
  %945 = vmatprep.subr.bf16.mxu0 0
  %946 = vmatpush1.bf16.msra.mxu0 0
  %947 = vmatprep.subr.bf16.mxu0 0
  %948 = vmatpush1.bf16.msra.mxu0 0
  %949 = vmatprep.mubr.bf16.mxu0 0
  %950 = vmatmul.mubr.bf16.gmra.mrb[0].mxu0 %v146
  %v951 = vpop.f32.mrb[0].mxu0
  %v952 = vadd.f32 0.0, %v951
  %v953 = vpop.f32.mrb[0].mxu0
  %v954 = vadd.f32 0.0, %v953
  %v955 = vpop.f32.mrb[0].mxu0
  %v956 = vadd.f32 0.0, %v955
  %v957 = vpop.f32.mrb[0].mxu0
  %v958 = vadd.f32 0.0, %v957
  %959 = vdwg.mxu0
  %960 = vmatprep.subr.bf16.mxu0 %v541
  %961 = vmatpush1.bf16.msra.mxu0 %v540
  %962 = vmatprep.subr.bf16.mxu0 %v557
  %963 = vmatpush1.bf16.msra.mxu0 %v556
  %964 = vmatprep.subr.bf16.mxu0 %v573
  %965 = vmatpush1.bf16.msra.mxu0 %v572
  %966 = vmatprep.subr.bf16.mxu0 %v589
  %967 = vmatpush1.bf16.msra.mxu0 %v588
  %968 = vmatprep.subr.bf16.mxu0 %v605
  %969 = vmatpush1.bf16.msra.mxu0 %v604
  %970 = vmatprep.subr.bf16.mxu0 %v621
  %971 = vmatpush1.bf16.msra.mxu0 %v620
  %972 = vmatprep.subr.bf16.mxu0 %v637
  %973 = vmatpush1.bf16.msra.mxu0 %v636
  %974 = vmatprep.subr.bf16.mxu0 %v653
  %975 = vmatpush1.bf16.msra.mxu0 %v652
  %976 = vmatprep.subr.bf16.mxu0 0
  %977 = vmatpush1.bf16.msra.mxu0 0
  %978 = vmatprep.subr.bf16.mxu0 0
  %979 = vmatpush1.bf16.msra.mxu0 0
  %980 = vmatprep.subr.bf16.mxu0 0
  %981 = vmatpush1.bf16.msra.mxu0 0
  %982 = vmatprep.subr.bf16.mxu0 0
  %983 = vmatpush1.bf16.msra.mxu0 0
  %984 = vmatprep.subr.bf16.mxu0 0
  %985 = vmatpush1.bf16.msra.mxu0 0
  %986 = vmatprep.subr.bf16.mxu0 0
  %987 = vmatpush1.bf16.msra.mxu0 0
  %988 = vmatprep.subr.bf16.mxu0 0
  %989 = vmatpush1.bf16.msra.mxu0 0
  %990 = vmatprep.subr.bf16.mxu0 0
  %991 = vmatpush1.bf16.msra.mxu0 0
  %992 = vmatprep.mubr.bf16.mxu0 0
  %993 = vmatmul.mubr.bf16.gmra.mrb[0].mxu0 %v146
  %v994 = vpop.f32.mrb[0].mxu0
  %v995 = vadd.f32 0.0, %v994
  %v996 = vpop.f32.mrb[0].mxu0
  %v997 = vadd.f32 0.0, %v996
  %v998 = vpop.f32.mrb[0].mxu0
  %v999 = vadd.f32 0.0, %v998
  %v1000 = vpop.f32.mrb[0].mxu0
  %v1001 = vadd.f32 0.0, %v1000
  %1002 = vdwg.mxu0
  %1003 = vmatprep.subr.bf16.mxu0 %v543
  %1004 = vmatpush1.bf16.msra.mxu0 %v542
  %1005 = vmatprep.subr.bf16.mxu0 %v559
  %1006 = vmatpush1.bf16.msra.mxu0 %v558
  %1007 = vmatprep.subr.bf16.mxu0 %v575
  %1008 = vmatpush1.bf16.msra.mxu0 %v574
  %1009 = vmatprep.subr.bf16.mxu0 %v591
  %1010 = vmatpush1.bf16.msra.mxu0 %v590
  %1011 = vmatprep.subr.bf16.mxu0 %v607
  %1012 = vmatpush1.bf16.msra.mxu0 %v606
  %1013 = vmatprep.subr.bf16.mxu0 %v623
  %1014 = vmatpush1.bf16.msra.mxu0 %v622
  %1015 = vmatprep.subr.bf16.mxu0 %v639
  %1016 = vmatpush1.bf16.msra.mxu0 %v638
  %1017 = vmatprep.subr.bf16.mxu0 %v655
  %1018 = vmatpush1.bf16.msra.mxu0 %v654
  %1019 = vmatprep.subr.bf16.mxu0 0
  %1020 = vmatpush1.bf16.msra.mxu0 0
  %1021 = vmatprep.subr.bf16.mxu0 0
  %1022 = vmatpush1.bf16.msra.mxu0 0
  %1023 = vmatprep.subr.bf16.mxu0 0
  %1024 = vmatpush1.bf16.msra.mxu0 0
  %1025 = vmatprep.subr.bf16.mxu0 0
  %1026 = vmatpush1.bf16.msra.mxu0 0
  %1027 = vmatprep.subr.bf16.mxu0 0
  %1028 = vmatpush1.bf16.msra.mxu0 0
  %1029 = vmatprep.subr.bf16.mxu0 0
  %1030 = vmatpush1.bf16.msra.mxu0 0
  %1031 = vmatprep.subr.bf16.mxu0 0
  %1032 = vmatpush1.bf16.msra.mxu0 0
  %1033 = vmatprep.subr.bf16.mxu0 0
  %1034 = vmatpush1.bf16.msra.mxu0 0
  %1035 = vmatprep.mubr.bf16.mxu0 0
  %1036 = vmatmul.mubr.bf16.gmra.mrb[0].mxu0 %v146
  %v1037 = vpop.f32.mrb[0].mxu0
  %v1038 = vadd.f32 0.0, %v1037
  %v1039 = vpop.f32.mrb[0].mxu0
  %v1040 = vadd.f32 0.0, %v1039
  %v1041 = vpop.f32.mrb[0].mxu0
  %v1042 = vadd.f32 0.0, %v1041
  %v1043 = vpop.f32.mrb[0].mxu0
  %v1044 = vadd.f32 0.0, %v1043
  %1045 = vdwg.mxu0
  %1046 = vmatprep.subr.bf16.mxu0 %v545
  %1047 = vmatpush1.bf16.msra.mxu0 %v544
  %1048 = vmatprep.subr.bf16.mxu0 %v561
  %1049 = vmatpush1.bf16.msra.mxu0 %v560
  %1050 = vmatprep.subr.bf16.mxu0 %v577
  %1051 = vmatpush1.bf16.msra.mxu0 %v576
  %1052 = vmatprep.subr.bf16.mxu0 %v593
  %1053 = vmatpush1.bf16.msra.mxu0 %v592
  %1054 = vmatprep.subr.bf16.mxu0 %v609
  %1055 = vmatpush1.bf16.msra.mxu0 %v608
  %1056 = vmatprep.subr.bf16.mxu0 %v625
  %1057 = vmatpush1.bf16.msra.mxu0 %v624
  %1058 = vmatprep.subr.bf16.mxu0 %v641
  %1059 = vmatpush1.bf16.msra.mxu0 %v640
  %1060 = vmatprep.subr.bf16.mxu0 %v657
  %1061 = vmatpush1.bf16.msra.mxu0 %v656
  %1062 = vmatprep.subr.bf16.mxu0 0
  %1063 = vmatpush1.bf16.msra.mxu0 0
  %1064 = vmatprep.subr.bf16.mxu0 0
  %1065 = vmatpush1.bf16.msra.mxu0 0
  %1066 = vmatprep.subr.bf16.mxu0 0
  %1067 = vmatpush1.bf16.msra.mxu0 0
  %1068 = vmatprep.subr.bf16.mxu0 0
  %1069 = vmatpush1.bf16.msra.mxu0 0
  %1070 = vmatprep.subr.bf16.mxu0 0
  %1071 = vmatpush1.bf16.msra.mxu0 0
  %1072 = vmatprep.subr.bf16.mxu0 0
  %1073 = vmatpush1.bf16.msra.mxu0 0
  %1074 = vmatprep.subr.bf16.mxu0 0
  %1075 = vmatpush1.bf16.msra.mxu0 0
  %1076 = vmatprep.subr.bf16.mxu0 0
  %1077 = vmatpush1.bf16.msra.mxu0 0
  %1078 = vmatprep.mubr.bf16.mxu0 0
  %1079 = vmatmul.mubr.bf16.gmra.mrb[0].mxu0 %v146
  %v1080 = vpop.f32.mrb[0].mxu0
  %v1081 = vadd.f32 0.0, %v1080
  %v1082 = vpop.f32.mrb[0].mxu0
  %v1083 = vadd.f32 0.0, %v1082
  %v1084 = vpop.f32.mrb[0].mxu0
  %v1085 = vadd.f32 0.0, %v1084
  %v1086 = vpop.f32.mrb[0].mxu0
  %v1087 = vadd.f32 0.0, %v1086
  %1088 = vdwg.mxu0
  %1089 = vmatprep.subr.bf16.mxu0 %v547
  %1090 = vmatpush1.bf16.msra.mxu0 %v546
  %1091 = vmatprep.subr.bf16.mxu0 %v563
  %1092 = vmatpush1.bf16.msra.mxu0 %v562
  %1093 = vmatprep.subr.bf16.mxu0 %v579
  %1094 = vmatpush1.bf16.msra.mxu0 %v578
  %1095 = vmatprep.subr.bf16.mxu0 %v595
  %1096 = vmatpush1.bf16.msra.mxu0 %v594
  %1097 = vmatprep.subr.bf16.mxu0 %v611
  %1098 = vmatpush1.bf16.msra.mxu0 %v610
  %1099 = vmatprep.subr.bf16.mxu0 %v627
  %1100 = vmatpush1.bf16.msra.mxu0 %v626
  %1101 = vmatprep.subr.bf16.mxu0 %v643
  %1102 = vmatpush1.bf16.msra.mxu0 %v642
  %1103 = vmatprep.subr.bf16.mxu0 %v659
  %1104 = vmatpush1.bf16.msra.mxu0 %v658
  %1105 = vmatprep.subr.bf16.mxu0 0
  %1106 = vmatpush1.bf16.msra.mxu0 0
  %1107 = vmatprep.subr.bf16.mxu0 0
  %1108 = vmatpush1.bf16.msra.mxu0 0
  %1109 = vmatprep.subr.bf16.mxu0 0
  %1110 = vmatpush1.bf16.msra.mxu0 0
  %1111 = vmatprep.subr.bf16.mxu0 0
  %1112 = vmatpush1.bf16.msra.mxu0 0
  %1113 = vmatprep.subr.bf16.mxu0 0
  %1114 = vmatpush1.bf16.msra.mxu0 0
  %1115 = vmatprep.subr.bf16.mxu0 0
  %1116 = vmatpush1.bf16.msra.mxu0 0
  %1117 = vmatprep.subr.bf16.mxu0 0
  %1118 = vmatpush1.bf16.msra.mxu0 0
  %1119 = vmatprep.subr.bf16.mxu0 0
  %1120 = vmatpush1.bf16.msra.mxu0 0
  %1121 = vmatprep.mubr.bf16.mxu0 0
  %1122 = vmatmul.mubr.bf16.gmra.mrb[0].mxu0 %v146
  %v1123 = vpop.f32.mrb[0].mxu0
  %v1124 = vadd.f32 0.0, %v1123
  %v1125 = vpop.f32.mrb[0].mxu0
  %v1126 = vadd.f32 0.0, %v1125
  %v1127 = vpop.f32.mrb[0].mxu0
  %v1128 = vadd.f32 0.0, %v1127
  %v1129 = vpop.f32.mrb[0].mxu0
  %v1130 = vadd.f32 0.0, %v1129
  %1131 = vdwg.mxu0
  %v1132 = vpack.c.bf16 %v827, %v823
  %v1133 = vpack.c.bf16 %v829, %v825
  %v1134 = vpack.c.bf16 %v870, %v866
  %v1135 = vpack.c.bf16 %v872, %v868
  %v1136 = vpack.c.bf16 %v913, %v909
  %v1137 = vpack.c.bf16 %v915, %v911
  %v1138 = vpack.c.bf16 %v956, %v952
  %v1139 = vpack.c.bf16 %v958, %v954
  %v1140 = vpack.c.bf16 %v999, %v995
  %v1141 = vpack.c.bf16 %v1001, %v997
  %v1142 = vpack.c.bf16 %v1042, %v1038
  %v1143 = vpack.c.bf16 %v1044, %v1040
  %v1144 = vpack.c.bf16 %v1085, %v1081
  %v1145 = vpack.c.bf16 %v1087, %v1083
  %v1146 = vpack.c.bf16 %v1128, %v1124
  %v1147 = vpack.c.bf16 %v1130, %v1126
  %v1164 = vunpack.c.l.b16 %v1132
  %v1165 = vunpack.c.l.b16 %v1133
  %v1166 = vunpack.c.l.b16 %v1134
  %v1167 = vunpack.c.l.b16 %v1135
  %v1168 = vunpack.c.l.b16 %v1136
  %v1169 = vunpack.c.l.b16 %v1137
  %v1170 = vunpack.c.l.b16 %v1138
  %v1171 = vunpack.c.l.b16 %v1139
  %v1172 = vunpack.c.l.b16 %v1140
  %v1173 = vunpack.c.l.b16 %v1141
  %v1174 = vunpack.c.l.b16 %v1142
  %v1175 = vunpack.c.l.b16 %v1143
  %v1176 = vunpack.c.l.b16 %v1144
  %v1177 = vunpack.c.l.b16 %v1145
  %v1178 = vunpack.c.l.b16 %v1146
  %v1179 = vunpack.c.l.b16 %v1147
  %v1180 = vunpack.c.h.b16 %v1132
  %v1181 = vunpack.c.h.b16 %v1133
  %v1182 = vunpack.c.h.b16 %v1134
  %v1183 = vunpack.c.h.b16 %v1135
  %v1184 = vunpack.c.h.b16 %v1136
  %v1185 = vunpack.c.h.b16 %v1137
  %v1186 = vunpack.c.h.b16 %v1138
  %v1187 = vunpack.c.h.b16 %v1139
  %v1188 = vunpack.c.h.b16 %v1140
  %v1189 = vunpack.c.h.b16 %v1141
  %v1190 = vunpack.c.h.b16 %v1142
  %v1191 = vunpack.c.h.b16 %v1143
  %v1192 = vunpack.c.h.b16 %v1144
  %v1193 = vunpack.c.h.b16 %v1145
  %v1194 = vunpack.c.h.b16 %v1146
  %v1195 = vunpack.c.h.b16 %v1147
  %v1196 = vpack.c.b16 %v1165, %v1164
  %v1197 = vpack.c.b16 %v1167, %v1166
  %v1198 = vpack.c.b16 %v1169, %v1168
  %v1199 = vpack.c.b16 %v1171, %v1170
  %v1200 = vpack.c.b16 %v1173, %v1172
  %v1201 = vpack.c.b16 %v1175, %v1174
  %v1202 = vpack.c.b16 %v1177, %v1176
  %v1203 = vpack.c.b16 %v1179, %v1178
  %v1204 = vpack.c.b16 %v1181, %v1180
  %v1205 = vpack.c.b16 %v1183, %v1182
  %v1206 = vpack.c.b16 %v1185, %v1184
  %v1207 = vpack.c.b16 %v1187, %v1186
  %v1208 = vpack.c.b16 %v1189, %v1188
  %v1209 = vpack.c.b16 %v1191, %v1190
  %v1210 = vpack.c.b16 %v1193, %v1192
  %v1211 = vpack.c.b16 %v1195, %v1194
  %1228 = vst [vmem:[%s2] sm:$0xff] %v1196
  %1229 = vst [vmem:[%s2 + $0x8] sm:$0xff] %v1197
  %1230 = vst [vmem:[%s2 + $0x10] sm:$0xff] %v1198
  %1231 = vst [vmem:[%s2 + $0x18] sm:$0xff] %v1199
  %1232 = vst [vmem:[%s2 + $0x20] sm:$0xff] %v1200
  %1233 = vst [vmem:[%s2 + $0x28] sm:$0xff] %v1201
  %1234 = vst [vmem:[%s2 + $0x30] sm:$0xff] %v1202
  %1235 = vst [vmem:[%s2 + $0x38] sm:$0xff] %v1203
  %1236 = vst [vmem:[%s2 + $0x40] sm:$0xff] %v1204
  %1237 = vst [vmem:[%s2 + $0x48] sm:$0xff] %v1205
  %1238 = vst [vmem:[%s2 + $0x50] sm:$0xff] %v1206
  %1239 = vst [vmem:[%s2 + $0x58] sm:$0xff] %v1207
  %1240 = vst [vmem:[%s2 + $0x60] sm:$0xff] %v1208
  %1241 = vst [vmem:[%s2 + $0x68] sm:$0xff] %v1209
  %1242 = vst [vmem:[%s2 + $0x70] sm:$0xff] %v1210
  %1243 = vst [vmem:[%s2 + $0x78] sm:$0xff] %v1211
  // Predicated region
  $region10: #{generator_forward.10} parent=0 // pred_check
    _
  $region11: #{generator_forward.10} parent=0 // pred_check_branch
    %1245 = sbr.rel (0) target = $region13
  $region12: #{generator_forward.10} parent=0 // pred_region
    _
  $region13: #{generator_forward.10} parent=0 // pred_fallthru
    _
  // Predicated region
  $region14: #{generator_forward.10} parent=0 // pred_check
    _
  $region15: #{generator_forward.10} parent=0 // pred_check_branch
    %1247 = sbr.rel (0) target = $region17
  $region16: #{generator_forward.10} parent=0 // pred_region
    _
  $region17: #{generator_forward.10} parent=0 // pred_fallthru
    _

// kernel: generator_forward.11
$region0: #{generator_forward.11}
  #allocation0 [shape = 'u32[]', space=smem, size = 0x4, offset = 0x4, fixed_abs, tag = 'smem constant byte address 0x4 - core index']
  #allocation1 [shape = 'u32[144,128]{1,0:T(1,128)}', space=vmem, size = 0x12000, scoped, tag = 'internal scratch']
  %s0 = inlined_call_operand.vmem [shape: f32[8,4096], index: 0, kind: input, shape index: {}]
  %s1 = inlined_call_operand.vmem [shape: f32[8,4096], index: 1, kind: output, shape index: {}]
  %s2 = sld [smem:[#allocation0]]
  $region14: #{generator_forward.11} parent=0
    _
  %s4 = ssub.s32 1, %s2
  %s5 = scalar_select 0, %s4, %s2
  // Predicated region
  $region2: #{generator_forward.11} parent=0 // pred_check
    _
  $region3: #{generator_forward.11} parent=0 // pred_check_branch
    %7 = sbr.rel (0) target = $region5
  $region4: #{generator_forward.11} parent=0 // pred_region
    _
  $region5: #{generator_forward.11} parent=0 // pred_fallthru
    _
  %v8 = vld [vmem:[%s0] sm:$0xff]
  %v9 = vld [vmem:[%s0 + $0x8] sm:$0xff]
  %v10 = vld [vmem:[%s0 + $0x10] sm:$0xff]
  %v11 = vld [vmem:[%s0 + $0x18] sm:$0xff]
  %v12 = vld [vmem:[%s0 + $0x20] sm:$0xff]
  %v13 = vld [vmem:[%s0 + $0x28] sm:$0xff]
  %v14 = vld [vmem:[%s0 + $0x30] sm:$0xff]
  %v15 = vld [vmem:[%s0 + $0x38] sm:$0xff]
  %v16 = vld [vmem:[%s0 + $0x40] sm:$0xff]
  %v17 = vld [vmem:[%s0 + $0x48] sm:$0xff]
  %v18 = vld [vmem:[%s0 + $0x50] sm:$0xff]
  %v19 = vld [vmem:[%s0 + $0x58] sm:$0xff]
  %v20 = vld [vmem:[%s0 + $0x60] sm:$0xff]
  %v21 = vld [vmem:[%s0 + $0x68] sm:$0xff]
  %v22 = vld [vmem:[%s0 + $0x70] sm:$0xff]
  %v23 = vld [vmem:[%s0 + $0x78] sm:$0xff]
  %v24 = vld [vmem:[%s0 + $0x80] sm:$0xff]
  %v25 = vld [vmem:[%s0 + $0x88] sm:$0xff]
  %v26 = vld [vmem:[%s0 + $0x90] sm:$0xff]
  %v27 = vld [vmem:[%s0 + $0x98] sm:$0xff]
  %v28 = vld [vmem:[%s0 + $0xa0] sm:$0xff]
  %v29 = vld [vmem:[%s0 + $0xa8] sm:$0xff]
  %v30 = vld [vmem:[%s0 + $0xb0] sm:$0xff]
  %v31 = vld [vmem:[%s0 + $0xb8] sm:$0xff]
  %v32 = vld [vmem:[%s0 + $0xc0] sm:$0xff]
  %v33 = vld [vmem:[%s0 + $0xc8] sm:$0xff]
  %v34 = vld [vmem:[%s0 + $0xd0] sm:$0xff]
  %v35 = vld [vmem:[%s0 + $0xd8] sm:$0xff]
  %v36 = vld [vmem:[%s0 + $0xe0] sm:$0xff]
  %v37 = vld [vmem:[%s0 + $0xe8] sm:$0xff]
  %v38 = vld [vmem:[%s0 + $0xf0] sm:$0xff]
  %v39 = vld [vmem:[%s0 + $0xf8] sm:$0xff]
  %v40 = vtanh.pop %v8
  %v41 = vtanh.pop %v9
  %v42 = vtanh.pop %v10
  %v43 = vtanh.pop %v11
  %v44 = vtanh.pop %v12
  %v45 = vtanh.pop %v13
  %v46 = vtanh.pop %v14
  %v47 = vtanh.pop %v15
  %v48 = vtanh.pop %v16
  %v49 = vtanh.pop %v17
  %v50 = vtanh.pop %v18
  %v51 = vtanh.pop %v19
  %v52 = vtanh.pop %v20
  %v53 = vtanh.pop %v21
  %v54 = vtanh.pop %v22
  %v55 = vtanh.pop %v23
  %v56 = vtanh.pop %v24
  %v57 = vtanh.pop %v25
  %v58 = vtanh.pop %v26
  %v59 = vtanh.pop %v27
  %v60 = vtanh.pop %v28
  %v61 = vtanh.pop %v29
  %v62 = vtanh.pop %v30
  %v63 = vtanh.pop %v31
  %v64 = vtanh.pop %v32
  %v65 = vtanh.pop %v33
  %v66 = vtanh.pop %v34
  %v67 = vtanh.pop %v35
  %v68 = vtanh.pop %v36
  %v69 = vtanh.pop %v37
  %v70 = vtanh.pop %v38
  %v71 = vtanh.pop %v39
  %72 = vst [vmem:[%s1] sm:$0xff] %v40
  %73 = vst [vmem:[%s1 + $0x8] sm:$0xff] %v41
  %74 = vst [vmem:[%s1 + $0x10] sm:$0xff] %v42
  %75 = vst [vmem:[%s1 + $0x18] sm:$0xff] %v43
  %76 = vst [vmem:[%s1 + $0x20] sm:$0xff] %v44
  %77 = vst [vmem:[%s1 + $0x28] sm:$0xff] %v45
  %78 = vst [vmem:[%s1 + $0x30] sm:$0xff] %v46
  %79 = vst [vmem:[%s1 + $0x38] sm:$0xff] %v47
  %80 = vst [vmem:[%s1 + $0x40] sm:$0xff] %v48
  %81 = vst [vmem:[%s1 + $0x48] sm:$0xff] %v49
  %82 = vst [vmem:[%s1 + $0x50] sm:$0xff] %v50
  %83 = vst [vmem:[%s1 + $0x58] sm:$0xff] %v51
  %84 = vst [vmem:[%s1 + $0x60] sm:$0xff] %v52
  %85 = vst [vmem:[%s1 + $0x68] sm:$0xff] %v53
  %86 = vst [vmem:[%s1 + $0x70] sm:$0xff] %v54
  %87 = vst [vmem:[%s1 + $0x78] sm:$0xff] %v55
  %88 = vst [vmem:[%s1 + $0x80] sm:$0xff] %v56
  %89 = vst [vmem:[%s1 + $0x88] sm:$0xff] %v57
  %90 = vst [vmem:[%s1 + $0x90] sm:$0xff] %v58
  %91 = vst [vmem:[%s1 + $0x98] sm:$0xff] %v59
  %92 = vst [vmem:[%s1 + $0xa0] sm:$0xff] %v60
  %93 = vst [vmem:[%s1 + $0xa8] sm:$0xff] %v61
  %94 = vst [vmem:[%s1 + $0xb0] sm:$0xff] %v62
  %95 = vst [vmem:[%s1 + $0xb8] sm:$0xff] %v63
  %96 = vst [vmem:[%s1 + $0xc0] sm:$0xff] %v64
  %97 = vst [vmem:[%s1 + $0xc8] sm:$0xff] %v65
  %98 = vst [vmem:[%s1 + $0xd0] sm:$0xff] %v66
  %99 = vst [vmem:[%s1 + $0xd8] sm:$0xff] %v67
  %100 = vst [vmem:[%s1 + $0xe0] sm:$0xff] %v68
  %101 = vst [vmem:[%s1 + $0xe8] sm:$0xff] %v69
  %102 = vst [vmem:[%s1 + $0xf0] sm:$0xff] %v70
  %103 = vst [vmem:[%s1 + $0xf8] sm:$0xff] %v71
  // Predicated region
  $region6: #{generator_forward.11} parent=0 // pred_check
    _
  $region7: #{generator_forward.11} parent=0 // pred_check_branch
    %105 = sbr.rel (0) target = $region9
  $region8: #{generator_forward.11} parent=0 // pred_region
    _
  $region9: #{generator_forward.11} parent=0 // pred_fallthru
    _
  // Predicated region
  $region10: #{generator_forward.11} parent=0 // pred_check
    _
  $region11: #{generator_forward.11} parent=0 // pred_check_branch
    %107 = sbr.rel (0) target = $region13
  $region12: #{generator_forward.11} parent=0 // pred_region
    _
  $region13: #{generator_forward.11} parent=0 // pred_fallthru
    _

</llo_original>
